<compile_context>
chip_gen: v7x
topology: tpu7x:2x2x1
jax: 0.10.0
libtpu: 0.0.40
codegen_flags: <defaults>
</compile_context>

<pallas_src>
import jax
import jax.numpy as jnp
from jax.experimental import pallas as pl
from jax.experimental.pallas import tpu as pltpu

FRONT_C = 8          # frontend channels (64 in the full model; small for the demo)
LANE = 128           # TPU lane width

# Per-generation VMEM budget: half of physical capacity, clamped.
try:
    _info = pltpu.get_tpu_info()
    _VMEM_BYTES = int(getattr(_info, "vmem_capacity_bytes", 128 * 1024 * 1024))
except Exception:
    _VMEM_BYTES = 64 * 1024 * 1024
VMEM_LIMIT = max(32 * 1024 * 1024, min(_VMEM_BYTES // 2, 96 * 1024 * 1024))
TM_CAP = 512 if VMEM_LIMIT >= 64 * 1024 * 1024 else 256      # matmul M-tile cap
FT_CAP = 64 if VMEM_LIMIT >= 64 * 1024 * 1024 else 16        # resnet-tail frame-tile cap


def _round_up(x, m):
    return (x + m - 1) // m * m


# ------------------------------------------------------------------ Pallas kernels

def matmul_bias_act(a, w, b=None, relu=False):
    """out = relu?( a @ w + b ).

    M-tiled ("parallel") grid, N padded to a multiple of 128 (lane-dense,
    unmasked stores).  `a` is passed through unpadded / uncast (f32); the bf16
    MXU cast happens inside the kernel -- no extra HBM round trip of the
    Kx-expanded im2col activations.  f32 accumulation + f32 epilogue.
    """
    M, K = a.shape
    Kw, N = w.shape
    assert K == Kw
    NP = _round_up(N, LANE)
    MP = _round_up(M, 8)
    TM = min(MP, TM_CAP)
    MP = _round_up(MP, TM)
    if MP != M:
        a = jnp.pad(a, ((0, MP - M), (0, 0)))           # edge rows only (f32, rare)
    w_p = jnp.pad(w, ((0, 0), (0, NP - N))).astype(jnp.bfloat16)
    if b is None:
        b_p = jnp.zeros((1, NP), jnp.float32)
    else:
        b_p = jnp.pad(b.astype(jnp.float32).reshape(1, N), ((0, 0), (0, NP - N)))

    def kernel(a_ref, w_ref, b_ref, o_ref):
        acc = jnp.dot(a_ref[...].astype(jnp.bfloat16), w_ref[...],
                      preferred_element_type=jnp.float32) + b_ref[...]
        if relu:
            acc = jnp.maximum(acc, 0.0)
        o_ref[...] = acc

    out = pl.pallas_call(
        kernel,
        out_shape=jax.ShapeDtypeStruct((MP, NP), jnp.float32),
        grid=(MP // TM,),
        in_specs=[
            pl.BlockSpec((TM, K), lambda i: (i, 0)),
            pl.BlockSpec((K, NP), lambda i: (0, 0)),
            pl.BlockSpec((1, NP), lambda i: (0, 0)),
        ],
        out_specs=pl.BlockSpec((TM, NP), lambda i: (i, 0)),
        compiler_params=pltpu.CompilerParams(
            dimension_semantics=("parallel",), vmem_limit_bytes=VMEM_LIMIT),
    )(a, w_p, b_p)
    return out[:M, :N]


def maxpool_3x3_s2_p1(y):
    """MaxPool2d(k=3, s=2, p=1) over channels-last frames (F, H, W, C).

    Fully vectorised: 3 strided window-row loads -> elementwise max (H dir),
    then 3 strided window-col loads -> elementwise max (W dir).  Frame-tiled
    "parallel" grid.  Output is emitted directly as (F, Ho, Wo, C), so no
    post-kernel transpose is needed.
    """
    F, H, W, C = y.shape
    Ho = (H + 2 - 3) // 2 + 1
    Wo = (W + 2 - 3) // 2 + 1
    yp = jnp.pad(y, ((0, 0), (1, 1), (1, 1), (0, 0)), constant_values=-jnp.inf)
    per_frame = (H + 2) * (W + 2) * C * 4
    TF = max(1, min(F, (4 << 20) // max(per_frame, 1)))
    FP = _round_up(F, TF)
    if FP != F:
        yp = jnp.pad(yp, ((0, FP - F), (0, 0), (0, 0), (0, 0)),
                     constant_values=-jnp.inf)

    def kernel(x_ref, o_ref, rm_sc):
        # max over the 3 window rows, stride 2 along H
        rm_sc[...] = jnp.maximum(
            jnp.maximum(x_ref[:, pl.ds(0, Ho, stride=2), :, :],
                        x_ref[:, pl.ds(1, Ho, stride=2), :, :]),
            x_ref[:, pl.ds(2, Ho, stride=2), :, :])
        # max over the 3 window cols, stride 2 along W
        o_ref[...] = jnp.maximum(
            jnp.maximum(rm_sc[:, :, pl.ds(0, Wo, stride=2), :],
                        rm_sc[:, :, pl.ds(1, Wo, stride=2), :]),
            rm_sc[:, :, pl.ds(2, Wo, stride=2), :])

    out = pl.pallas_call(
        kernel,
        out_shape=jax.ShapeDtypeStruct((FP, Ho, Wo, C), jnp.float32),
        grid=(FP // TF,),
        in_specs=[pl.BlockSpec((TF, H + 2, W + 2, C), lambda i: (i, 0, 0, 0))],
        out_specs=pl.BlockSpec((TF, Ho, Wo, C), lambda i: (i, 0, 0, 0)),
        scratch_shapes=[pltpu.VMEM((TF, Ho, W + 2, C), jnp.float32)],
        compiler_params=pltpu.CompilerParams(
            dimension_semantics=("parallel",), vmem_limit_bytes=VMEM_LIMIT),
    )(yp)
    return out[:F]


def resnet_tail_fused(cols2, w2, b2, resid, fc_w, fc_b, spatial):
    """Fused ResNet-block tail: conv2 matmul + bias + residual add + ReLU
    + spatial mean-pool + fc matmul + fc bias, all in one kernel.

    cols2 : (F*spatial, K2) im2col of the conv1 output (f32, cast in-kernel)
    resid : (F*spatial, C) block input (residual), channel order matching cols2 rows
    Returns (F, D) features.  Channel / feature dims zero-padded to 128 inside.
    """
    M, K2 = cols2.shape
    C = w2.shape[1]
    D = fc_w.shape[1]
    F = M // spatial
    CP = _round_up(C, LANE)
    DP = _round_up(D, LANE)
    FT = min(_round_up(F, 8), FT_CAP)                    # per-generation frame tile
    FP = _round_up(F, FT)
    MP = FP * spatial

    cols_p = cols2 if MP == M else jnp.pad(cols2, ((0, MP - M), (0, 0)))
    r_p = jnp.pad(resid, ((0, MP - M), (0, CP - C)))     # f32, no dtype-cast copy
    w2_p = jnp.pad(w2, ((0, 0), (0, CP - C))).astype(jnp.bfloat16)
    b2_p = jnp.pad(b2.astype(jnp.float32).reshape(1, C), ((0, 0), (0, CP - C)))
    fcw_p = jnp.pad(fc_w, ((0, CP - C), (0, DP - D))).astype(jnp.bfloat16)
    fcb_p = jnp.pad(fc_b.astype(jnp.float32).reshape(1, D), ((0, 0), (0, DP - D)))

    def kernel(c_ref, w_ref, b_ref, r_ref, fw_ref, fb_ref, o_ref):
        acc = jnp.dot(c_ref[...].astype(jnp.bfloat16), w_ref[...],
                      preferred_element_type=jnp.float32)
        acc = jnp.maximum(acc + b_ref[...] + r_ref[...], 0.0)       # (FT*S, CP)
        pooled = jnp.mean(acc.reshape(FT, spatial, CP), axis=1)     # (FT, CP)
        feats = jnp.dot(pooled.astype(jnp.bfloat16), fw_ref[...],
                        preferred_element_type=jnp.float32)
        o_ref[...] = feats + fb_ref[...]

    out = pl.pallas_call(
        kernel,
        out_shape=jax.ShapeDtypeStruct((FP, DP), jnp.float32),
        grid=(FP // FT,),
        in_specs=[
            pl.BlockSpec((FT * spatial, K2), lambda i: (i, 0)),
            pl.BlockSpec((K2, CP), lambda i: (0, 0)),
            pl.BlockSpec((1, CP), lambda i: (0, 0)),
            pl.BlockSpec((FT * spatial, CP), lambda i: (i, 0)),
            pl.BlockSpec((CP, DP), lambda i: (0, 0)),
            pl.BlockSpec((1, DP), lambda i: (0, 0)),
        ],
        out_specs=pl.BlockSpec((FT, DP), lambda i: (i, 0)),
        compiler_params=pltpu.CompilerParams(
            dimension_semantics=("parallel",), vmem_limit_bytes=VMEM_LIMIT),
    )(cols_p, w2_p, b2_p, r_p, fcw_p, fcb_p)
    return out[:F, :D]


def bilstm_layer(seq2d, wih, bias, whh, T, B):
    """Fused bidirectional LSTM layer -- one kernel, grid=(2,) over directions.

    seq2d : (T*B, Din) time-major input (row order (t, b)), f32.
    wih   : (2, Din, 4H), bias : (2, 1, 4H), whh : (2, H, 4H)  (gate order i,f,g,o).
    Inside the kernel: one (T*B,Din)@(Din,4H) projection matmul, then a
    lax.fori_loop recurrence with ONE gate-fused (B,H)@(H,4H) matmul per step.
    h/c/proj live in VMEM scratch and are fully re-initialised per invocation.
    The two directions are independent grid steps marked "parallel" so v7x can
    run them on its two TensorCores.  Returns (T*B, 2H) in original time order.
    """
    TB, Din = seq2d.shape
    H = whh.shape[1]
    G = 4 * H

    def kernel(x_ref, wih_ref, b_ref, whh_ref, o_ref, h_sc, c_sc, p_sc):
        d = pl.program_id(0)
        proj = jnp.dot(x_ref[...].astype(jnp.bfloat16),
                       wih_ref[...].astype(jnp.bfloat16),
                       preferred_element_type=jnp.float32) + b_ref[...]
        p_sc[...] = proj.reshape(T, B, G)
        h_sc[...] = jnp.zeros_like(h_sc)
        c_sc[...] = jnp.zeros_like(c_sc)
        whh_b = whh_ref[...].astype(jnp.bfloat16)

        def step(t, carry):
            ti = jnp.where(d == 0, t, T - 1 - t)         # reverse time for dir 1
            g = p_sc[ti] + jnp.dot(h_sc[...].astype(jnp.bfloat16), whh_b,
                                   preferred_element_type=jnp.float32)   # (B, 4H)
            gi = jax.nn.sigmoid(g[:, 0:H])
            gf = jax.nn.sigmoid(g[:, H:2 * H])
            gg = jnp.tanh(g[:, 2 * H:3 * H])
            go = jax.nn.sigmoid(g[:, 3 * H:4 * H])
            c = gf * c_sc[...] + gi * gg
            hn = go * jnp.tanh(c)
            c_sc[...] = c
            h_sc[...] = hn
            o_ref[ti] = hn
            return carry

        jax.lax.fori_loop(0, T, step, 0, unroll=(T <= 8))

    out = pl.pallas_call(
        kernel,
        out_shape=jax.ShapeDtypeStruct((2, T, B, H), jnp.float32),
        grid=(2,),
        in_specs=[
            pl.BlockSpec((TB, Din), lambda d: (0, 0)),
            pl.BlockSpec((None, Din, G), lambda d: (d, 0, 0)),
            pl.BlockSpec((None, 1, G), lambda d: (d, 0, 0)),
            pl.BlockSpec((None, H, G), lambda d: (d, 0, 0)),
        ],
        out_specs=pl.BlockSpec((None, T, B, H), lambda d: (d, 0, 0, 0)),
        scratch_shapes=[pltpu.VMEM((B, H), jnp.float32),
                        pltpu.VMEM((B, H), jnp.float32),
                        pltpu.VMEM((T, B, G), jnp.float32)],
        compiler_params=pltpu.CompilerParams(
            dimension_semantics=("parallel",), vmem_limit_bytes=VMEM_LIMIT),
    )(seq2d, wih, bias, whh)
    h_cat = jnp.concatenate([out[0], out[1]], axis=-1)               # (T, B, 2H)
    return h_cat.reshape(TB, 2 * H)


def linear_logsoftmax(x, w, b):
    """out = log_softmax(x @ w + b, axis=-1); N padded to 128 inside (masked).
    Softmax epilogue / mask kept in f32."""
    M, K = x.shape
    Kw, N = w.shape
    assert K == Kw
    NP = _round_up(N, LANE)
    MP = _round_up(M, 8)
    TM = min(MP, TM_CAP)
    MP = _round_up(MP, TM)
    if MP != M:
        x = jnp.pad(x, ((0, MP - M), (0, 0)))
    w_p = jnp.pad(w, ((0, 0), (0, NP - N))).astype(jnp.bfloat16)
    b_p = jnp.pad(b.astype(jnp.float32).reshape(1, N), ((0, 0), (0, NP - N)))

    def kernel(x_ref, w_ref, b_ref, o_ref):
        logits = jnp.dot(x_ref[...].astype(jnp.bfloat16), w_ref[...],
                         preferred_element_type=jnp.float32) + b_ref[...]
        col = jax.lax.broadcasted_iota(jnp.int32, logits.shape, 1)
        logits = jnp.where(col < N, logits, -1e30)      # mask padded classes (f32)
        m = jnp.max(logits, axis=-1, keepdims=True)
        z = logits - m
        lse = jnp.log(jnp.sum(jnp.exp(z), axis=-1, keepdims=True))
        o_ref[...] = z - lse

    out = pl.pallas_call(
        kernel,
        out_shape=jax.ShapeDtypeStruct((MP, NP), jnp.float32),
        grid=(MP // TM,),
        in_specs=[
            pl.BlockSpec((TM, K), lambda i: (i, 0)),
            pl.BlockSpec((K, NP), lambda i: (0, 0)),
            pl.BlockSpec((1, NP), lambda i: (0, 0)),
        ],
        out_specs=pl.BlockSpec((TM, NP), lambda i: (i, 0)),
        compiler_params=pltpu.CompilerParams(
            dimension_semantics=("parallel",), vmem_limit_bytes=VMEM_LIMIT),
    )(x, w_p, b_p)
    return out[:M, :N]


# ------------------------------------------------------------------ plain-JAX glue

def im2col_3d(x, ksize, stride, pad):
    """x: (N, D, H, W, C) -> (N*Do*Ho*Wo, kd*kh*kw*C)."""
    kd, kh, kw = ksize
    sd, sh, sw = stride
    pd, ph, pw = pad
    N, D, H, W, C = x.shape
    Do = (D + 2 * pd - kd) // sd + 1
    Ho = (H + 2 * ph - kh) // sh + 1
    Wo = (W + 2 * pw - kw) // sw + 1
    xp = jnp.pad(x, ((0, 0), (pd, pd), (ph, ph), (pw, pw), (0, 0)))
    cols = []
    for a in range(kd):
        for b in range(kh):
            for c in range(kw):
                cols.append(xp[:, a:a + Do * sd:sd, b:b + Ho * sh:sh,
                               c:c + Wo * sw:sw, :])
    patches = jnp.stack(cols, axis=-2)  # (N, Do, Ho, Wo, K, C)
    return patches.reshape(N * Do * Ho * Wo, kd * kh * kw * C), (N, Do, Ho, Wo)


def im2col_2d(x, k, s, p):
    """x: (M, H, W, C) -> (M*Ho*Wo, k*k*C)."""
    M, H, W, C = x.shape
    Ho = (H + 2 * p - k) // s + 1
    Wo = (W + 2 * p - k) // s + 1
    xp = jnp.pad(x, ((0, 0), (p, p), (p, p), (0, 0)))
    cols = []
    for a in range(k):
        for b in range(k):
            cols.append(xp[:, a:a + Ho * s:s, b:b + Wo * s:s, :])
    patches = jnp.stack(cols, axis=-2)
    return patches.reshape(M * Ho * Wo, k * k * C), (M, Ho, Wo)


# ------------------------------------------------------------------ parameters

def make_params(key, options):
    H = options['model']['hiddendim']
    D_in = options['model']['inputdim']
    nC = options['model']['numclasses']
    nL = options['model']['numlstms']
    keys = jax.random.split(key, 6 + 3 * nL)
    # frozen BatchNorm at init (gamma=1, beta=0, running stats) -> scale fold
    bn_scale = 1.0 / jnp.sqrt(1.0 + 1e-5)
    ki = iter(range(len(keys)))

    p = {}
    # ConvFrontend: Conv3d weight ~ N(0, 0.02) per weights_init; bias 0; BN folded.
    p['front_w'] = jax.random.normal(keys[next(ki)], (5 * 7 * 7 * 1, FRONT_C),
                                     jnp.float32) * 0.02 * bn_scale
    p['front_b'] = jnp.zeros((FRONT_C,), jnp.float32)
    # ResNet basic block (Conv2d weights ~ N(0, 0.02); BN folded).
    p['res_w1'] = jax.random.normal(keys[next(ki)], (3 * 3 * FRONT_C, FRONT_C),
                                    jnp.float32) * 0.02 * bn_scale
    p['res_b1'] = jnp.zeros((FRONT_C,), jnp.float32)
    p['res_w2'] = jax.random.normal(keys[next(ki)], (3 * 3 * FRONT_C, FRONT_C),
                                    jnp.float32) * 0.02 * bn_scale
    p['res_b2'] = jnp.zeros((FRONT_C,), jnp.float32)
    # resnet fc -> inputdim (Linear bias forced to 0 by weights_init)
    kr = 1.0 / jnp.sqrt(float(FRONT_C))
    p['res_fc_w'] = jax.random.uniform(keys[next(ki)], (FRONT_C, D_in),
                                       jnp.float32, -kr, kr)
    p['res_fc_b'] = jnp.zeros((D_in,), jnp.float32)
    # Bidirectional LSTM, numlstms layers (PyTorch-default uniform init).
    # Weights stored per-direction with fused gates along the last dim (Din/H, 4H);
    # single combined bias per direction.
    kk = 1.0 / jnp.sqrt(float(H))
    lstm = []
    for layer in range(nL):
        in_size = D_in if layer == 0 else 2 * H
        wih = jax.random.uniform(keys[next(ki)], (2, in_size, 4 * H),
                                 jnp.float32, -kk, kk)
        whh = jax.random.uniform(keys[next(ki)], (2, H, 4 * H),
                                 jnp.float32, -kk, kk)
        b = jax.random.uniform(keys[next(ki)], (2, 1, 4 * H),
                               jnp.float32, -kk, kk)
        lstm.append({'wih': wih, 'whh': whh, 'b': b})
    p['lstm'] = lstm
    # final classifier (Linear bias forced to 0)
    kf = 1.0 / jnp.sqrt(float(2 * H))
    p['fc_w'] = jax.random.uniform(keys[next(ki)], (2 * H, nC), jnp.float32, -kf, kf)
    p['fc_b'] = jnp.zeros((nC,), jnp.float32)
    return p


# ------------------------------------------------------------------ forward pass

def lipread_forward(x_ncdhw, params, options):
    """x_ncdhw: PyTorch-layout (batch, 1, T, H, W). Returns (batch, T, nClasses)."""
    nL = options['model']['numlstms']
    # layout: convert NCDHW -> channels-last (N, D, H, W, C)
    x = jnp.transpose(x_ncdhw, (0, 2, 3, 4, 1)).astype(jnp.float32)

    # ---- ConvFrontend: conv3d (+folded BN) + ReLU  -> fused matmul kernel
    cols, (N, Do, Ho1, Wo1) = im2col_3d(x, (5, 7, 7), (1, 2, 2), (2, 3, 3))
    y = matmul_bias_act(cols, params['front_w'], params['front_b'], relu=True)
    y = y.reshape(N * Do, Ho1, Wo1, FRONT_C)
    # MaxPool3d((1,3,3),(1,2,2),(0,1,1)) == per-frame 3x3/s2/p1 -> one fused kernel
    y = maxpool_3x3_s2_p1(y)                                   # (N*T, H', W', C)

    # ---- ResNetBBC (simplified): per-frame basic block + avgpool + fc
    F, Hh, Ww, C = y.shape
    frames = y
    c1, _ = im2col_2d(frames, 3, 1, 1)
    h1 = matmul_bias_act(c1, params['res_w1'], params['res_b1'], relu=True)
    h1 = h1.reshape(F, Hh, Ww, C)
    c2, _ = im2col_2d(h1, 3, 1, 1)
    # conv2 + residual + ReLU + avgpool + fc fused in one kernel
    feats = resnet_tail_fused(c2, params['res_w2'], params['res_b2'],
                              frames.reshape(F * Hh * Ww, C),
                              params['res_fc_w'], params['res_fc_b'],
                              spatial=Hh * Ww)                 # (N*T, inputdim)

    # ---- LSTMBackend: stacked bidirectional LSTM + Linear + log_softmax(dim=2)
    B, T = N, Do
    # one small transpose to time-major row order (t, b); everything downstream
    # stays 2-D (rows = (t, b)), so no per-layer reshuffles are needed.
    seq = jnp.transpose(feats.reshape(B, T, -1), (1, 0, 2)).reshape(T * B, -1)

    for layer in range(nL):
        lp = params['lstm'][layer]
        seq = bilstm_layer(seq, lp['wih'], lp['b'], lp['whh'], T, B)  # (T*B, 2H)

    logp = linear_logsoftmax(seq, params['fc_w'], params['fc_b'])
    nC = params['fc_w'].shape[1]
    return jnp.transpose(logp.reshape(T, B, nC), (1, 0, 2))           # (B, T, nC)


# ------------------------------------------------------------------ main

if __name__ == "__main__":
    options = {
        'model': {'type': 'LSTM', 'inputdim': 16, 'hiddendim': 16,
                  'numclasses': 10, 'numlstms': 2},
        'input': {'batchsize': 2},
    }
    key = jax.random.PRNGKey(0)
    kx, kp = jax.random.split(key)
    # PyTorch-layout input: (batch=2, channels=1, T=4, H=16, W=16)
    x = jax.random.normal(kx, (2, 1, 4, 16, 16), jnp.float32)
    params = make_params(kp, options)

    fwd = jax.jit(lambda xx, pp: lipread_forward(xx, pp, options))
    out = jax.block_until_ready(fwd(x, params))

    assert out.shape == (2, 4, options['model']['numclasses'])
    # log_softmax sanity: probabilities sum to 1 per (batch, time)
    probs = jnp.exp(out).sum(axis=-1)
    assert bool(jnp.all(jnp.abs(probs - 1.0) < 1e-4))
    print("KERNEL_OK")
</pallas_src>

<mosaic_0001>
module attributes {stable_mosaic.version = 11 : i64} {
  func.func @kernel(%arg0: i32, %arg1: memref<256x245xf32, #tpu.memory_space<vmem>>, %arg2: memref<245x128xbf16, #tpu.memory_space<vmem>>, %arg3: memref<1x128xf32, #tpu.memory_space<vmem>>, %arg4: memref<256x128xf32, #tpu.memory_space<vmem>>) attributes {dimension_semantics = [#tpu.dimension_semantics<parallel>], iteration_bounds = array<i64: 2>, scalar_prefetch = 0 : i64, scratch_operands = 0 : i64, tpu.core_type = #tpu.core_type<tc>, window_params = [{transform_indices = @transform_0, window_bounds = array<i64: 256, 245>}, {pipeline_mode = #tpu.pipeline_mode<synchronous>, transform_indices = @transform_1, window_bounds = array<i64: 245, 128>}, {pipeline_mode = #tpu.pipeline_mode<synchronous>, transform_indices = @transform_2, window_bounds = array<i64: 1, 128>}, {transform_indices = @transform_3, window_bounds = array<i64: 256, 128>}]} {
    %c0 = arith.constant 0 : index
    %c0_0 = arith.constant 0 : index
    %0 = vector.load %arg1[%c0, %c0_0] : memref<256x245xf32, #tpu.memory_space<vmem>>, vector<256x245xf32>
    %1 = arith.truncf %0 : vector<256x245xf32> to vector<256x245xbf16>
    %c0_1 = arith.constant 0 : index
    %c0_2 = arith.constant 0 : index
    %2 = vector.load %arg2[%c0_1, %c0_2] : memref<245x128xbf16, #tpu.memory_space<vmem>>, vector<245x128xbf16>
    %cst = arith.constant dense<0.000000e+00> : vector<256x128xf32>
    %3 = tpu.matmul %1, %2, %cst {dimension_numbers = #tpu.dot_dimension_numbers<[1], [0], [0], [1], [0, 0, 1, 1], [], []>} : vector<256x245xbf16>, vector<245x128xbf16>, vector<256x128xf32> -> vector<256x128xf32>
    %c0_3 = arith.constant 0 : index
    %c0_4 = arith.constant 0 : index
    %4 = vector.load %arg3[%c0_3, %c0_4] : memref<1x128xf32, #tpu.memory_space<vmem>>, vector<1x128xf32>
    %5 = vector.broadcast %4 : vector<1x128xf32> to vector<256x128xf32>
    %6 = arith.addf %3, %5 : vector<256x128xf32>
    %cst_5 = arith.constant 0.000000e+00 : f32
    %7 = vector.broadcast %cst_5 : f32 to vector<256x128xf32>
    %8 = arith.maximumf %6, %7 : vector<256x128xf32>
    %c0_6 = arith.constant 0 : index
    %c0_7 = arith.constant 0 : index
    %9 = vector.load %arg4[%c0_6, %c0_7] : memref<256x128xf32, #tpu.memory_space<vmem>>, vector<256x128xf32>
    tpu.vector_store %arg4[%c0_6, %c0_7], %8 {strides = array<i32>} : memref<256x128xf32, #tpu.memory_space<vmem>>, vector<256x128xf32>,
    return
  }
  func.func @transform_0(%arg0: i32) -> (i32, i32) {
    %c0_i32 = arith.constant 0 : i32
    %c0_i32_0 = arith.constant 0 : i32
    return %arg0, %c0_i32 : i32, i32
  }
  func.func @transform_1(%arg0: i32) -> (i32, i32) {
    %c0_i32 = arith.constant 0 : i32
    %c0_i32_0 = arith.constant 0 : i32
    %c0_i32_1 = arith.constant 0 : i32
    return %c0_i32, %c0_i32_0 : i32, i32
  }
  func.func @transform_2(%arg0: i32) -> (i32, i32) {
    %c0_i32 = arith.constant 0 : i32
    %c0_i32_0 = arith.constant 0 : i32
    %c0_i32_1 = arith.constant 0 : i32
    return %c0_i32, %c0_i32_0 : i32, i32
  }
  func.func @transform_3(%arg0: i32) -> (i32, i32) {
    %c0_i32 = arith.constant 0 : i32
    %c0_i32_0 = arith.constant 0 : i32
    return %arg0, %c0_i32 : i32, i32
  }
}

module attributes {stable_mosaic.version = 11 : i64} {
  func.func @kernel(%arg0: i32, %arg1: memref<8x10x10x8xf32, #tpu.memory_space<vmem>>, %arg2: memref<8x4x4x8xf32, #tpu.memory_space<vmem>>, %arg3: memref<8x4x10x8xf32, #tpu.memory_space<vmem>>) attributes {dimension_semantics = [#tpu.dimension_semantics<parallel>], iteration_bounds = array<i64: 1>, scalar_prefetch = 0 : i64, scratch_operands = 1 : i64, tpu.core_type = #tpu.core_type<tc>, window_params = [{transform_indices = @transform_0, window_bounds = array<i64: 8, 10, 10, 8>}, {transform_indices = @transform_1, window_bounds = array<i64: 8, 4, 4, 8>}]} {
    %c0 = arith.constant 0 : index
    %c0_0 = arith.constant 0 : index
    %c0_1 = arith.constant 0 : index
    %c0_2 = arith.constant 0 : index
    %0 = tpu.strided_load %arg1[%c0, %c0_0, %c0_1, %c0_2] {strides = array<i32: 1, 2, 1, 1>} : memref<8x10x10x8xf32, #tpu.memory_space<vmem>>, vector<8x4x10x8xf32>
    %c0_3 = arith.constant 0 : index
    %c1 = arith.constant 1 : index
    %c0_4 = arith.constant 0 : index
    %c0_5 = arith.constant 0 : index
    %1 = tpu.strided_load %arg1[%c0_3, %c1, %c0_4, %c0_5] {strides = array<i32: 1, 2, 1, 1>} : memref<8x10x10x8xf32, #tpu.memory_space<vmem>>, vector<8x4x10x8xf32>
    %2 = arith.maximumf %0, %1 : vector<8x4x10x8xf32>
    %c0_6 = arith.constant 0 : index
    %c2 = arith.constant 2 : index
    %c0_7 = arith.constant 0 : index
    %c0_8 = arith.constant 0 : index
    %3 = tpu.strided_load %arg1[%c0_6, %c2, %c0_7, %c0_8] {strides = array<i32: 1, 2, 1, 1>} : memref<8x10x10x8xf32, #tpu.memory_space<vmem>>, vector<8x4x10x8xf32>
    %4 = arith.maximumf %2, %3 : vector<8x4x10x8xf32>
    %c0_9 = arith.constant 0 : index
    %c0_10 = arith.constant 0 : index
    %c0_11 = arith.constant 0 : index
    %c0_12 = arith.constant 0 : index
    %5 = vector.load %arg3[%c0_9, %c0_10, %c0_11, %c0_12] : memref<8x4x10x8xf32, #tpu.memory_space<vmem>>, vector<8x4x10x8xf32>
    tpu.vector_store %arg3[%c0_9, %c0_10, %c0_11, %c0_12], %4 {strides = array<i32>} : memref<8x4x10x8xf32, #tpu.memory_space<vmem>>, vector<8x4x10x8xf32>,
    %c0_13 = arith.constant 0 : index
    %c0_14 = arith.constant 0 : index
    %c0_15 = arith.constant 0 : index
    %c0_16 = arith.constant 0 : index
    %6 = tpu.strided_load %arg3[%c0_13, %c0_14, %c0_15, %c0_16] {strides = array<i32: 1, 1, 2, 1>} : memref<8x4x10x8xf32, #tpu.memory_space<vmem>>, vector<8x4x4x8xf32>
    %c0_17 = arith.constant 0 : index
    %c0_18 = arith.constant 0 : index
    %c1_19 = arith.constant 1 : index
    %c0_20 = arith.constant 0 : index
    %7 = tpu.strided_load %arg3[%c0_17, %c0_18, %c1_19, %c0_20] {strides = array<i32: 1, 1, 2, 1>} : memref<8x4x10x8xf32, #tpu.memory_space<vmem>>, vector<8x4x4x8xf32>
    %8 = arith.maximumf %6, %7 : vector<8x4x4x8xf32>
    %c0_21 = arith.constant 0 : index
    %c0_22 = arith.constant 0 : index
    %c2_23 = arith.constant 2 : index
    %c0_24 = arith.constant 0 : index
    %9 = tpu.strided_load %arg3[%c0_21, %c0_22, %c2_23, %c0_24] {strides = array<i32: 1, 1, 2, 1>} : memref<8x4x10x8xf32, #tpu.memory_space<vmem>>, vector<8x4x4x8xf32>
    %10 = arith.maximumf %8, %9 : vector<8x4x4x8xf32>
    %c0_25 = arith.constant 0 : index
    %c0_26 = arith.constant 0 : index
    %c0_27 = arith.constant 0 : index
    %c0_28 = arith.constant 0 : index
    %11 = vector.load %arg2[%c0_25, %c0_26, %c0_27, %c0_28] : memref<8x4x4x8xf32, #tpu.memory_space<vmem>>, vector<8x4x4x8xf32>
    tpu.vector_store %arg2[%c0_25, %c0_26, %c0_27, %c0_28], %10 {strides = array<i32>} : memref<8x4x4x8xf32, #tpu.memory_space<vmem>>, vector<8x4x4x8xf32>,
    return
  }
  func.func @transform_0(%arg0: i32) -> (i32, i32, i32, i32) {
    %c0_i32 = arith.constant 0 : i32
    %c0_i32_0 = arith.constant 0 : i32
    %c0_i32_1 = arith.constant 0 : i32
    %c0_i32_2 = arith.constant 0 : i32
    return %arg0, %c0_i32, %c0_i32_0, %c0_i32_1 : i32, i32, i32, i32
  }
  func.func @transform_1(%arg0: i32) -> (i32, i32, i32, i32) {
    %c0_i32 = arith.constant 0 : i32
    %c0_i32_0 = arith.constant 0 : i32
    %c0_i32_1 = arith.constant 0 : i32
    %c0_i32_2 = arith.constant 0 : i32
    return %arg0, %c0_i32, %c0_i32_0, %c0_i32_1 : i32, i32, i32, i32
  }
}

module attributes {stable_mosaic.version = 11 : i64} {
  func.func @kernel(%arg0: i32, %arg1: memref<128x72xf32, #tpu.memory_space<vmem>>, %arg2: memref<72x128xbf16, #tpu.memory_space<vmem>>, %arg3: memref<1x128xf32, #tpu.memory_space<vmem>>, %arg4: memref<128x128xf32, #tpu.memory_space<vmem>>) attributes {dimension_semantics = [#tpu.dimension_semantics<parallel>], iteration_bounds = array<i64: 1>, scalar_prefetch = 0 : i64, scratch_operands = 0 : i64, tpu.core_type = #tpu.core_type<tc>, window_params = [{transform_indices = @transform_0, window_bounds = array<i64: 128, 72>}, {pipeline_mode = #tpu.pipeline_mode<synchronous>, transform_indices = @transform_1, window_bounds = array<i64: 72, 128>}, {pipeline_mode = #tpu.pipeline_mode<synchronous>, transform_indices = @transform_2, window_bounds = array<i64: 1, 128>}, {transform_indices = @transform_3, window_bounds = array<i64: 128, 128>}]} {
    %c0 = arith.constant 0 : index
    %c0_0 = arith.constant 0 : index
    %0 = vector.load %arg1[%c0, %c0_0] : memref<128x72xf32, #tpu.memory_space<vmem>>, vector<128x72xf32>
    %1 = arith.truncf %0 : vector<128x72xf32> to vector<128x72xbf16>
    %c0_1 = arith.constant 0 : index
    %c0_2 = arith.constant 0 : index
    %2 = vector.load %arg2[%c0_1, %c0_2] : memref<72x128xbf16, #tpu.memory_space<vmem>>, vector<72x128xbf16>
    %cst = arith.constant dense<0.000000e+00> : vector<128x128xf32>
    %3 = tpu.matmul %1, %2, %cst {dimension_numbers = #tpu.dot_dimension_numbers<[1], [0], [0], [1], [0, 0, 1, 1], [], []>} : vector<128x72xbf16>, vector<72x128xbf16>, vector<128x128xf32> -> vector<128x128xf32>
    %c0_3 = arith.constant 0 : index
    %c0_4 = arith.constant 0 : index
    %4 = vector.load %arg3[%c0_3, %c0_4] : memref<1x128xf32, #tpu.memory_space<vmem>>, vector<1x128xf32>
    %5 = vector.broadcast %4 : vector<1x128xf32> to vector<128x128xf32>
    %6 = arith.addf %3, %5 : vector<128x128xf32>
    %cst_5 = arith.constant 0.000000e+00 : f32
    %7 = vector.broadcast %cst_5 : f32 to vector<128x128xf32>
    %8 = arith.maximumf %6, %7 : vector<128x128xf32>
    %c0_6 = arith.constant 0 : index
    %c0_7 = arith.constant 0 : index
    %9 = vector.load %arg4[%c0_6, %c0_7] : memref<128x128xf32, #tpu.memory_space<vmem>>, vector<128x128xf32>
    tpu.vector_store %arg4[%c0_6, %c0_7], %8 {strides = array<i32>} : memref<128x128xf32, #tpu.memory_space<vmem>>, vector<128x128xf32>,
    return
  }
  func.func @transform_0(%arg0: i32) -> (i32, i32) {
    %c0_i32 = arith.constant 0 : i32
    %c0_i32_0 = arith.constant 0 : i32
    return %arg0, %c0_i32 : i32, i32
  }
  func.func @transform_1(%arg0: i32) -> (i32, i32) {
    %c0_i32 = arith.constant 0 : i32
    %c0_i32_0 = arith.constant 0 : i32
    %c0_i32_1 = arith.constant 0 : i32
    return %c0_i32, %c0_i32_0 : i32, i32
  }
  func.func @transform_2(%arg0: i32) -> (i32, i32) {
    %c0_i32 = arith.constant 0 : i32
    %c0_i32_0 = arith.constant 0 : i32
    %c0_i32_1 = arith.constant 0 : i32
    return %c0_i32, %c0_i32_0 : i32, i32
  }
  func.func @transform_3(%arg0: i32) -> (i32, i32) {
    %c0_i32 = arith.constant 0 : i32
    %c0_i32_0 = arith.constant 0 : i32
    return %arg0, %c0_i32 : i32, i32
  }
}

module attributes {stable_mosaic.version = 11 : i64} {
  func.func @kernel(%arg0: i32, %arg1: memref<128x72xf32, #tpu.memory_space<vmem>>, %arg2: memref<72x128xbf16, #tpu.memory_space<vmem>>, %arg3: memref<1x128xf32, #tpu.memory_space<vmem>>, %arg4: memref<128x128xf32, #tpu.memory_space<vmem>>, %arg5: memref<128x128xbf16, #tpu.memory_space<vmem>>, %arg6: memref<1x128xf32, #tpu.memory_space<vmem>>, %arg7: memref<8x128xf32, #tpu.memory_space<vmem>>) attributes {dimension_semantics = [#tpu.dimension_semantics<parallel>], iteration_bounds = array<i64: 1>, scalar_prefetch = 0 : i64, scratch_operands = 0 : i64, tpu.core_type = #tpu.core_type<tc>, window_params = [{transform_indices = @transform_0, window_bounds = array<i64: 128, 72>}, {pipeline_mode = #tpu.pipeline_mode<synchronous>, transform_indices = @transform_1, window_bounds = array<i64: 72, 128>}, {pipeline_mode = #tpu.pipeline_mode<synchronous>, transform_indices = @transform_2, window_bounds = array<i64: 1, 128>}, {transform_indices = @transform_3, window_bounds = array<i64: 128, 128>}, {pipeline_mode = #tpu.pipeline_mode<synchronous>, transform_indices = @transform_4, window_bounds = array<i64: 128, 128>}, {pipeline_mode = #tpu.pipeline_mode<synchronous>, transform_indices = @transform_5, window_bounds = array<i64: 1, 128>}, {transform_indices = @transform_6, window_bounds = array<i64: 8, 128>}]} {
    %c0 = arith.constant 0 : index
    %c0_0 = arith.constant 0 : index
    %0 = vector.load %arg1[%c0, %c0_0] : memref<128x72xf32, #tpu.memory_space<vmem>>, vector<128x72xf32>
    %1 = arith.truncf %0 : vector<128x72xf32> to vector<128x72xbf16>
    %c0_1 = arith.constant 0 : index
    %c0_2 = arith.constant 0 : index
    %2 = vector.load %arg2[%c0_1, %c0_2] : memref<72x128xbf16, #tpu.memory_space<vmem>>, vector<72x128xbf16>
    %cst = arith.constant dense<0.000000e+00> : vector<128x128xf32>
    %3 = tpu.matmul %1, %2, %cst {dimension_numbers = #tpu.dot_dimension_numbers<[1], [0], [0], [1], [0, 0, 1, 1], [], []>} : vector<128x72xbf16>, vector<72x128xbf16>, vector<128x128xf32> -> vector<128x128xf32>
    %c0_3 = arith.constant 0 : index
    %c0_4 = arith.constant 0 : index
    %4 = vector.load %arg3[%c0_3, %c0_4] : memref<1x128xf32, #tpu.memory_space<vmem>>, vector<1x128xf32>
    %5 = vector.broadcast %4 : vector<1x128xf32> to vector<128x128xf32>
    %6 = arith.addf %3, %5 : vector<128x128xf32>
    %c0_5 = arith.constant 0 : index
    %c0_6 = arith.constant 0 : index
    %7 = vector.load %arg4[%c0_5, %c0_6] : memref<128x128xf32, #tpu.memory_space<vmem>>, vector<128x128xf32>
    %8 = arith.addf %6, %7 : vector<128x128xf32>
    %cst_7 = arith.constant 0.000000e+00 : f32
    %9 = vector.broadcast %cst_7 : f32 to vector<128x128xf32>
    %10 = arith.maximumf %8, %9 : vector<128x128xf32>
    %11 = vector.shape_cast %10 : vector<128x128xf32> to vector<8x16x128xf32>
    %cst_8 = arith.constant dense<0.000000e+00> : vector<8x128xf32>
    %12 = vector.multi_reduction <add>, %11, %cst_8 [1] : vector<8x16x128xf32> to vector<8x128xf32>
    %cst_9 = arith.constant 1.600000e+01 : f32
    %13 = vector.broadcast %cst_9 : f32 to vector<8x128xf32>
    %14 = arith.divf %12, %13 : vector<8x128xf32>
    %15 = arith.truncf %14 : vector<8x128xf32> to vector<8x128xbf16>
    %c0_10 = arith.constant 0 : index
    %c0_11 = arith.constant 0 : index
    %16 = vector.load %arg5[%c0_10, %c0_11] : memref<128x128xbf16, #tpu.memory_space<vmem>>, vector<128x128xbf16>
    %cst_12 = arith.constant dense<0.000000e+00> : vector<8x128xf32>
    %17 = tpu.matmul %15, %16, %cst_12 {dimension_numbers = #tpu.dot_dimension_numbers<[1], [0], [0], [1], [0, 0, 1, 1], [], []>} : vector<8x128xbf16>, vector<128x128xbf16>, vector<8x128xf32> -> vector<8x128xf32>
    %c0_13 = arith.constant 0 : index
    %c0_14 = arith.constant 0 : index
    %18 = vector.load %arg6[%c0_13, %c0_14] : memref<1x128xf32, #tpu.memory_space<vmem>>, vector<1x128xf32>
    %19 = vector.broadcast %18 : vector<1x128xf32> to vector<8x128xf32>
    %20 = arith.addf %17, %19 : vector<8x128xf32>
    %c0_15 = arith.constant 0 : index
    %c0_16 = arith.constant 0 : index
    %21 = vector.load %arg7[%c0_15, %c0_16] : memref<8x128xf32, #tpu.memory_space<vmem>>, vector<8x128xf32>
    tpu.vector_store %arg7[%c0_15, %c0_16], %20 {strides = array<i32>} : memref<8x128xf32, #tpu.memory_space<vmem>>, vector<8x128xf32>,
    return
  }
  func.func @transform_0(%arg0: i32) -> (i32, i32) {
    %c0_i32 = arith.constant 0 : i32
    %c0_i32_0 = arith.constant 0 : i32
    return %arg0, %c0_i32 : i32, i32
  }
  func.func @transform_1(%arg0: i32) -> (i32, i32) {
    %c0_i32 = arith.constant 0 : i32
    %c0_i32_0 = arith.constant 0 : i32
    %c0_i32_1 = arith.constant 0 : i32
    return %c0_i32, %c0_i32_0 : i32, i32
  }
  func.func @transform_2(%arg0: i32) -> (i32, i32) {
    %c0_i32 = arith.constant 0 : i32
    %c0_i32_0 = arith.constant 0 : i32
    %c0_i32_1 = arith.constant 0 : i32
    return %c0_i32, %c0_i32_0 : i32, i32
  }
  func.func @transform_3(%arg0: i32) -> (i32, i32) {
    %c0_i32 = arith.constant 0 : i32
    %c0_i32_0 = arith.constant 0 : i32
    return %arg0, %c0_i32 : i32, i32
  }
  func.func @transform_4(%arg0: i32) -> (i32, i32) {
    %c0_i32 = arith.constant 0 : i32
    %c0_i32_0 = arith.constant 0 : i32
    %c0_i32_1 = arith.constant 0 : i32
    return %c0_i32, %c0_i32_0 : i32, i32
  }
  func.func @transform_5(%arg0: i32) -> (i32, i32) {
    %c0_i32 = arith.constant 0 : i32
    %c0_i32_0 = arith.constant 0 : i32
    %c0_i32_1 = arith.constant 0 : i32
    return %c0_i32, %c0_i32_0 : i32, i32
  }
  func.func @transform_6(%arg0: i32) -> (i32, i32) {
    %c0_i32 = arith.constant 0 : i32
    %c0_i32_0 = arith.constant 0 : i32
    return %arg0, %c0_i32 : i32, i32
  }
}

module attributes {stable_mosaic.version = 11 : i64} {
  func.func @kernel(%arg0: i32, %arg1: memref<8x16xf32, #tpu.memory_space<vmem>>, %arg2: memref<1x16x64xf32, #tpu.memory_space<vmem>>, %arg3: memref<1x1x64xf32, #tpu.memory_space<vmem>>, %arg4: memref<1x16x64xf32, #tpu.memory_space<vmem>>, %arg5: memref<1x4x2x16xf32, #tpu.memory_space<vmem>>, %arg6: memref<2x16xf32, #tpu.memory_space<vmem>>, %arg7: memref<2x16xf32, #tpu.memory_space<vmem>>, %arg8: memref<4x2x64xf32, #tpu.memory_space<vmem>>) attributes {dimension_semantics = [#tpu.dimension_semantics<parallel>], iteration_bounds = array<i64: 2>, scalar_prefetch = 0 : i64, scratch_operands = 3 : i64, tpu.core_type = #tpu.core_type<tc>, window_params = [{pipeline_mode = #tpu.pipeline_mode<synchronous>, transform_indices = @transform_0, window_bounds = array<i64: 8, 16>}, {transform_indices = @transform_1, window_bounds = array<i64: 1, 16, 64>}, {transform_indices = @transform_2, window_bounds = array<i64: 1, 1, 64>}, {transform_indices = @transform_3, window_bounds = array<i64: 1, 16, 64>}, {transform_indices = @transform_4, window_bounds = array<i64: 1, 4, 2, 16>}]} {
    %c0 = arith.constant 0 : index
    %c0_0 = arith.constant 0 : index
    %0 = vector.load %arg1[%c0, %c0_0] : memref<8x16xf32, #tpu.memory_space<vmem>>, vector<8x16xf32>
    %1 = arith.truncf %0 : vector<8x16xf32> to vector<8x16xbf16>
    %c0_1 = arith.constant 0 : index
    %c0_2 = arith.constant 0 : index
    %c0_3 = arith.constant 0 : index
    %2 = vector.load %arg2[%c0_1, %c0_2, %c0_3] : memref<1x16x64xf32, #tpu.memory_space<vmem>>, vector<1x16x64xf32>
    %3 = vector.shape_cast %2 : vector<1x16x64xf32> to vector<16x64xf32>
    %4 = arith.truncf %3 : vector<16x64xf32> to vector<16x64xbf16>
    %cst = arith.constant dense<0.000000e+00> : vector<8x64xf32>
    %5 = tpu.matmul %1, %4, %cst {dimension_numbers = #tpu.dot_dimension_numbers<[1], [0], [0], [1], [0, 0, 1, 1], [], []>} : vector<8x16xbf16>, vector<16x64xbf16>, vector<8x64xf32> -> vector<8x64xf32>
    %c0_4 = arith.constant 0 : index
    %c0_5 = arith.constant 0 : index
    %c0_6 = arith.constant 0 : index
    %6 = vector.load %arg3[%c0_4, %c0_5, %c0_6] : memref<1x1x64xf32, #tpu.memory_space<vmem>>, vector<1x1x64xf32>
    %7 = vector.shape_cast %6 : vector<1x1x64xf32> to vector<1x64xf32>
    %8 = vector.broadcast %7 : vector<1x64xf32> to vector<8x64xf32>
    %9 = arith.addf %5, %8 : vector<8x64xf32>
    %10 = vector.shape_cast %9 : vector<8x64xf32> to vector<4x2x64xf32>
    %c0_7 = arith.constant 0 : index
    %c0_8 = arith.constant 0 : index
    %c0_9 = arith.constant 0 : index
    %11 = vector.load %arg8[%c0_7, %c0_8, %c0_9] : memref<4x2x64xf32, #tpu.memory_space<vmem>>, vector<4x2x64xf32>
    tpu.vector_store %arg8[%c0_7, %c0_8, %c0_9], %10 {strides = array<i32>} : memref<4x2x64xf32, #tpu.memory_space<vmem>>, vector<4x2x64xf32>,
    %cst_10 = arith.constant 0.000000e+00 : f32
    %12 = vector.broadcast %cst_10 : f32 to vector<2x16xf32>
    %c0_11 = arith.constant 0 : index
    %c0_12 = arith.constant 0 : index
    %13 = vector.load %arg6[%c0_11, %c0_12] : memref<2x16xf32, #tpu.memory_space<vmem>>, vector<2x16xf32>
    tpu.vector_store %arg6[%c0_11, %c0_12], %12 {strides = array<i32>} : memref<2x16xf32, #tpu.memory_space<vmem>>, vector<2x16xf32>,
    %cst_13 = arith.constant 0.000000e+00 : f32
    %14 = vector.broadcast %cst_13 : f32 to vector<2x16xf32>
    %c0_14 = arith.constant 0 : index
    %c0_15 = arith.constant 0 : index
    %15 = vector.load %arg7[%c0_14, %c0_15] : memref<2x16xf32, #tpu.memory_space<vmem>>, vector<2x16xf32>
    tpu.vector_store %arg7[%c0_14, %c0_15], %14 {strides = array<i32>} : memref<2x16xf32, #tpu.memory_space<vmem>>, vector<2x16xf32>,
    %c0_16 = arith.constant 0 : index
    %c0_17 = arith.constant 0 : index
    %c0_18 = arith.constant 0 : index
    %16 = vector.load %arg4[%c0_16, %c0_17, %c0_18] : memref<1x16x64xf32, #tpu.memory_space<vmem>>, vector<1x16x64xf32>
    %17 = vector.shape_cast %16 : vector<1x16x64xf32> to vector<16x64xf32>
    %18 = arith.truncf %17 : vector<16x64xf32> to vector<16x64xbf16>
    %c0_i32 = arith.constant 0 : i32
    %c0_i32_19 = arith.constant 0 : i32
    %19 = arith.cmpi eq, %arg0, %c0_i32_19 : i32
    %c3_i32 = arith.constant 3 : i32
    %20 = arith.subi %c3_i32, %c0_i32 : i32
    %21 = arith.select %19, %c0_i32, %20 : i32
    %22 = arith.index_cast %21 : i32 to index
    %c0_20 = arith.constant 0 : index
    %c0_21 = arith.constant 0 : index
    %23 = vector.load %arg8[%22, %c0_20, %c0_21] : memref<4x2x64xf32, #tpu.memory_space<vmem>>, vector<1x2x64xf32>
    %24 = vector.shape_cast %23 : vector<1x2x64xf32> to vector<2x64xf32>
    %c0_22 = arith.constant 0 : index
    %c0_23 = arith.constant 0 : index
    %25 = vector.load %arg6[%c0_22, %c0_23] : memref<2x16xf32, #tpu.memory_space<vmem>>, vector<2x16xf32>
    %26 = arith.truncf %25 : vector<2x16xf32> to vector<2x16xbf16>
    %cst_24 = arith.constant dense<0.000000e+00> : vector<2x64xf32>
    %27 = tpu.matmul %26, %18, %cst_24 {dimension_numbers = #tpu.dot_dimension_numbers<[1], [0], [0], [1], [0, 0, 1, 1], [], []>} : vector<2x16xbf16>, vector<16x64xbf16>, vector<2x64xf32> -> vector<2x64xf32>
    %28 = arith.addf %24, %27 : vector<2x64xf32>
    %29 = vector.extract_strided_slice %28 {offsets = [0, 0], sizes = [2, 16], strides = [1, 1]} : vector<2x64xf32> to vector<2x16xf32>
    %30 = arith.negf %29 : vector<2x16xf32>
    %31 = math.exp %30 : vector<2x16xf32>
    %cst_25 = arith.constant 1.000000e+00 : f32
    %32 = vector.broadcast %cst_25 : f32 to vector<2x16xf32>
    %33 = arith.addf %32, %31 : vector<2x16xf32>
    %34 = arith.divf %32, %33 : vector<2x16xf32>
    %35 = vector.extract_strided_slice %28 {offsets = [0, 16], sizes = [2, 16], strides = [1, 1]} : vector<2x64xf32> to vector<2x16xf32>
    %36 = arith.negf %35 : vector<2x16xf32>
    %37 = math.exp %36 : vector<2x16xf32>
    %cst_26 = arith.constant 1.000000e+00 : f32
    %38 = vector.broadcast %cst_26 : f32 to vector<2x16xf32>
    %39 = arith.addf %38, %37 : vector<2x16xf32>
    %40 = arith.divf %38, %39 : vector<2x16xf32>
    %41 = vector.extract_strided_slice %28 {offsets = [0, 32], sizes = [2, 16], strides = [1, 1]} : vector<2x64xf32> to vector<2x16xf32>
    %42 = math.tanh %41 : vector<2x16xf32>
    %43 = vector.extract_strided_slice %28 {offsets = [0, 48], sizes = [2, 16], strides = [1, 1]} : vector<2x64xf32> to vector<2x16xf32>
    %44 = arith.negf %43 : vector<2x16xf32>
    %45 = math.exp %44 : vector<2x16xf32>
    %cst_27 = arith.constant 1.000000e+00 : f32
    %46 = vector.broadcast %cst_27 : f32 to vector<2x16xf32>
    %47 = arith.addf %46, %45 : vector<2x16xf32>
    %48 = arith.divf %46, %47 : vector<2x16xf32>
    %c0_28 = arith.constant 0 : index
    %c0_29 = arith.constant 0 : index
    %49 = vector.load %arg7[%c0_28, %c0_29] : memref<2x16xf32, #tpu.memory_space<vmem>>, vector<2x16xf32>
    %50 = arith.mulf %40, %49 : vector<2x16xf32>
    %51 = arith.mulf %34, %42 : vector<2x16xf32>
    %52 = arith.addf %50, %51 : vector<2x16xf32>
    %53 = math.tanh %52 : vector<2x16xf32>
    %54 = arith.mulf %48, %53 : vector<2x16xf32>
    %c0_30 = arith.constant 0 : index
    %c0_31 = arith.constant 0 : index
    %55 = vector.load %arg7[%c0_30, %c0_31] : memref<2x16xf32, #tpu.memory_space<vmem>>, vector<2x16xf32>
    tpu.vector_store %arg7[%c0_30, %c0_31], %52 {strides = array<i32>} : memref<2x16xf32, #tpu.memory_space<vmem>>, vector<2x16xf32>,
    %c0_32 = arith.constant 0 : index
    %c0_33 = arith.constant 0 : index
    %56 = vector.load %arg6[%c0_32, %c0_33] : memref<2x16xf32, #tpu.memory_space<vmem>>, vector<2x16xf32>
    tpu.vector_store %arg6[%c0_32, %c0_33], %54 {strides = array<i32>} : memref<2x16xf32, #tpu.memory_space<vmem>>, vector<2x16xf32>,
    %c0_34 = arith.constant 0 : index
    %57 = arith.index_cast %21 : i32 to index
    %c0_35 = arith.constant 0 : index
    %c0_36 = arith.constant 0 : index
    %58 = vector.load %arg5[%c0_34, %57, %c0_35, %c0_36] : memref<1x4x2x16xf32, #tpu.memory_space<vmem>>, vector<1x1x2x16xf32>
    %59 = vector.shape_cast %58 : vector<1x1x2x16xf32> to vector<2x16xf32>
    %60 = vector.shape_cast %54 : vector<2x16xf32> to vector<1x1x2x16xf32>
    tpu.vector_store %arg5[%c0_34, %57, %c0_35, %c0_36], %60 {strides = array<i32>} : memref<1x4x2x16xf32, #tpu.memory_space<vmem>>, vector<1x1x2x16xf32>,
    %c1_i32 = arith.constant 1 : i32
    %c0_i32_37 = arith.constant 0 : i32
    %61 = arith.cmpi eq, %arg0, %c0_i32_37 : i32
    %c3_i32_38 = arith.constant 3 : i32
    %62 = arith.subi %c3_i32_38, %c1_i32 : i32
    %63 = arith.select %61, %c1_i32, %62 : i32
    %64 = arith.index_cast %63 : i32 to index
    %c0_39 = arith.constant 0 : index
    %c0_40 = arith.constant 0 : index
    %65 = vector.load %arg8[%64, %c0_39, %c0_40] : memref<4x2x64xf32, #tpu.memory_space<vmem>>, vector<1x2x64xf32>
    %66 = vector.shape_cast %65 : vector<1x2x64xf32> to vector<2x64xf32>
    %c0_41 = arith.constant 0 : index
    %c0_42 = arith.constant 0 : index
    %67 = vector.load %arg6[%c0_41, %c0_42] : memref<2x16xf32, #tpu.memory_space<vmem>>, vector<2x16xf32>
    %68 = arith.truncf %67 : vector<2x16xf32> to vector<2x16xbf16>
    %cst_43 = arith.constant dense<0.000000e+00> : vector<2x64xf32>
    %69 = tpu.matmul %68, %18, %cst_43 {dimension_numbers = #tpu.dot_dimension_numbers<[1], [0], [0], [1], [0, 0, 1, 1], [], []>} : vector<2x16xbf16>, vector<16x64xbf16>, vector<2x64xf32> -> vector<2x64xf32>
    %70 = arith.addf %66, %69 : vector<2x64xf32>
    %71 = vector.extract_strided_slice %70 {offsets = [0, 0], sizes = [2, 16], strides = [1, 1]} : vector<2x64xf32> to vector<2x16xf32>
    %72 = arith.negf %71 : vector<2x16xf32>
    %73 = math.exp %72 : vector<2x16xf32>
    %cst_44 = arith.constant 1.000000e+00 : f32
    %74 = vector.broadcast %cst_44 : f32 to vector<2x16xf32>
    %75 = arith.addf %74, %73 : vector<2x16xf32>
    %76 = arith.divf %74, %75 : vector<2x16xf32>
    %77 = vector.extract_strided_slice %70 {offsets = [0, 16], sizes = [2, 16], strides = [1, 1]} : vector<2x64xf32> to vector<2x16xf32>
    %78 = arith.negf %77 : vector<2x16xf32>
    %79 = math.exp %78 : vector<2x16xf32>
    %cst_45 = arith.constant 1.000000e+00 : f32
    %80 = vector.broadcast %cst_45 : f32 to vector<2x16xf32>
    %81 = arith.addf %80, %79 : vector<2x16xf32>
    %82 = arith.divf %80, %81 : vector<2x16xf32>
    %83 = vector.extract_strided_slice %70 {offsets = [0, 32], sizes = [2, 16], strides = [1, 1]} : vector<2x64xf32> to vector<2x16xf32>
    %84 = math.tanh %83 : vector<2x16xf32>
    %85 = vector.extract_strided_slice %70 {offsets = [0, 48], sizes = [2, 16], strides = [1, 1]} : vector<2x64xf32> to vector<2x16xf32>
    %86 = arith.negf %85 : vector<2x16xf32>
    %87 = math.exp %86 : vector<2x16xf32>
    %cst_46 = arith.constant 1.000000e+00 : f32
    %88 = vector.broadcast %cst_46 : f32 to vector<2x16xf32>
    %89 = arith.addf %88, %87 : vector<2x16xf32>
    %90 = arith.divf %88, %89 : vector<2x16xf32>
    %c0_47 = arith.constant 0 : index
    %c0_48 = arith.constant 0 : index
    %91 = vector.load %arg7[%c0_47, %c0_48] : memref<2x16xf32, #tpu.memory_space<vmem>>, vector<2x16xf32>
    %92 = arith.mulf %82, %91 : vector<2x16xf32>
    %93 = arith.mulf %76, %84 : vector<2x16xf32>
    %94 = arith.addf %92, %93 : vector<2x16xf32>
    %95 = math.tanh %94 : vector<2x16xf32>
    %96 = arith.mulf %90, %95 : vector<2x16xf32>
    %c0_49 = arith.constant 0 : index
    %c0_50 = arith.constant 0 : index
    %97 = vector.load %arg7[%c0_49, %c0_50] : memref<2x16xf32, #tpu.memory_space<vmem>>, vector<2x16xf32>
    tpu.vector_store %arg7[%c0_49, %c0_50], %94 {strides = array<i32>} : memref<2x16xf32, #tpu.memory_space<vmem>>, vector<2x16xf32>,
    %c0_51 = arith.constant 0 : index
    %c0_52 = arith.constant 0 : index
    %98 = vector.load %arg6[%c0_51, %c0_52] : memref<2x16xf32, #tpu.memory_space<vmem>>, vector<2x16xf32>
    tpu.vector_store %arg6[%c0_51, %c0_52], %96 {strides = array<i32>} : memref<2x16xf32, #tpu.memory_space<vmem>>, vector<2x16xf32>,
    %c0_53 = arith.constant 0 : index
    %99 = arith.index_cast %63 : i32 to index
    %c0_54 = arith.constant 0 : index
    %c0_55 = arith.constant 0 : index
    %100 = vector.load %arg5[%c0_53, %99, %c0_54, %c0_55] : memref<1x4x2x16xf32, #tpu.memory_space<vmem>>, vector<1x1x2x16xf32>
    %101 = vector.shape_cast %100 : vector<1x1x2x16xf32> to vector<2x16xf32>
    %102 = vector.shape_cast %96 : vector<2x16xf32> to vector<1x1x2x16xf32>
    tpu.vector_store %arg5[%c0_53, %99, %c0_54, %c0_55], %102 {strides = array<i32>} : memref<1x4x2x16xf32, #tpu.memory_space<vmem>>, vector<1x1x2x16xf32>,
    %c2_i32 = arith.constant 2 : i32
    %c0_i32_56 = arith.constant 0 : i32
    %103 = arith.cmpi eq, %arg0, %c0_i32_56 : i32
    %c3_i32_57 = arith.constant 3 : i32
    %104 = arith.subi %c3_i32_57, %c2_i32 : i32
    %105 = arith.select %103, %c2_i32, %104 : i32
    %106 = arith.index_cast %105 : i32 to index
    %c0_58 = arith.constant 0 : index
    %c0_59 = arith.constant 0 : index
    %107 = vector.load %arg8[%106, %c0_58, %c0_59] : memref<4x2x64xf32, #tpu.memory_space<vmem>>, vector<1x2x64xf32>
    %108 = vector.shape_cast %107 : vector<1x2x64xf32> to vector<2x64xf32>
    %c0_60 = arith.constant 0 : index
    %c0_61 = arith.constant 0 : index
    %109 = vector.load %arg6[%c0_60, %c0_61] : memref<2x16xf32, #tpu.memory_space<vmem>>, vector<2x16xf32>
    %110 = arith.truncf %109 : vector<2x16xf32> to vector<2x16xbf16>
    %cst_62 = arith.constant dense<0.000000e+00> : vector<2x64xf32>
    %111 = tpu.matmul %110, %18, %cst_62 {dimension_numbers = #tpu.dot_dimension_numbers<[1], [0], [0], [1], [0, 0, 1, 1], [], []>} : vector<2x16xbf16>, vector<16x64xbf16>, vector<2x64xf32> -> vector<2x64xf32>
    %112 = arith.addf %108, %111 : vector<2x64xf32>
    %113 = vector.extract_strided_slice %112 {offsets = [0, 0], sizes = [2, 16], strides = [1, 1]} : vector<2x64xf32> to vector<2x16xf32>
    %114 = arith.negf %113 : vector<2x16xf32>
    %115 = math.exp %114 : vector<2x16xf32>
    %cst_63 = arith.constant 1.000000e+00 : f32
    %116 = vector.broadcast %cst_63 : f32 to vector<2x16xf32>
    %117 = arith.addf %116, %115 : vector<2x16xf32>
    %118 = arith.divf %116, %117 : vector<2x16xf32>
    %119 = vector.extract_strided_slice %112 {offsets = [0, 16], sizes = [2, 16], strides = [1, 1]} : vector<2x64xf32> to vector<2x16xf32>
    %120 = arith.negf %119 : vector<2x16xf32>
    %121 = math.exp %120 : vector<2x16xf32>
    %cst_64 = arith.constant 1.000000e+00 : f32
    %122 = vector.broadcast %cst_64 : f32 to vector<2x16xf32>
    %123 = arith.addf %122, %121 : vector<2x16xf32>
    %124 = arith.divf %122, %123 : vector<2x16xf32>
    %125 = vector.extract_strided_slice %112 {offsets = [0, 32], sizes = [2, 16], strides = [1, 1]} : vector<2x64xf32> to vector<2x16xf32>
    %126 = math.tanh %125 : vector<2x16xf32>
    %127 = vector.extract_strided_slice %112 {offsets = [0, 48], sizes = [2, 16], strides = [1, 1]} : vector<2x64xf32> to vector<2x16xf32>
    %128 = arith.negf %127 : vector<2x16xf32>
    %129 = math.exp %128 : vector<2x16xf32>
    %cst_65 = arith.constant 1.000000e+00 : f32
    %130 = vector.broadcast %cst_65 : f32 to vector<2x16xf32>
    %131 = arith.addf %130, %129 : vector<2x16xf32>
    %132 = arith.divf %130, %131 : vector<2x16xf32>
    %c0_66 = arith.constant 0 : index
    %c0_67 = arith.constant 0 : index
    %133 = vector.load %arg7[%c0_66, %c0_67] : memref<2x16xf32, #tpu.memory_space<vmem>>, vector<2x16xf32>
    %134 = arith.mulf %124, %133 : vector<2x16xf32>
    %135 = arith.mulf %118, %126 : vector<2x16xf32>
    %136 = arith.addf %134, %135 : vector<2x16xf32>
    %137 = math.tanh %136 : vector<2x16xf32>
    %138 = arith.mulf %132, %137 : vector<2x16xf32>
    %c0_68 = arith.constant 0 : index
    %c0_69 = arith.constant 0 : index
    %139 = vector.load %arg7[%c0_68, %c0_69] : memref<2x16xf32, #tpu.memory_space<vmem>>, vector<2x16xf32>
    tpu.vector_store %arg7[%c0_68, %c0_69], %136 {strides = array<i32>} : memref<2x16xf32, #tpu.memory_space<vmem>>, vector<2x16xf32>,
    %c0_70 = arith.constant 0 : index
    %c0_71 = arith.constant 0 : index
    %140 = vector.load %arg6[%c0_70, %c0_71] : memref<2x16xf32, #tpu.memory_space<vmem>>, vector<2x16xf32>
    tpu.vector_store %arg6[%c0_70, %c0_71], %138 {strides = array<i32>} : memref<2x16xf32, #tpu.memory_space<vmem>>, vector<2x16xf32>,
    %c0_72 = arith.constant 0 : index
    %141 = arith.index_cast %105 : i32 to index
    %c0_73 = arith.constant 0 : index
    %c0_74 = arith.constant 0 : index
    %142 = vector.load %arg5[%c0_72, %141, %c0_73, %c0_74] : memref<1x4x2x16xf32, #tpu.memory_space<vmem>>, vector<1x1x2x16xf32>
    %143 = vector.shape_cast %142 : vector<1x1x2x16xf32> to vector<2x16xf32>
    %144 = vector.shape_cast %138 : vector<2x16xf32> to vector<1x1x2x16xf32>
    tpu.vector_store %arg5[%c0_72, %141, %c0_73, %c0_74], %144 {strides = array<i32>} : memref<1x4x2x16xf32, #tpu.memory_space<vmem>>, vector<1x1x2x16xf32>,
    %c3_i32_75 = arith.constant 3 : i32
    %c0_i32_76 = arith.constant 0 : i32
    %145 = arith.cmpi eq, %arg0, %c0_i32_76 : i32
    %c3_i32_77 = arith.constant 3 : i32
    %146 = arith.subi %c3_i32_77, %c3_i32_75 : i32
    %147 = arith.select %145, %c3_i32_75, %146 : i32
    %148 = arith.index_cast %147 : i32 to index
    %c0_78 = arith.constant 0 : index
    %c0_79 = arith.constant 0 : index
    %149 = vector.load %arg8[%148, %c0_78, %c0_79] : memref<4x2x64xf32, #tpu.memory_space<vmem>>, vector<1x2x64xf32>
    %150 = vector.shape_cast %149 : vector<1x2x64xf32> to vector<2x64xf32>
    %c0_80 = arith.constant 0 : index
    %c0_81 = arith.constant 0 : index
    %151 = vector.load %arg6[%c0_80, %c0_81] : memref<2x16xf32, #tpu.memory_space<vmem>>, vector<2x16xf32>
    %152 = arith.truncf %151 : vector<2x16xf32> to vector<2x16xbf16>
    %cst_82 = arith.constant dense<0.000000e+00> : vector<2x64xf32>
    %153 = tpu.matmul %152, %18, %cst_82 {dimension_numbers = #tpu.dot_dimension_numbers<[1], [0], [0], [1], [0, 0, 1, 1], [], []>} : vector<2x16xbf16>, vector<16x64xbf16>, vector<2x64xf32> -> vector<2x64xf32>
    %154 = arith.addf %150, %153 : vector<2x64xf32>
    %155 = vector.extract_strided_slice %154 {offsets = [0, 0], sizes = [2, 16], strides = [1, 1]} : vector<2x64xf32> to vector<2x16xf32>
    %156 = arith.negf %155 : vector<2x16xf32>
    %157 = math.exp %156 : vector<2x16xf32>
    %cst_83 = arith.constant 1.000000e+00 : f32
    %158 = vector.broadcast %cst_83 : f32 to vector<2x16xf32>
    %159 = arith.addf %158, %157 : vector<2x16xf32>
    %160 = arith.divf %158, %159 : vector<2x16xf32>
    %161 = vector.extract_strided_slice %154 {offsets = [0, 16], sizes = [2, 16], strides = [1, 1]} : vector<2x64xf32> to vector<2x16xf32>
    %162 = arith.negf %161 : vector<2x16xf32>
    %163 = math.exp %162 : vector<2x16xf32>
    %cst_84 = arith.constant 1.000000e+00 : f32
    %164 = vector.broadcast %cst_84 : f32 to vector<2x16xf32>
    %165 = arith.addf %164, %163 : vector<2x16xf32>
    %166 = arith.divf %164, %165 : vector<2x16xf32>
    %167 = vector.extract_strided_slice %154 {offsets = [0, 32], sizes = [2, 16], strides = [1, 1]} : vector<2x64xf32> to vector<2x16xf32>
    %168 = math.tanh %167 : vector<2x16xf32>
    %169 = vector.extract_strided_slice %154 {offsets = [0, 48], sizes = [2, 16], strides = [1, 1]} : vector<2x64xf32> to vector<2x16xf32>
    %170 = arith.negf %169 : vector<2x16xf32>
    %171 = math.exp %170 : vector<2x16xf32>
    %cst_85 = arith.constant 1.000000e+00 : f32
    %172 = vector.broadcast %cst_85 : f32 to vector<2x16xf32>
    %173 = arith.addf %172, %171 : vector<2x16xf32>
    %174 = arith.divf %172, %173 : vector<2x16xf32>
    %c0_86 = arith.constant 0 : index
    %c0_87 = arith.constant 0 : index
    %175 = vector.load %arg7[%c0_86, %c0_87] : memref<2x16xf32, #tpu.memory_space<vmem>>, vector<2x16xf32>
    %176 = arith.mulf %166, %175 : vector<2x16xf32>
    %177 = arith.mulf %160, %168 : vector<2x16xf32>
    %178 = arith.addf %176, %177 : vector<2x16xf32>
    %179 = math.tanh %178 : vector<2x16xf32>
    %180 = arith.mulf %174, %179 : vector<2x16xf32>
    %c0_88 = arith.constant 0 : index
    %c0_89 = arith.constant 0 : index
    %181 = vector.load %arg7[%c0_88, %c0_89] : memref<2x16xf32, #tpu.memory_space<vmem>>, vector<2x16xf32>
    tpu.vector_store %arg7[%c0_88, %c0_89], %178 {strides = array<i32>} : memref<2x16xf32, #tpu.memory_space<vmem>>, vector<2x16xf32>,
    %c0_90 = arith.constant 0 : index
    %c0_91 = arith.constant 0 : index
    %182 = vector.load %arg6[%c0_90, %c0_91] : memref<2x16xf32, #tpu.memory_space<vmem>>, vector<2x16xf32>
    tpu.vector_store %arg6[%c0_90, %c0_91], %180 {strides = array<i32>} : memref<2x16xf32, #tpu.memory_space<vmem>>, vector<2x16xf32>,
    %c0_92 = arith.constant 0 : index
    %183 = arith.index_cast %147 : i32 to index
    %c0_93 = arith.constant 0 : index
    %c0_94 = arith.constant 0 : index
    %184 = vector.load %arg5[%c0_92, %183, %c0_93, %c0_94] : memref<1x4x2x16xf32, #tpu.memory_space<vmem>>, vector<1x1x2x16xf32>
    %185 = vector.shape_cast %184 : vector<1x1x2x16xf32> to vector<2x16xf32>
    %186 = vector.shape_cast %180 : vector<2x16xf32> to vector<1x1x2x16xf32>
    tpu.vector_store %arg5[%c0_92, %183, %c0_93, %c0_94], %186 {strides = array<i32>} : memref<1x4x2x16xf32, #tpu.memory_space<vmem>>, vector<1x1x2x16xf32>,
    %c4_i32 = arith.constant 4 : i32
    return
  }
  func.func @transform_0(%arg0: i32) -> (i32, i32) {
    %c0_i32 = arith.constant 0 : i32
    %c0_i32_0 = arith.constant 0 : i32
    %c0_i32_1 = arith.constant 0 : i32
    return %c0_i32, %c0_i32_0 : i32, i32
  }
  func.func @transform_1(%arg0: i32) -> (i32, i32, i32) {
    %c0_i32 = arith.constant 0 : i32
    %c0_i32_0 = arith.constant 0 : i32
    %c0_i32_1 = arith.constant 0 : i32
    return %arg0, %c0_i32, %c0_i32_0 : i32, i32, i32
  }
  func.func @transform_2(%arg0: i32) -> (i32, i32, i32) {
    %c0_i32 = arith.constant 0 : i32
    %c0_i32_0 = arith.constant 0 : i32
    %c0_i32_1 = arith.constant 0 : i32
    return %arg0, %c0_i32, %c0_i32_0 : i32, i32, i32
  }
  func.func @transform_3(%arg0: i32) -> (i32, i32, i32) {
    %c0_i32 = arith.constant 0 : i32
    %c0_i32_0 = arith.constant 0 : i32
    %c0_i32_1 = arith.constant 0 : i32
    return %arg0, %c0_i32, %c0_i32_0 : i32, i32, i32
  }
  func.func @transform_4(%arg0: i32) -> (i32, i32, i32, i32) {
    %c0_i32 = arith.constant 0 : i32
    %c0_i32_0 = arith.constant 0 : i32
    %c0_i32_1 = arith.constant 0 : i32
    %c0_i32_2 = arith.constant 0 : i32
    return %arg0, %c0_i32, %c0_i32_0, %c0_i32_1 : i32, i32, i32, i32
  }
}

module attributes {stable_mosaic.version = 11 : i64} {
  func.func @kernel(%arg0: i32, %arg1: memref<8x32xf32, #tpu.memory_space<vmem>>, %arg2: memref<1x32x64xf32, #tpu.memory_space<vmem>>, %arg3: memref<1x1x64xf32, #tpu.memory_space<vmem>>, %arg4: memref<1x16x64xf32, #tpu.memory_space<vmem>>, %arg5: memref<1x4x2x16xf32, #tpu.memory_space<vmem>>, %arg6: memref<2x16xf32, #tpu.memory_space<vmem>>, %arg7: memref<2x16xf32, #tpu.memory_space<vmem>>, %arg8: memref<4x2x64xf32, #tpu.memory_space<vmem>>) attributes {dimension_semantics = [#tpu.dimension_semantics<parallel>], iteration_bounds = array<i64: 2>, scalar_prefetch = 0 : i64, scratch_operands = 3 : i64, tpu.core_type = #tpu.core_type<tc>, window_params = [{pipeline_mode = #tpu.pipeline_mode<synchronous>, transform_indices = @transform_0, window_bounds = array<i64: 8, 32>}, {transform_indices = @transform_1, window_bounds = array<i64: 1, 32, 64>}, {transform_indices = @transform_2, window_bounds = array<i64: 1, 1, 64>}, {transform_indices = @transform_3, window_bounds = array<i64: 1, 16, 64>}, {transform_indices = @transform_4, window_bounds = array<i64: 1, 4, 2, 16>}]} {
    %c0 = arith.constant 0 : index
    %c0_0 = arith.constant 0 : index
    %0 = vector.load %arg1[%c0, %c0_0] : memref<8x32xf32, #tpu.memory_space<vmem>>, vector<8x32xf32>
    %1 = arith.truncf %0 : vector<8x32xf32> to vector<8x32xbf16>
    %c0_1 = arith.constant 0 : index
    %c0_2 = arith.constant 0 : index
    %c0_3 = arith.constant 0 : index
    %2 = vector.load %arg2[%c0_1, %c0_2, %c0_3] : memref<1x32x64xf32, #tpu.memory_space<vmem>>, vector<1x32x64xf32>
    %3 = vector.shape_cast %2 : vector<1x32x64xf32> to vector<32x64xf32>
    %4 = arith.truncf %3 : vector<32x64xf32> to vector<32x64xbf16>
    %cst = arith.constant dense<0.000000e+00> : vector<8x64xf32>
    %5 = tpu.matmul %1, %4, %cst {dimension_numbers = #tpu.dot_dimension_numbers<[1], [0], [0], [1], [0, 0, 1, 1], [], []>} : vector<8x32xbf16>, vector<32x64xbf16>, vector<8x64xf32> -> vector<8x64xf32>
    %c0_4 = arith.constant 0 : index
    %c0_5 = arith.constant 0 : index
    %c0_6 = arith.constant 0 : index
    %6 = vector.load %arg3[%c0_4, %c0_5, %c0_6] : memref<1x1x64xf32, #tpu.memory_space<vmem>>, vector<1x1x64xf32>
    %7 = vector.shape_cast %6 : vector<1x1x64xf32> to vector<1x64xf32>
    %8 = vector.broadcast %7 : vector<1x64xf32> to vector<8x64xf32>
    %9 = arith.addf %5, %8 : vector<8x64xf32>
    %10 = vector.shape_cast %9 : vector<8x64xf32> to vector<4x2x64xf32>
    %c0_7 = arith.constant 0 : index
    %c0_8 = arith.constant 0 : index
    %c0_9 = arith.constant 0 : index
    %11 = vector.load %arg8[%c0_7, %c0_8, %c0_9] : memref<4x2x64xf32, #tpu.memory_space<vmem>>, vector<4x2x64xf32>
    tpu.vector_store %arg8[%c0_7, %c0_8, %c0_9], %10 {strides = array<i32>} : memref<4x2x64xf32, #tpu.memory_space<vmem>>, vector<4x2x64xf32>,
    %cst_10 = arith.constant 0.000000e+00 : f32
    %12 = vector.broadcast %cst_10 : f32 to vector<2x16xf32>
    %c0_11 = arith.constant 0 : index
    %c0_12 = arith.constant 0 : index
    %13 = vector.load %arg6[%c0_11, %c0_12] : memref<2x16xf32, #tpu.memory_space<vmem>>, vector<2x16xf32>
    tpu.vector_store %arg6[%c0_11, %c0_12], %12 {strides = array<i32>} : memref<2x16xf32, #tpu.memory_space<vmem>>, vector<2x16xf32>,
    %cst_13 = arith.constant 0.000000e+00 : f32
    %14 = vector.broadcast %cst_13 : f32 to vector<2x16xf32>
    %c0_14 = arith.constant 0 : index
    %c0_15 = arith.constant 0 : index
    %15 = vector.load %arg7[%c0_14, %c0_15] : memref<2x16xf32, #tpu.memory_space<vmem>>, vector<2x16xf32>
    tpu.vector_store %arg7[%c0_14, %c0_15], %14 {strides = array<i32>} : memref<2x16xf32, #tpu.memory_space<vmem>>, vector<2x16xf32>,
    %c0_16 = arith.constant 0 : index
    %c0_17 = arith.constant 0 : index
    %c0_18 = arith.constant 0 : index
    %16 = vector.load %arg4[%c0_16, %c0_17, %c0_18] : memref<1x16x64xf32, #tpu.memory_space<vmem>>, vector<1x16x64xf32>
    %17 = vector.shape_cast %16 : vector<1x16x64xf32> to vector<16x64xf32>
    %18 = arith.truncf %17 : vector<16x64xf32> to vector<16x64xbf16>
    %c0_i32 = arith.constant 0 : i32
    %c0_i32_19 = arith.constant 0 : i32
    %19 = arith.cmpi eq, %arg0, %c0_i32_19 : i32
    %c3_i32 = arith.constant 3 : i32
    %20 = arith.subi %c3_i32, %c0_i32 : i32
    %21 = arith.select %19, %c0_i32, %20 : i32
    %22 = arith.index_cast %21 : i32 to index
    %c0_20 = arith.constant 0 : index
    %c0_21 = arith.constant 0 : index
    %23 = vector.load %arg8[%22, %c0_20, %c0_21] : memref<4x2x64xf32, #tpu.memory_space<vmem>>, vector<1x2x64xf32>
    %24 = vector.shape_cast %23 : vector<1x2x64xf32> to vector<2x64xf32>
    %c0_22 = arith.constant 0 : index
    %c0_23 = arith.constant 0 : index
    %25 = vector.load %arg6[%c0_22, %c0_23] : memref<2x16xf32, #tpu.memory_space<vmem>>, vector<2x16xf32>
    %26 = arith.truncf %25 : vector<2x16xf32> to vector<2x16xbf16>
    %cst_24 = arith.constant dense<0.000000e+00> : vector<2x64xf32>
    %27 = tpu.matmul %26, %18, %cst_24 {dimension_numbers = #tpu.dot_dimension_numbers<[1], [0], [0], [1], [0, 0, 1, 1], [], []>} : vector<2x16xbf16>, vector<16x64xbf16>, vector<2x64xf32> -> vector<2x64xf32>
    %28 = arith.addf %24, %27 : vector<2x64xf32>
    %29 = vector.extract_strided_slice %28 {offsets = [0, 0], sizes = [2, 16], strides = [1, 1]} : vector<2x64xf32> to vector<2x16xf32>
    %30 = arith.negf %29 : vector<2x16xf32>
    %31 = math.exp %30 : vector<2x16xf32>
    %cst_25 = arith.constant 1.000000e+00 : f32
    %32 = vector.broadcast %cst_25 : f32 to vector<2x16xf32>
    %33 = arith.addf %32, %31 : vector<2x16xf32>
    %34 = arith.divf %32, %33 : vector<2x16xf32>
    %35 = vector.extract_strided_slice %28 {offsets = [0, 16], sizes = [2, 16], strides = [1, 1]} : vector<2x64xf32> to vector<2x16xf32>
    %36 = arith.negf %35 : vector<2x16xf32>
    %37 = math.exp %36 : vector<2x16xf32>
    %cst_26 = arith.constant 1.000000e+00 : f32
    %38 = vector.broadcast %cst_26 : f32 to vector<2x16xf32>
    %39 = arith.addf %38, %37 : vector<2x16xf32>
    %40 = arith.divf %38, %39 : vector<2x16xf32>
    %41 = vector.extract_strided_slice %28 {offsets = [0, 32], sizes = [2, 16], strides = [1, 1]} : vector<2x64xf32> to vector<2x16xf32>
    %42 = math.tanh %41 : vector<2x16xf32>
    %43 = vector.extract_strided_slice %28 {offsets = [0, 48], sizes = [2, 16], strides = [1, 1]} : vector<2x64xf32> to vector<2x16xf32>
    %44 = arith.negf %43 : vector<2x16xf32>
    %45 = math.exp %44 : vector<2x16xf32>
    %cst_27 = arith.constant 1.000000e+00 : f32
    %46 = vector.broadcast %cst_27 : f32 to vector<2x16xf32>
    %47 = arith.addf %46, %45 : vector<2x16xf32>
    %48 = arith.divf %46, %47 : vector<2x16xf32>
    %c0_28 = arith.constant 0 : index
    %c0_29 = arith.constant 0 : index
    %49 = vector.load %arg7[%c0_28, %c0_29] : memref<2x16xf32, #tpu.memory_space<vmem>>, vector<2x16xf32>
    %50 = arith.mulf %40, %49 : vector<2x16xf32>
    %51 = arith.mulf %34, %42 : vector<2x16xf32>
    %52 = arith.addf %50, %51 : vector<2x16xf32>
    %53 = math.tanh %52 : vector<2x16xf32>
    %54 = arith.mulf %48, %53 : vector<2x16xf32>
    %c0_30 = arith.constant 0 : index
    %c0_31 = arith.constant 0 : index
    %55 = vector.load %arg7[%c0_30, %c0_31] : memref<2x16xf32, #tpu.memory_space<vmem>>, vector<2x16xf32>
    tpu.vector_store %arg7[%c0_30, %c0_31], %52 {strides = array<i32>} : memref<2x16xf32, #tpu.memory_space<vmem>>, vector<2x16xf32>,
    %c0_32 = arith.constant 0 : index
    %c0_33 = arith.constant 0 : index
    %56 = vector.load %arg6[%c0_32, %c0_33] : memref<2x16xf32, #tpu.memory_space<vmem>>, vector<2x16xf32>
    tpu.vector_store %arg6[%c0_32, %c0_33], %54 {strides = array<i32>} : memref<2x16xf32, #tpu.memory_space<vmem>>, vector<2x16xf32>,
    %c0_34 = arith.constant 0 : index
    %57 = arith.index_cast %21 : i32 to index
    %c0_35 = arith.constant 0 : index
    %c0_36 = arith.constant 0 : index
    %58 = vector.load %arg5[%c0_34, %57, %c0_35, %c0_36] : memref<1x4x2x16xf32, #tpu.memory_space<vmem>>, vector<1x1x2x16xf32>
    %59 = vector.shape_cast %58 : vector<1x1x2x16xf32> to vector<2x16xf32>
    %60 = vector.shape_cast %54 : vector<2x16xf32> to vector<1x1x2x16xf32>
    tpu.vector_store %arg5[%c0_34, %57, %c0_35, %c0_36], %60 {strides = array<i32>} : memref<1x4x2x16xf32, #tpu.memory_space<vmem>>, vector<1x1x2x16xf32>,
    %c1_i32 = arith.constant 1 : i32
    %c0_i32_37 = arith.constant 0 : i32
    %61 = arith.cmpi eq, %arg0, %c0_i32_37 : i32
    %c3_i32_38 = arith.constant 3 : i32
    %62 = arith.subi %c3_i32_38, %c1_i32 : i32
    %63 = arith.select %61, %c1_i32, %62 : i32
    %64 = arith.index_cast %63 : i32 to index
    %c0_39 = arith.constant 0 : index
    %c0_40 = arith.constant 0 : index
    %65 = vector.load %arg8[%64, %c0_39, %c0_40] : memref<4x2x64xf32, #tpu.memory_space<vmem>>, vector<1x2x64xf32>
    %66 = vector.shape_cast %65 : vector<1x2x64xf32> to vector<2x64xf32>
    %c0_41 = arith.constant 0 : index
    %c0_42 = arith.constant 0 : index
    %67 = vector.load %arg6[%c0_41, %c0_42] : memref<2x16xf32, #tpu.memory_space<vmem>>, vector<2x16xf32>
    %68 = arith.truncf %67 : vector<2x16xf32> to vector<2x16xbf16>
    %cst_43 = arith.constant dense<0.000000e+00> : vector<2x64xf32>
    %69 = tpu.matmul %68, %18, %cst_43 {dimension_numbers = #tpu.dot_dimension_numbers<[1], [0], [0], [1], [0, 0, 1, 1], [], []>} : vector<2x16xbf16>, vector<16x64xbf16>, vector<2x64xf32> -> vector<2x64xf32>
    %70 = arith.addf %66, %69 : vector<2x64xf32>
    %71 = vector.extract_strided_slice %70 {offsets = [0, 0], sizes = [2, 16], strides = [1, 1]} : vector<2x64xf32> to vector<2x16xf32>
    %72 = arith.negf %71 : vector<2x16xf32>
    %73 = math.exp %72 : vector<2x16xf32>
    %cst_44 = arith.constant 1.000000e+00 : f32
    %74 = vector.broadcast %cst_44 : f32 to vector<2x16xf32>
    %75 = arith.addf %74, %73 : vector<2x16xf32>
    %76 = arith.divf %74, %75 : vector<2x16xf32>
    %77 = vector.extract_strided_slice %70 {offsets = [0, 16], sizes = [2, 16], strides = [1, 1]} : vector<2x64xf32> to vector<2x16xf32>
    %78 = arith.negf %77 : vector<2x16xf32>
    %79 = math.exp %78 : vector<2x16xf32>
    %cst_45 = arith.constant 1.000000e+00 : f32
    %80 = vector.broadcast %cst_45 : f32 to vector<2x16xf32>
    %81 = arith.addf %80, %79 : vector<2x16xf32>
    %82 = arith.divf %80, %81 : vector<2x16xf32>
    %83 = vector.extract_strided_slice %70 {offsets = [0, 32], sizes = [2, 16], strides = [1, 1]} : vector<2x64xf32> to vector<2x16xf32>
    %84 = math.tanh %83 : vector<2x16xf32>
    %85 = vector.extract_strided_slice %70 {offsets = [0, 48], sizes = [2, 16], strides = [1, 1]} : vector<2x64xf32> to vector<2x16xf32>
    %86 = arith.negf %85 : vector<2x16xf32>
    %87 = math.exp %86 : vector<2x16xf32>
    %cst_46 = arith.constant 1.000000e+00 : f32
    %88 = vector.broadcast %cst_46 : f32 to vector<2x16xf32>
    %89 = arith.addf %88, %87 : vector<2x16xf32>
    %90 = arith.divf %88, %89 : vector<2x16xf32>
    %c0_47 = arith.constant 0 : index
    %c0_48 = arith.constant 0 : index
    %91 = vector.load %arg7[%c0_47, %c0_48] : memref<2x16xf32, #tpu.memory_space<vmem>>, vector<2x16xf32>
    %92 = arith.mulf %82, %91 : vector<2x16xf32>
    %93 = arith.mulf %76, %84 : vector<2x16xf32>
    %94 = arith.addf %92, %93 : vector<2x16xf32>
    %95 = math.tanh %94 : vector<2x16xf32>
    %96 = arith.mulf %90, %95 : vector<2x16xf32>
    %c0_49 = arith.constant 0 : index
    %c0_50 = arith.constant 0 : index
    %97 = vector.load %arg7[%c0_49, %c0_50] : memref<2x16xf32, #tpu.memory_space<vmem>>, vector<2x16xf32>
    tpu.vector_store %arg7[%c0_49, %c0_50], %94 {strides = array<i32>} : memref<2x16xf32, #tpu.memory_space<vmem>>, vector<2x16xf32>,
    %c0_51 = arith.constant 0 : index
    %c0_52 = arith.constant 0 : index
    %98 = vector.load %arg6[%c0_51, %c0_52] : memref<2x16xf32, #tpu.memory_space<vmem>>, vector<2x16xf32>
    tpu.vector_store %arg6[%c0_51, %c0_52], %96 {strides = array<i32>} : memref<2x16xf32, #tpu.memory_space<vmem>>, vector<2x16xf32>,
    %c0_53 = arith.constant 0 : index
    %99 = arith.index_cast %63 : i32 to index
    %c0_54 = arith.constant 0 : index
    %c0_55 = arith.constant 0 : index
    %100 = vector.load %arg5[%c0_53, %99, %c0_54, %c0_55] : memref<1x4x2x16xf32, #tpu.memory_space<vmem>>, vector<1x1x2x16xf32>
    %101 = vector.shape_cast %100 : vector<1x1x2x16xf32> to vector<2x16xf32>
    %102 = vector.shape_cast %96 : vector<2x16xf32> to vector<1x1x2x16xf32>
    tpu.vector_store %arg5[%c0_53, %99, %c0_54, %c0_55], %102 {strides = array<i32>} : memref<1x4x2x16xf32, #tpu.memory_space<vmem>>, vector<1x1x2x16xf32>,
    %c2_i32 = arith.constant 2 : i32
    %c0_i32_56 = arith.constant 0 : i32
    %103 = arith.cmpi eq, %arg0, %c0_i32_56 : i32
    %c3_i32_57 = arith.constant 3 : i32
    %104 = arith.subi %c3_i32_57, %c2_i32 : i32
    %105 = arith.select %103, %c2_i32, %104 : i32
    %106 = arith.index_cast %105 : i32 to index
    %c0_58 = arith.constant 0 : index
    %c0_59 = arith.constant 0 : index
    %107 = vector.load %arg8[%106, %c0_58, %c0_59] : memref<4x2x64xf32, #tpu.memory_space<vmem>>, vector<1x2x64xf32>
    %108 = vector.shape_cast %107 : vector<1x2x64xf32> to vector<2x64xf32>
    %c0_60 = arith.constant 0 : index
    %c0_61 = arith.constant 0 : index
    %109 = vector.load %arg6[%c0_60, %c0_61] : memref<2x16xf32, #tpu.memory_space<vmem>>, vector<2x16xf32>
    %110 = arith.truncf %109 : vector<2x16xf32> to vector<2x16xbf16>
    %cst_62 = arith.constant dense<0.000000e+00> : vector<2x64xf32>
    %111 = tpu.matmul %110, %18, %cst_62 {dimension_numbers = #tpu.dot_dimension_numbers<[1], [0], [0], [1], [0, 0, 1, 1], [], []>} : vector<2x16xbf16>, vector<16x64xbf16>, vector<2x64xf32> -> vector<2x64xf32>
    %112 = arith.addf %108, %111 : vector<2x64xf32>
    %113 = vector.extract_strided_slice %112 {offsets = [0, 0], sizes = [2, 16], strides = [1, 1]} : vector<2x64xf32> to vector<2x16xf32>
    %114 = arith.negf %113 : vector<2x16xf32>
    %115 = math.exp %114 : vector<2x16xf32>
    %cst_63 = arith.constant 1.000000e+00 : f32
    %116 = vector.broadcast %cst_63 : f32 to vector<2x16xf32>
    %117 = arith.addf %116, %115 : vector<2x16xf32>
    %118 = arith.divf %116, %117 : vector<2x16xf32>
    %119 = vector.extract_strided_slice %112 {offsets = [0, 16], sizes = [2, 16], strides = [1, 1]} : vector<2x64xf32> to vector<2x16xf32>
    %120 = arith.negf %119 : vector<2x16xf32>
    %121 = math.exp %120 : vector<2x16xf32>
    %cst_64 = arith.constant 1.000000e+00 : f32
    %122 = vector.broadcast %cst_64 : f32 to vector<2x16xf32>
    %123 = arith.addf %122, %121 : vector<2x16xf32>
    %124 = arith.divf %122, %123 : vector<2x16xf32>
    %125 = vector.extract_strided_slice %112 {offsets = [0, 32], sizes = [2, 16], strides = [1, 1]} : vector<2x64xf32> to vector<2x16xf32>
    %126 = math.tanh %125 : vector<2x16xf32>
    %127 = vector.extract_strided_slice %112 {offsets = [0, 48], sizes = [2, 16], strides = [1, 1]} : vector<2x64xf32> to vector<2x16xf32>
    %128 = arith.negf %127 : vector<2x16xf32>
    %129 = math.exp %128 : vector<2x16xf32>
    %cst_65 = arith.constant 1.000000e+00 : f32
    %130 = vector.broadcast %cst_65 : f32 to vector<2x16xf32>
    %131 = arith.addf %130, %129 : vector<2x16xf32>
    %132 = arith.divf %130, %131 : vector<2x16xf32>
    %c0_66 = arith.constant 0 : index
    %c0_67 = arith.constant 0 : index
    %133 = vector.load %arg7[%c0_66, %c0_67] : memref<2x16xf32, #tpu.memory_space<vmem>>, vector<2x16xf32>
    %134 = arith.mulf %124, %133 : vector<2x16xf32>
    %135 = arith.mulf %118, %126 : vector<2x16xf32>
    %136 = arith.addf %134, %135 : vector<2x16xf32>
    %137 = math.tanh %136 : vector<2x16xf32>
    %138 = arith.mulf %132, %137 : vector<2x16xf32>
    %c0_68 = arith.constant 0 : index
    %c0_69 = arith.constant 0 : index
    %139 = vector.load %arg7[%c0_68, %c0_69] : memref<2x16xf32, #tpu.memory_space<vmem>>, vector<2x16xf32>
    tpu.vector_store %arg7[%c0_68, %c0_69], %136 {strides = array<i32>} : memref<2x16xf32, #tpu.memory_space<vmem>>, vector<2x16xf32>,
    %c0_70 = arith.constant 0 : index
    %c0_71 = arith.constant 0 : index
    %140 = vector.load %arg6[%c0_70, %c0_71] : memref<2x16xf32, #tpu.memory_space<vmem>>, vector<2x16xf32>
    tpu.vector_store %arg6[%c0_70, %c0_71], %138 {strides = array<i32>} : memref<2x16xf32, #tpu.memory_space<vmem>>, vector<2x16xf32>,
    %c0_72 = arith.constant 0 : index
    %141 = arith.index_cast %105 : i32 to index
    %c0_73 = arith.constant 0 : index
    %c0_74 = arith.constant 0 : index
    %142 = vector.load %arg5[%c0_72, %141, %c0_73, %c0_74] : memref<1x4x2x16xf32, #tpu.memory_space<vmem>>, vector<1x1x2x16xf32>
    %143 = vector.shape_cast %142 : vector<1x1x2x16xf32> to vector<2x16xf32>
    %144 = vector.shape_cast %138 : vector<2x16xf32> to vector<1x1x2x16xf32>
    tpu.vector_store %arg5[%c0_72, %141, %c0_73, %c0_74], %144 {strides = array<i32>} : memref<1x4x2x16xf32, #tpu.memory_space<vmem>>, vector<1x1x2x16xf32>,
    %c3_i32_75 = arith.constant 3 : i32
    %c0_i32_76 = arith.constant 0 : i32
    %145 = arith.cmpi eq, %arg0, %c0_i32_76 : i32
    %c3_i32_77 = arith.constant 3 : i32
    %146 = arith.subi %c3_i32_77, %c3_i32_75 : i32
    %147 = arith.select %145, %c3_i32_75, %146 : i32
    %148 = arith.index_cast %147 : i32 to index
    %c0_78 = arith.constant 0 : index
    %c0_79 = arith.constant 0 : index
    %149 = vector.load %arg8[%148, %c0_78, %c0_79] : memref<4x2x64xf32, #tpu.memory_space<vmem>>, vector<1x2x64xf32>
    %150 = vector.shape_cast %149 : vector<1x2x64xf32> to vector<2x64xf32>
    %c0_80 = arith.constant 0 : index
    %c0_81 = arith.constant 0 : index
    %151 = vector.load %arg6[%c0_80, %c0_81] : memref<2x16xf32, #tpu.memory_space<vmem>>, vector<2x16xf32>
    %152 = arith.truncf %151 : vector<2x16xf32> to vector<2x16xbf16>
    %cst_82 = arith.constant dense<0.000000e+00> : vector<2x64xf32>
    %153 = tpu.matmul %152, %18, %cst_82 {dimension_numbers = #tpu.dot_dimension_numbers<[1], [0], [0], [1], [0, 0, 1, 1], [], []>} : vector<2x16xbf16>, vector<16x64xbf16>, vector<2x64xf32> -> vector<2x64xf32>
    %154 = arith.addf %150, %153 : vector<2x64xf32>
    %155 = vector.extract_strided_slice %154 {offsets = [0, 0], sizes = [2, 16], strides = [1, 1]} : vector<2x64xf32> to vector<2x16xf32>
    %156 = arith.negf %155 : vector<2x16xf32>
    %157 = math.exp %156 : vector<2x16xf32>
    %cst_83 = arith.constant 1.000000e+00 : f32
    %158 = vector.broadcast %cst_83 : f32 to vector<2x16xf32>
    %159 = arith.addf %158, %157 : vector<2x16xf32>
    %160 = arith.divf %158, %159 : vector<2x16xf32>
    %161 = vector.extract_strided_slice %154 {offsets = [0, 16], sizes = [2, 16], strides = [1, 1]} : vector<2x64xf32> to vector<2x16xf32>
    %162 = arith.negf %161 : vector<2x16xf32>
    %163 = math.exp %162 : vector<2x16xf32>
    %cst_84 = arith.constant 1.000000e+00 : f32
    %164 = vector.broadcast %cst_84 : f32 to vector<2x16xf32>
    %165 = arith.addf %164, %163 : vector<2x16xf32>
    %166 = arith.divf %164, %165 : vector<2x16xf32>
    %167 = vector.extract_strided_slice %154 {offsets = [0, 32], sizes = [2, 16], strides = [1, 1]} : vector<2x64xf32> to vector<2x16xf32>
    %168 = math.tanh %167 : vector<2x16xf32>
    %169 = vector.extract_strided_slice %154 {offsets = [0, 48], sizes = [2, 16], strides = [1, 1]} : vector<2x64xf32> to vector<2x16xf32>
    %170 = arith.negf %169 : vector<2x16xf32>
    %171 = math.exp %170 : vector<2x16xf32>
    %cst_85 = arith.constant 1.000000e+00 : f32
    %172 = vector.broadcast %cst_85 : f32 to vector<2x16xf32>
    %173 = arith.addf %172, %171 : vector<2x16xf32>
    %174 = arith.divf %172, %173 : vector<2x16xf32>
    %c0_86 = arith.constant 0 : index
    %c0_87 = arith.constant 0 : index
    %175 = vector.load %arg7[%c0_86, %c0_87] : memref<2x16xf32, #tpu.memory_space<vmem>>, vector<2x16xf32>
    %176 = arith.mulf %166, %175 : vector<2x16xf32>
    %177 = arith.mulf %160, %168 : vector<2x16xf32>
    %178 = arith.addf %176, %177 : vector<2x16xf32>
    %179 = math.tanh %178 : vector<2x16xf32>
    %180 = arith.mulf %174, %179 : vector<2x16xf32>
    %c0_88 = arith.constant 0 : index
    %c0_89 = arith.constant 0 : index
    %181 = vector.load %arg7[%c0_88, %c0_89] : memref<2x16xf32, #tpu.memory_space<vmem>>, vector<2x16xf32>
    tpu.vector_store %arg7[%c0_88, %c0_89], %178 {strides = array<i32>} : memref<2x16xf32, #tpu.memory_space<vmem>>, vector<2x16xf32>,
    %c0_90 = arith.constant 0 : index
    %c0_91 = arith.constant 0 : index
    %182 = vector.load %arg6[%c0_90, %c0_91] : memref<2x16xf32, #tpu.memory_space<vmem>>, vector<2x16xf32>
    tpu.vector_store %arg6[%c0_90, %c0_91], %180 {strides = array<i32>} : memref<2x16xf32, #tpu.memory_space<vmem>>, vector<2x16xf32>,
    %c0_92 = arith.constant 0 : index
    %183 = arith.index_cast %147 : i32 to index
    %c0_93 = arith.constant 0 : index
    %c0_94 = arith.constant 0 : index
    %184 = vector.load %arg5[%c0_92, %183, %c0_93, %c0_94] : memref<1x4x2x16xf32, #tpu.memory_space<vmem>>, vector<1x1x2x16xf32>
    %185 = vector.shape_cast %184 : vector<1x1x2x16xf32> to vector<2x16xf32>
    %186 = vector.shape_cast %180 : vector<2x16xf32> to vector<1x1x2x16xf32>
    tpu.vector_store %arg5[%c0_92, %183, %c0_93, %c0_94], %186 {strides = array<i32>} : memref<1x4x2x16xf32, #tpu.memory_space<vmem>>, vector<1x1x2x16xf32>,
    %c4_i32 = arith.constant 4 : i32
    return
  }
  func.func @transform_0(%arg0: i32) -> (i32, i32) {
    %c0_i32 = arith.constant 0 : i32
    %c0_i32_0 = arith.constant 0 : i32
    %c0_i32_1 = arith.constant 0 : i32
    return %c0_i32, %c0_i32_0 : i32, i32
  }
  func.func @transform_1(%arg0: i32) -> (i32, i32, i32) {
    %c0_i32 = arith.constant 0 : i32
    %c0_i32_0 = arith.constant 0 : i32
    %c0_i32_1 = arith.constant 0 : i32
    return %arg0, %c0_i32, %c0_i32_0 : i32, i32, i32
  }
  func.func @transform_2(%arg0: i32) -> (i32, i32, i32) {
    %c0_i32 = arith.constant 0 : i32
    %c0_i32_0 = arith.constant 0 : i32
    %c0_i32_1 = arith.constant 0 : i32
    return %arg0, %c0_i32, %c0_i32_0 : i32, i32, i32
  }
  func.func @transform_3(%arg0: i32) -> (i32, i32, i32) {
    %c0_i32 = arith.constant 0 : i32
    %c0_i32_0 = arith.constant 0 : i32
    %c0_i32_1 = arith.constant 0 : i32
    return %arg0, %c0_i32, %c0_i32_0 : i32, i32, i32
  }
  func.func @transform_4(%arg0: i32) -> (i32, i32, i32, i32) {
    %c0_i32 = arith.constant 0 : i32
    %c0_i32_0 = arith.constant 0 : i32
    %c0_i32_1 = arith.constant 0 : i32
    %c0_i32_2 = arith.constant 0 : i32
    return %arg0, %c0_i32, %c0_i32_0, %c0_i32_1 : i32, i32, i32, i32
  }
}

module attributes {stable_mosaic.version = 11 : i64} {
  func.func @kernel(%arg0: i32, %arg1: memref<8x32xf32, #tpu.memory_space<vmem>>, %arg2: memref<32x128xbf16, #tpu.memory_space<vmem>>, %arg3: memref<1x128xf32, #tpu.memory_space<vmem>>, %arg4: memref<8x128xf32, #tpu.memory_space<vmem>>) attributes {dimension_semantics = [#tpu.dimension_semantics<parallel>], iteration_bounds = array<i64: 1>, scalar_prefetch = 0 : i64, scratch_operands = 0 : i64, tpu.core_type = #tpu.core_type<tc>, window_params = [{transform_indices = @transform_0, window_bounds = array<i64: 8, 32>}, {pipeline_mode = #tpu.pipeline_mode<synchronous>, transform_indices = @transform_1, window_bounds = array<i64: 32, 128>}, {pipeline_mode = #tpu.pipeline_mode<synchronous>, transform_indices = @transform_2, window_bounds = array<i64: 1, 128>}, {transform_indices = @transform_3, window_bounds = array<i64: 8, 128>}]} {
    %c0 = arith.constant 0 : index
    %c0_0 = arith.constant 0 : index
    %0 = vector.load %arg1[%c0, %c0_0] : memref<8x32xf32, #tpu.memory_space<vmem>>, vector<8x32xf32>
    %1 = arith.truncf %0 : vector<8x32xf32> to vector<8x32xbf16>
    %c0_1 = arith.constant 0 : index
    %c0_2 = arith.constant 0 : index
    %2 = vector.load %arg2[%c0_1, %c0_2] : memref<32x128xbf16, #tpu.memory_space<vmem>>, vector<32x128xbf16>
    %cst = arith.constant dense<0.000000e+00> : vector<8x128xf32>
    %3 = tpu.matmul %1, %2, %cst {dimension_numbers = #tpu.dot_dimension_numbers<[1], [0], [0], [1], [0, 0, 1, 1], [], []>} : vector<8x32xbf16>, vector<32x128xbf16>, vector<8x128xf32> -> vector<8x128xf32>
    %c0_3 = arith.constant 0 : index
    %c0_4 = arith.constant 0 : index
    %4 = vector.load %arg3[%c0_3, %c0_4] : memref<1x128xf32, #tpu.memory_space<vmem>>, vector<1x128xf32>
    %5 = vector.broadcast %4 : vector<1x128xf32> to vector<8x128xf32>
    %6 = arith.addf %3, %5 : vector<8x128xf32>
    %7 = tpu.iota {dimensions = array<i32: 1>} : vector<8x128xi32>
    %c10_i32 = arith.constant 10 : i32
    %8 = vector.broadcast %c10_i32 : i32 to vector<8x128xi32>
    %9 = arith.cmpi slt, %7, %8 : vector<8x128xi32>
    %cst_5 = arith.constant -1.000000e+30 : f32
    %10 = vector.broadcast %cst_5 : f32 to vector<8x128xf32>
    %11 = arith.select %9, %6, %10 : vector<8x128xi1>, vector<8x128xf32>
    %cst_6 = arith.constant dense<0xFF800000> : vector<8xf32>
    %12 = vector.multi_reduction <maximumf>, %11, %cst_6 [1] : vector<8x128xf32> to vector<8xf32>
    %13 = vector.shape_cast %12 : vector<8xf32> to vector<8x1xf32>
    %14 = vector.broadcast %13 : vector<8x1xf32> to vector<8x128xf32>
    %15 = arith.subf %11, %14 : vector<8x128xf32>
    %16 = math.exp %15 : vector<8x128xf32>
    %cst_7 = arith.constant dense<0.000000e+00> : vector<8xf32>
    %17 = vector.multi_reduction <add>, %16, %cst_7 [1] : vector<8x128xf32> to vector<8xf32>
    %18 = vector.shape_cast %17 : vector<8xf32> to vector<8x1xf32>
    %19 = math.log %18 : vector<8x1xf32>
    %20 = vector.broadcast %19 : vector<8x1xf32> to vector<8x128xf32>
    %21 = arith.subf %15, %20 : vector<8x128xf32>
    %c0_8 = arith.constant 0 : index
    %c0_9 = arith.constant 0 : index
    %22 = vector.load %arg4[%c0_8, %c0_9] : memref<8x128xf32, #tpu.memory_space<vmem>>, vector<8x128xf32>
    tpu.vector_store %arg4[%c0_8, %c0_9], %21 {strides = array<i32>} : memref<8x128xf32, #tpu.memory_space<vmem>>, vector<8x128xf32>,
    return
  }
  func.func @transform_0(%arg0: i32) -> (i32, i32) {
    %c0_i32 = arith.constant 0 : i32
    %c0_i32_0 = arith.constant 0 : i32
    return %arg0, %c0_i32 : i32, i32
  }
  func.func @transform_1(%arg0: i32) -> (i32, i32) {
    %c0_i32 = arith.constant 0 : i32
    %c0_i32_0 = arith.constant 0 : i32
    %c0_i32_1 = arith.constant 0 : i32
    return %c0_i32, %c0_i32_0 : i32, i32
  }
  func.func @transform_2(%arg0: i32) -> (i32, i32) {
    %c0_i32 = arith.constant 0 : i32
    %c0_i32_0 = arith.constant 0 : i32
    %c0_i32_1 = arith.constant 0 : i32
    return %c0_i32, %c0_i32_0 : i32, i32
  }
  func.func @transform_3(%arg0: i32) -> (i32, i32) {
    %c0_i32 = arith.constant 0 : i32
    %c0_i32_0 = arith.constant 0 : i32
    return %arg0, %c0_i32 : i32, i32
  }
}

</mosaic_0001>

<llo_original>
// kernel: _lambda_.7
$region0: #{_lambda_.7}
  #allocation0 [shape = 'u32[]', space=smem, size = 0x4, offset = 0x4, fixed_abs, tag = 'smem constant byte address 0x4 - core index']
  #allocation1 [shape = 'u32[144,128]{1,0:T(1,128)}', space=vmem, size = 0x12000, scoped, tag = 'internal scratch']
  %s0 = inlined_call_operand.vmem [shape: f32[512,245], index: 0, kind: input, shape index: {}]
  %s1 = inlined_call_operand.vmem [shape: bf16[245,128], index: 1, kind: input, shape index: {}]
  %s2 = inlined_call_operand.vmem [shape: f32[1,128], index: 2, kind: input, shape index: {}]
  %s3 = inlined_call_operand.vmem [shape: f32[512,128], index: 3, kind: output, shape index: {}]
  %s4 = sld [smem:[#allocation0]]
  $region45: #{_lambda_.7} parent=0
    _
  %s6 = ssub.s32 1, %s4
  %s7 = scalar_select 0, %s6, %s4
  loop: start=0, step=1, limit=4
  $region2: #{_lambda_.7} parent=0 // loop_pre_header
    _
  $region3: #{_lambda_.7} parent=0 // loop_header
    %s9 = sphi 0, %s13
    %p10 = scmp.ge.s32.totalorder %s9, 4
    %s19 = sphi 0, %s21
    %s22 = sphi 0, %s19
    %s23 = sphi 0, %s22
    %s39 = sphi 0, %s23
    %s43 = sphi 0, %s43
    %s45 = sphi 0, %s43
    %s46 = sphi 0, %s45
    %s60 = sphi 0, %s46
    %s64 = sphi 0, %s64
    %s66 = sphi 0, %s64
    %s67 = sphi 0, %s66
    %s81 = sphi 0, %s67
    %s87 = sphi 0, %s89
    %s90 = sphi 0, %s87
    %s91 = sphi 0, %s90
    %s107 = sphi 0, %s91
  $region4: #{_lambda_.7} parent=0 // loop_header_branch
    %12 = sbr.rel (%p10) target = $region8
  $region5: #{_lambda_.7} parent=0 // loop_body
    %s14 = ssub.s32 %s9, 1
    %s15 = ssub.s32 %s9, 2
    %s16 = sadd.s32 %s9, 1
    %s17 = ssub.s32 %s9, %s16
    %p18 = scmp.eq.s32.totalorder %s17, 0
    %s20 = sadd.s32 %s19, 1
    %s21 = scalar_select %p18, %s19, %s20
    %p24 = pneg %p18
    %p25 = scmp.eq.s32.totalorder %s9, 1
    %p26 = por %p24, %p25
    %p27 = scmp.ne.s32.totalorder %s19, %s22
    %p28 = scmp.eq.s32.totalorder %s9, 0
    %p29 = por %p27, %p28
    %p30 = scmp.ne.s32.totalorder %s19, %s22
    %p31 = scmp.eq.s32.totalorder %s14, 1
    %p32 = por %p30, %p31
    %p33 = scmp.ne.s32.totalorder %s22, %s23
    %p34 = scmp.eq.s32.totalorder %s14, 0
    %p35 = por %p33, %p34
    %p36 = scmp.ne.s32.totalorder %s22, %s23
    %p37 = scmp.eq.s32.totalorder %s15, 1
    %p38 = por %p36, %p37
    %p40 = scmp.ne.s32.totalorder %s23, %s39
    %p41 = scmp.eq.s32.totalorder %s15, 0
    %p42 = por %p40, %p41
    %s44 = sadd.s32 %s43, 1
    %p47 = scmp.eq.s32.totalorder %s9, 1
    %p48 = scmp.ne.s32.totalorder %s43, %s45
    %p49 = scmp.eq.s32.totalorder %s9, 0
    %p50 = por %p48, %p49
    %p51 = scmp.ne.s32.totalorder %s43, %s45
    %p52 = scmp.eq.s32.totalorder %s14, 1
    %p53 = por %p51, %p52
    %p54 = scmp.ne.s32.totalorder %s45, %s46
    %p55 = scmp.eq.s32.totalorder %s14, 0
    %p56 = por %p54, %p55
    %p57 = scmp.ne.s32.totalorder %s45, %s46
    %p58 = scmp.eq.s32.totalorder %s15, 1
    %p59 = por %p57, %p58
    %p61 = scmp.ne.s32.totalorder %s46, %s60
    %p62 = scmp.eq.s32.totalorder %s15, 0
    %p63 = por %p61, %p62
    %s65 = sadd.s32 %s64, 1
    %p68 = scmp.eq.s32.totalorder %s9, 1
    %p69 = scmp.ne.s32.totalorder %s64, %s66
    %p70 = scmp.eq.s32.totalorder %s9, 0
    %p71 = por %p69, %p70
    %p72 = scmp.ne.s32.totalorder %s64, %s66
    %p73 = scmp.eq.s32.totalorder %s14, 1
    %p74 = por %p72, %p73
    %p75 = scmp.ne.s32.totalorder %s66, %s67
    %p76 = scmp.eq.s32.totalorder %s14, 0
    %p77 = por %p75, %p76
    %p78 = scmp.ne.s32.totalorder %s66, %s67
    %p79 = scmp.eq.s32.totalorder %s15, 1
    %p80 = por %p78, %p79
    %p82 = scmp.ne.s32.totalorder %s67, %s81
    %p83 = scmp.eq.s32.totalorder %s15, 0
    %p84 = por %p82, %p83
    %s85 = ssub.s32 %s9, %s16
    %p86 = scmp.eq.s32.totalorder %s85, 0
    %s88 = sadd.s32 %s87, 1
    %s89 = scalar_select %p86, %s87, %s88
    %p92 = pneg %p86
    %p93 = scmp.eq.s32.totalorder %s9, 1
    %p94 = por %p92, %p93
    %p95 = scmp.ne.s32.totalorder %s87, %s90
    %p96 = scmp.eq.s32.totalorder %s9, 0
    %p97 = por %p95, %p96
    %p98 = scmp.ne.s32.totalorder %s87, %s90
    %p99 = scmp.eq.s32.totalorder %s14, 1
    %p100 = por %p98, %p99
    %p101 = scmp.ne.s32.totalorder %s90, %s91
    %p102 = scmp.eq.s32.totalorder %s14, 0
    %p103 = por %p101, %p102
    %p104 = scmp.ne.s32.totalorder %s90, %s91
    %p105 = scmp.eq.s32.totalorder %s15, 1
    %p106 = por %p104, %p105
    %p108 = scmp.ne.s32.totalorder %s91, %s107
    %p109 = scmp.eq.s32.totalorder %s15, 0
    %p110 = por %p108, %p109
    %p111 = scmp.le.s32.totalorder 1, %s9
    %p112 = scmp.lt.s32.totalorder %s9, 3
    %p113 = pnand %p111, %p112
    %p114 = pneg %p113
    // Predicated region
    $region9: #{_lambda_.7} parent=5 // pred_check
      _
    $region10: #{_lambda_.7} parent=5 // pred_check_branch
      %116 = sbr.rel (%p113) target = $region12
    $region11: #{_lambda_.7} parent=5 // pred_region
      %s117 = ssub.s32 %s9, 1
      // Predicated region
      $region13: #{_lambda_.7} parent=11 // pred_check
        %p118 = pneg %p56
      $region14: #{_lambda_.7} parent=11 // pred_check_branch
        %120 = sbr.rel (%p118) target = $region16
      $region15: #{_lambda_.7} parent=11 // pred_region
        _
      $region16: #{_lambda_.7} parent=11 // pred_fallthru
        _
      // Predicated region
      $region17: #{_lambda_.7} parent=11 // pred_check
        %p121 = pneg %p77
      $region18: #{_lambda_.7} parent=11 // pred_check_branch
        %123 = sbr.rel (%p121) target = $region20
      $region19: #{_lambda_.7} parent=11 // pred_region
        _
      $region20: #{_lambda_.7} parent=11 // pred_fallthru
        _
    $region12: #{_lambda_.7} parent=5 // pred_fallthru
      _
    %p124 = scmp.lt.s32.totalorder %s9, 2
    // Predicated region
    $region21: #{_lambda_.7} parent=5 // pred_check
      %p125 = pneg %p124
    $region22: #{_lambda_.7} parent=5 // pred_check_branch
      %127 = sbr.rel (%p125) target = $region24
    $region23: #{_lambda_.7} parent=5 // pred_region
      // Predicated region
      $region25: #{_lambda_.7} parent=23 // pred_check
        %p128 = pneg %p29
      $region26: #{_lambda_.7} parent=23 // pred_check_branch
        %130 = sbr.rel (%p128) target = $region28
      $region27: #{_lambda_.7} parent=23 // pred_region
        %s131 = smul.u32 32, %s9
        %p132 = scmp.lt.s32.totalorder %s131, 63
        %s133 = scalar_select %p132, %s131, 63
        %s134 = smul.addr %s133, 2
        %s135 = smul.addr %s134, 8
        %s136 = scalar_lea.vmem %s0, %s135
        %s137 = smul.u32 32, %s9
      $region28: #{_lambda_.7} parent=23 // pred_fallthru
        _
    $region24: #{_lambda_.7} parent=5 // pred_fallthru
      _
    %p138 = scmp.le.s32.totalorder 1, %s9
    %p139 = scmp.lt.s32.totalorder %s9, 3
    %p140 = pnand %p138, %p139
    %p141 = pneg %p140
    // Predicated region
    $region29: #{_lambda_.7} parent=5 // pred_check
      _
    $region30: #{_lambda_.7} parent=5 // pred_check_branch
      %143 = sbr.rel (%p140) target = $region32
    $region31: #{_lambda_.7} parent=5 // pred_region
      %s144 = ssub.s32 %s9, 1
      %s145 = smul.u32 32, %s14
      %p146 = scmp.lt.s32.totalorder %s145, 63
      %s147 = scalar_select %p146, %s145, 63
      %s148 = smul.addr %s147, 2
      %s149 = smul.addr %s148, 8
      %s150 = scalar_lea.vmem %s0, %s149
      %p151 = pneg %p35
      %p152 = pneg %p32
      %p153 = pneg %p56
      %p154 = pneg %p53
      %p155 = pneg %p77
      %p156 = pneg %p74
      %p157 = pneg %p103
      %p158 = pneg %p100
      %s159 = smul.u32 32, %s14
      %p160 = scmp.lt.s32.totalorder %s159, 63
      %s161 = scalar_select %p160, %s159, 63
      %s162 = smul.addr %s161, 8
      %s163 = scalar_lea.vmem %s3, %s162
      %s164 = smul.u32 32, %s14
      %p165 = scmp.lt.s32.totalorder %s164, 63
      %s166 = scalar_select %p165, %s164, 63
      %s167 = smul.addr %s166, 2
      %s168 = smul.addr %s167, 8
      %s169 = scalar_lea.vmem %s0, %s168
      %s170 = smul.u32 32, %s14
      %s171 = smul.u32 32, %s14
      %p172 = scmp.lt.s32.totalorder %s171, 63
      %s173 = scalar_select %p172, %s171, 63
      %s174 = smul.addr %s173, 8
      %s175 = scalar_lea.vmem %s3, %s174
      %s176 = smul.u32 32, %s14
      %v178 = vld [vmem:[%s169] sm:$0xff]
      %v179 = vld [vmem:[%s169 + $0x8] sm:$0xff]
      %v180 = vld [vmem:[%s169 + $0x10] sm:$0xff]
      %v181 = vld [vmem:[%s169 + $0x18] sm:$0xff]
      %v182 = vld [vmem:[%s169 + $0x20] sm:$0xff]
      %v183 = vld [vmem:[%s169 + $0x28] sm:$0xff]
      %v184 = vld [vmem:[%s169 + $0x30] sm:$0xff]
      %v185 = vld [vmem:[%s169 + $0x38] sm:$0xff]
      %v186 = vld [vmem:[%s169 + $0x40] sm:$0xff]
      %v187 = vld [vmem:[%s169 + $0x48] sm:$0xff]
      %v188 = vld [vmem:[%s169 + $0x50] sm:$0xff]
      %v189 = vld [vmem:[%s169 + $0x58] sm:$0xff]
      %v190 = vld [vmem:[%s169 + $0x60] sm:$0xff]
      %v191 = vld [vmem:[%s169 + $0x68] sm:$0xff]
      %v192 = vld [vmem:[%s169 + $0x70] sm:$0xff]
      %v193 = vld [vmem:[%s169 + $0x78] sm:$0xff]
      %v194 = vld [vmem:[%s169 + $0x80] sm:$0xff]
      %v195 = vld [vmem:[%s169 + $0x88] sm:$0xff]
      %v196 = vld [vmem:[%s169 + $0x90] sm:$0xff]
      %v197 = vld [vmem:[%s169 + $0x98] sm:$0xff]
      %v198 = vld [vmem:[%s169 + $0xa0] sm:$0xff]
      %v199 = vld [vmem:[%s169 + $0xa8] sm:$0xff]
      %v200 = vld [vmem:[%s169 + $0xb0] sm:$0xff]
      %v201 = vld [vmem:[%s169 + $0xb8] sm:$0xff]
      %v202 = vld [vmem:[%s169 + $0xc0] sm:$0xff]
      %v203 = vld [vmem:[%s169 + $0xc8] sm:$0xff]
      %v204 = vld [vmem:[%s169 + $0xd0] sm:$0xff]
      %v205 = vld [vmem:[%s169 + $0xd8] sm:$0xff]
      %v206 = vld [vmem:[%s169 + $0xe0] sm:$0xff]
      %v207 = vld [vmem:[%s169 + $0xe8] sm:$0xff]
      %v208 = vld [vmem:[%s169 + $0xf0] sm:$0xff]
      %v209 = vld [vmem:[%s169 + $0xf8] sm:$0xff]
      %v210 = vld [vmem:[%s169 + $0x100] sm:$0xff]
      %v211 = vld [vmem:[%s169 + $0x108] sm:$0xff]
      %v212 = vld [vmem:[%s169 + $0x110] sm:$0xff]
      %v213 = vld [vmem:[%s169 + $0x118] sm:$0xff]
      %v214 = vld [vmem:[%s169 + $0x120] sm:$0xff]
      %v215 = vld [vmem:[%s169 + $0x128] sm:$0xff]
      %v216 = vld [vmem:[%s169 + $0x130] sm:$0xff]
      %v217 = vld [vmem:[%s169 + $0x138] sm:$0xff]
      %v218 = vld [vmem:[%s169 + $0x140] sm:$0xff]
      %v219 = vld [vmem:[%s169 + $0x148] sm:$0xff]
      %v220 = vld [vmem:[%s169 + $0x150] sm:$0xff]
      %v221 = vld [vmem:[%s169 + $0x158] sm:$0xff]
      %v222 = vld [vmem:[%s169 + $0x160] sm:$0xff]
      %v223 = vld [vmem:[%s169 + $0x168] sm:$0xff]
      %v224 = vld [vmem:[%s169 + $0x170] sm:$0xff]
      %v225 = vld [vmem:[%s169 + $0x178] sm:$0xff]
      %v226 = vld [vmem:[%s169 + $0x180] sm:$0xff]
      %v227 = vld [vmem:[%s169 + $0x188] sm:$0xff]
      %v228 = vld [vmem:[%s169 + $0x190] sm:$0xff]
      %v229 = vld [vmem:[%s169 + $0x198] sm:$0xff]
      %v230 = vld [vmem:[%s169 + $0x1a0] sm:$0xff]
      %v231 = vld [vmem:[%s169 + $0x1a8] sm:$0xff]
      %v232 = vld [vmem:[%s169 + $0x1b0] sm:$0xff]
      %v233 = vld [vmem:[%s169 + $0x1b8] sm:$0xff]
      %v234 = vld [vmem:[%s169 + $0x1c0] sm:$0xff]
      %v235 = vld [vmem:[%s169 + $0x1c8] sm:$0xff]
      %v236 = vld [vmem:[%s169 + $0x1d0] sm:$0xff]
      %v237 = vld [vmem:[%s169 + $0x1d8] sm:$0xff]
      %v238 = vld [vmem:[%s169 + $0x1e0] sm:$0xff]
      %v239 = vld [vmem:[%s169 + $0x1e8] sm:$0xff]
      %v240 = vld [vmem:[%s169 + $0x1f0] sm:$0xff]
      %v241 = vld [vmem:[%s169 + $0x1f8] sm:$0xff]
      %v242 = vpack.c.bf16 %v180, %v178
      %v243 = vpack.c.bf16 %v181, %v179
      %v244 = vpack.c.bf16 %v184, %v182
      %v245 = vpack.c.bf16 %v185, %v183
      %v246 = vpack.c.bf16 %v188, %v186
      %v247 = vpack.c.bf16 %v189, %v187
      %v248 = vpack.c.bf16 %v192, %v190
      %v249 = vpack.c.bf16 %v193, %v191
      %v250 = vpack.c.bf16 %v196, %v194
      %v251 = vpack.c.bf16 %v197, %v195
      %v252 = vpack.c.bf16 %v200, %v198
      %v253 = vpack.c.bf16 %v201, %v199
      %v254 = vpack.c.bf16 %v204, %v202
      %v255 = vpack.c.bf16 %v205, %v203
      %v256 = vpack.c.bf16 %v208, %v206
      %v257 = vpack.c.bf16 %v209, %v207
      %v258 = vpack.c.bf16 %v212, %v210
      %v259 = vpack.c.bf16 %v213, %v211
      %v260 = vpack.c.bf16 %v216, %v214
      %v261 = vpack.c.bf16 %v217, %v215
      %v262 = vpack.c.bf16 %v220, %v218
      %v263 = vpack.c.bf16 %v221, %v219
      %v264 = vpack.c.bf16 %v224, %v222
      %v265 = vpack.c.bf16 %v225, %v223
      %v266 = vpack.c.bf16 %v228, %v226
      %v267 = vpack.c.bf16 %v229, %v227
      %v268 = vpack.c.bf16 %v232, %v230
      %v269 = vpack.c.bf16 %v233, %v231
      %v270 = vpack.c.bf16 %v236, %v234
      %v271 = vpack.c.bf16 %v237, %v235
      %v272 = vpack.c.bf16 %v240, %v238
      %v273 = vpack.c.bf16 %v241, %v239
      %v274 = vld [vmem:[%s1] sm:$0xf]
      %v275 = vld [vmem:[%s1 + $0x4] sm:$0xf]
      %v276 = vld [vmem:[%s1 + $0x8] sm:$0xf]
      %v277 = vld [vmem:[%s1 + $0xc] sm:$0xf]
      %v278 = vld [vmem:[%s1 + $0x10] sm:$0xf]
      %v279 = vld [vmem:[%s1 + $0x14] sm:$0xf]
      %v280 = vld [vmem:[%s1 + $0x18] sm:$0xf]
      %v281 = vld [vmem:[%s1 + $0x1c] sm:$0xf]
      %v282 = vld [vmem:[%s1 + $0x20] sm:$0xf]
      %v283 = vld [vmem:[%s1 + $0x24] sm:$0xf]
      %v284 = vld [vmem:[%s1 + $0x28] sm:$0xf]
      %v285 = vld [vmem:[%s1 + $0x2c] sm:$0xf]
      %v286 = vld [vmem:[%s1 + $0x30] sm:$0xf]
      %v287 = vld [vmem:[%s1 + $0x34] sm:$0xf]
      %v288 = vld [vmem:[%s1 + $0x38] sm:$0xf]
      %v289 = vld [vmem:[%s1 + $0x3c] sm:$0xf]
      %v290 = vld [vmem:[%s1 + $0x40] sm:$0xf]
      %v291 = vld [vmem:[%s1 + $0x44] sm:$0xf]
      %v292 = vld [vmem:[%s1 + $0x48] sm:$0xf]
      %v293 = vld [vmem:[%s1 + $0x4c] sm:$0xf]
      %v294 = vld [vmem:[%s1 + $0x50] sm:$0xf]
      %v295 = vld [vmem:[%s1 + $0x54] sm:$0xf]
      %v296 = vld [vmem:[%s1 + $0x58] sm:$0xf]
      %v297 = vld [vmem:[%s1 + $0x5c] sm:$0xf]
      %v298 = vld [vmem:[%s1 + $0x60] sm:$0xf]
      %v299 = vld [vmem:[%s1 + $0x64] sm:$0xf]
      %v300 = vld [vmem:[%s1 + $0x68] sm:$0xf]
      %v301 = vld [vmem:[%s1 + $0x6c] sm:$0xf]
      %v302 = vld [vmem:[%s1 + $0x70] sm:$0xf]
      %v303 = vld [vmem:[%s1 + $0x74] sm:$0xf]
      %v304 = vld [vmem:[%s1 + $0x78] sm:$0x7]
      %v305 = vld [vmem:[%s2] sm:$0x1]
      %v307 = vlaneseq
      %v308 = vshrl.u32 %v307, 7
      %v309 = vsub.s32 0, %v308
      %v310 = vrot.slane %v305, %v309
      %v343 = vunpack.c.l.b16 %v274
      %v344 = vunpack.c.l.b16 %v275
      %v345 = vunpack.c.l.b16 %v276
      %v346 = vunpack.c.l.b16 %v277
      %v347 = vunpack.c.l.b16 %v278
      %v348 = vunpack.c.l.b16 %v279
      %v349 = vunpack.c.l.b16 %v280
      %v350 = vunpack.c.l.b16 %v281
      %v351 = vunpack.c.l.b16 %v282
      %v352 = vunpack.c.l.b16 %v283
      %v353 = vunpack.c.l.b16 %v284
      %v354 = vunpack.c.l.b16 %v285
      %v355 = vunpack.c.l.b16 %v286
      %v356 = vunpack.c.l.b16 %v287
      %v357 = vunpack.c.l.b16 %v288
      %v358 = vunpack.c.l.b16 %v289
      %v359 = vunpack.c.l.b16 %v290
      %v360 = vunpack.c.l.b16 %v291
      %v361 = vunpack.c.l.b16 %v292
      %v362 = vunpack.c.l.b16 %v293
      %v363 = vunpack.c.l.b16 %v294
      %v364 = vunpack.c.l.b16 %v295
      %v365 = vunpack.c.l.b16 %v296
      %v366 = vunpack.c.l.b16 %v297
      %v367 = vunpack.c.l.b16 %v298
      %v368 = vunpack.c.l.b16 %v299
      %v369 = vunpack.c.l.b16 %v300
      %v370 = vunpack.c.l.b16 %v301
      %v371 = vunpack.c.l.b16 %v302
      %v372 = vunpack.c.l.b16 %v303
      %v373 = vunpack.c.l.b16 %v304
      %v374 = vpack.c.b16 %v344, %v343
      %v375 = vpack.c.b16 %v346, %v345
      %v376 = vpack.c.b16 %v348, %v347
      %v377 = vpack.c.b16 %v350, %v349
      %v378 = vpack.c.b16 %v352, %v351
      %v379 = vpack.c.b16 %v354, %v353
      %v380 = vpack.c.b16 %v356, %v355
      %v381 = vpack.c.b16 %v358, %v357
      %v382 = vpack.c.b16 %v360, %v359
      %v383 = vpack.c.b16 %v362, %v361
      %v384 = vpack.c.b16 %v364, %v363
      %v385 = vpack.c.b16 %v366, %v365
      %v386 = vpack.c.b16 %v368, %v367
      %v387 = vpack.c.b16 %v370, %v369
      %v388 = vpack.c.b16 %v372, %v371
      %v389 = vpack.c.b16 %v373, %v373
      %vm405 = vcmask 957440
      %v407 = vsel %vm405, %v243, 0
      %v410 = vsel %vm405, %v245, 0
      %v413 = vsel %vm405, %v247, 0
      %v416 = vsel %vm405, %v249, 0
      %v419 = vsel %vm405, %v251, 0
      %v422 = vsel %vm405, %v253, 0
      %v425 = vsel %vm405, %v255, 0
      %v428 = vsel %vm405, %v257, 0
      %v431 = vsel %vm405, %v259, 0
      %v434 = vsel %vm405, %v261, 0
      %v437 = vsel %vm405, %v263, 0
      %v440 = vsel %vm405, %v265, 0
      %v443 = vsel %vm405, %v267, 0
      %v446 = vsel %vm405, %v269, 0
      %v449 = vsel %vm405, %v271, 0
      %v452 = vsel %vm405, %v273, 0
      %vm454 = vcmask 1041408
      %vm455 = vcmask 1042432
      %v456 = vsel %vm454, 4294967295, 65535
      %v457 = vsel %vm455, %v456, 0
      %v459 = vand.u32 %v389, %v457
      %461 = vmatprep.subr.bf16.mxu0 0
      %462 = vmatpush1.bf16.msra.mxu0 %v374
      %463 = vmatprep.subr.bf16.mxu0 0
      %464 = vmatpush1.bf16.msra.mxu0 %v375
      %465 = vmatprep.subr.bf16.mxu0 0
      %466 = vmatpush1.bf16.msra.mxu0 %v376
      %467 = vmatprep.subr.bf16.mxu0 0
      %468 = vmatpush1.bf16.msra.mxu0 %v377
      %469 = vmatprep.subr.bf16.mxu0 0
      %470 = vmatpush1.bf16.msra.mxu0 %v378
      %471 = vmatprep.subr.bf16.mxu0 0
      %472 = vmatpush1.bf16.msra.mxu0 %v379
      %473 = vmatprep.subr.bf16.mxu0 0
      %474 = vmatpush1.bf16.msra.mxu0 %v380
      %475 = vmatprep.subr.bf16.mxu0 0
      %476 = vmatpush1.bf16.msra.mxu0 %v381
      %477 = vmatprep.subr.bf16.mxu0 0
      %478 = vmatpush1.bf16.msra.mxu0 %v382
      %479 = vmatprep.subr.bf16.mxu0 0
      %480 = vmatpush1.bf16.msra.mxu0 %v383
      %481 = vmatprep.subr.bf16.mxu0 0
      %482 = vmatpush1.bf16.msra.mxu0 %v384
      %483 = vmatprep.subr.bf16.mxu0 0
      %484 = vmatpush1.bf16.msra.mxu0 %v385
      %485 = vmatprep.subr.bf16.mxu0 0
      %486 = vmatpush1.bf16.msra.mxu0 %v386
      %487 = vmatprep.subr.bf16.mxu0 0
      %488 = vmatpush1.bf16.msra.mxu0 %v387
      %489 = vmatprep.subr.bf16.mxu0 0
      %490 = vmatpush1.bf16.msra.mxu0 %v388
      %491 = vmatprep.subr.bf16.mxu0 0
      %492 = vmatpush1.bf16.msra.mxu0 %v459
      %493 = vmatprep.mubr.bf16.mxu0 %v407
      %494 = vmatmul.mubr.bf16.gmra.mrb[0].mxu0 %v242
      %v495 = vpop.f32.mrb[0].mxu0
      %v496 = vadd.f32 %v310, %v495
      %v497 = vpop.f32.mrb[0].mxu0
      %v498 = vpop.f32.mrb[0].mxu0
      %v499 = vadd.f32 %v310, %v498
      %v500 = vpop.f32.mrb[0].mxu0
      %501 = vmatprep.mubr.bf16.mxu0 %v410
      %502 = vmatmul.mubr.bf16.gmra.mrb[0].mxu0 %v244
      %v503 = vpop.f32.mrb[0].mxu0
      %v504 = vadd.f32 %v310, %v503
      %v505 = vpop.f32.mrb[0].mxu0
      %v506 = vpop.f32.mrb[0].mxu0
      %v507 = vadd.f32 %v310, %v506
      %v508 = vpop.f32.mrb[0].mxu0
      %509 = vmatprep.mubr.bf16.mxu0 %v413
      %510 = vmatmul.mubr.bf16.gmra.mrb[0].mxu0 %v246
      %v511 = vpop.f32.mrb[0].mxu0
      %v512 = vadd.f32 %v310, %v511
      %v513 = vpop.f32.mrb[0].mxu0
      %v514 = vpop.f32.mrb[0].mxu0
      %v515 = vadd.f32 %v310, %v514
      %v516 = vpop.f32.mrb[0].mxu0
      %517 = vmatprep.mubr.bf16.mxu0 %v416
      %518 = vmatmul.mubr.bf16.gmra.mrb[0].mxu0 %v248
      %v519 = vpop.f32.mrb[0].mxu0
      %v520 = vadd.f32 %v310, %v519
      %v521 = vpop.f32.mrb[0].mxu0
      %v522 = vpop.f32.mrb[0].mxu0
      %v523 = vadd.f32 %v310, %v522
      %v524 = vpop.f32.mrb[0].mxu0
      %525 = vmatprep.mubr.bf16.mxu0 %v419
      %526 = vmatmul.mubr.bf16.gmra.mrb[0].mxu0 %v250
      %v527 = vpop.f32.mrb[0].mxu0
      %v528 = vadd.f32 %v310, %v527
      %v529 = vpop.f32.mrb[0].mxu0
      %v530 = vpop.f32.mrb[0].mxu0
      %v531 = vadd.f32 %v310, %v530
      %v532 = vpop.f32.mrb[0].mxu0
      %533 = vmatprep.mubr.bf16.mxu0 %v422
      %534 = vmatmul.mubr.bf16.gmra.mrb[0].mxu0 %v252
      %v535 = vpop.f32.mrb[0].mxu0
      %v536 = vadd.f32 %v310, %v535
      %v537 = vpop.f32.mrb[0].mxu0
      %v538 = vpop.f32.mrb[0].mxu0
      %v539 = vadd.f32 %v310, %v538
      %v540 = vpop.f32.mrb[0].mxu0
      %541 = vmatprep.mubr.bf16.mxu0 %v425
      %542 = vmatmul.mubr.bf16.gmra.mrb[0].mxu0 %v254
      %v543 = vpop.f32.mrb[0].mxu0
      %v544 = vadd.f32 %v310, %v543
      %v545 = vpop.f32.mrb[0].mxu0
      %v546 = vpop.f32.mrb[0].mxu0
      %v547 = vadd.f32 %v310, %v546
      %v548 = vpop.f32.mrb[0].mxu0
      %549 = vmatprep.mubr.bf16.mxu0 %v428
      %550 = vmatmul.mubr.bf16.gmra.mrb[0].mxu0 %v256
      %v551 = vpop.f32.mrb[0].mxu0
      %v552 = vadd.f32 %v310, %v551
      %v553 = vpop.f32.mrb[0].mxu0
      %v554 = vpop.f32.mrb[0].mxu0
      %v555 = vadd.f32 %v310, %v554
      %v556 = vpop.f32.mrb[0].mxu0
      %557 = vmatprep.mubr.bf16.mxu0 %v431
      %558 = vmatmul.mubr.bf16.gmra.mrb[0].mxu0 %v258
      %v559 = vpop.f32.mrb[0].mxu0
      %v560 = vadd.f32 %v310, %v559
      %v561 = vpop.f32.mrb[0].mxu0
      %v562 = vpop.f32.mrb[0].mxu0
      %v563 = vadd.f32 %v310, %v562
      %v564 = vpop.f32.mrb[0].mxu0
      %565 = vmatprep.mubr.bf16.mxu0 %v434
      %566 = vmatmul.mubr.bf16.gmra.mrb[0].mxu0 %v260
      %v567 = vpop.f32.mrb[0].mxu0
      %v568 = vadd.f32 %v310, %v567
      %v569 = vpop.f32.mrb[0].mxu0
      %v570 = vpop.f32.mrb[0].mxu0
      %v571 = vadd.f32 %v310, %v570
      %v572 = vpop.f32.mrb[0].mxu0
      %573 = vmatprep.mubr.bf16.mxu0 %v437
      %574 = vmatmul.mubr.bf16.gmra.mrb[0].mxu0 %v262
      %v575 = vpop.f32.mrb[0].mxu0
      %v576 = vadd.f32 %v310, %v575
      %v577 = vpop.f32.mrb[0].mxu0
      %v578 = vpop.f32.mrb[0].mxu0
      %v579 = vadd.f32 %v310, %v578
      %v580 = vpop.f32.mrb[0].mxu0
      %581 = vmatprep.mubr.bf16.mxu0 %v440
      %582 = vmatmul.mubr.bf16.gmra.mrb[0].mxu0 %v264
      %v583 = vpop.f32.mrb[0].mxu0
      %v584 = vadd.f32 %v310, %v583
      %v585 = vpop.f32.mrb[0].mxu0
      %v586 = vpop.f32.mrb[0].mxu0
      %v587 = vadd.f32 %v310, %v586
      %v588 = vpop.f32.mrb[0].mxu0
      %589 = vmatprep.mubr.bf16.mxu0 %v443
      %590 = vmatmul.mubr.bf16.gmra.mrb[0].mxu0 %v266
      %v591 = vpop.f32.mrb[0].mxu0
      %v592 = vadd.f32 %v310, %v591
      %v593 = vpop.f32.mrb[0].mxu0
      %v594 = vpop.f32.mrb[0].mxu0
      %v595 = vadd.f32 %v310, %v594
      %v596 = vpop.f32.mrb[0].mxu0
      %597 = vmatprep.mubr.bf16.mxu0 %v446
      %598 = vmatmul.mubr.bf16.gmra.mrb[0].mxu0 %v268
      %v599 = vpop.f32.mrb[0].mxu0
      %v600 = vadd.f32 %v310, %v599
      %v601 = vpop.f32.mrb[0].mxu0
      %v602 = vpop.f32.mrb[0].mxu0
      %v603 = vadd.f32 %v310, %v602
      %v604 = vpop.f32.mrb[0].mxu0
      %605 = vmatprep.mubr.bf16.mxu0 %v449
      %606 = vmatmul.mubr.bf16.gmra.mrb[0].mxu0 %v270
      %v607 = vpop.f32.mrb[0].mxu0
      %v608 = vadd.f32 %v310, %v607
      %v609 = vpop.f32.mrb[0].mxu0
      %v610 = vpop.f32.mrb[0].mxu0
      %v611 = vadd.f32 %v310, %v610
      %v612 = vpop.f32.mrb[0].mxu0
      %613 = vmatprep.mubr.bf16.mxu0 %v452
      %614 = vmatmul.mubr.bf16.gmra.mrb[0].mxu0 %v272
      %v615 = vpop.f32.mrb[0].mxu0
      %v616 = vadd.f32 %v310, %v615
      %v617 = vpop.f32.mrb[0].mxu0
      %v618 = vpop.f32.mrb[0].mxu0
      %v619 = vadd.f32 %v310, %v618
      %v620 = vpop.f32.mrb[0].mxu0
      %621 = vdwg.mxu0
      %v622 = vmax.f32 %v496, 0.0
      %v623 = vmax.f32 %v499, 0.0
      %v624 = vmax.f32 %v504, 0.0
      %v625 = vmax.f32 %v507, 0.0
      %v626 = vmax.f32 %v512, 0.0
      %v627 = vmax.f32 %v515, 0.0
      %v628 = vmax.f32 %v520, 0.0
      %v629 = vmax.f32 %v523, 0.0
      %v630 = vmax.f32 %v528, 0.0
      %v631 = vmax.f32 %v531, 0.0
      %v632 = vmax.f32 %v536, 0.0
      %v633 = vmax.f32 %v539, 0.0
      %v634 = vmax.f32 %v544, 0.0
      %v635 = vmax.f32 %v547, 0.0
      %v636 = vmax.f32 %v552, 0.0
      %v637 = vmax.f32 %v555, 0.0
      %v638 = vmax.f32 %v560, 0.0
      %v639 = vmax.f32 %v563, 0.0
      %v640 = vmax.f32 %v568, 0.0
      %v641 = vmax.f32 %v571, 0.0
      %v642 = vmax.f32 %v576, 0.0
      %v643 = vmax.f32 %v579, 0.0
      %v644 = vmax.f32 %v584, 0.0
      %v645 = vmax.f32 %v587, 0.0
      %v646 = vmax.f32 %v592, 0.0
      %v647 = vmax.f32 %v595, 0.0
      %v648 = vmax.f32 %v600, 0.0
      %v649 = vmax.f32 %v603, 0.0
      %v650 = vmax.f32 %v608, 0.0
      %v651 = vmax.f32 %v611, 0.0
      %v652 = vmax.f32 %v616, 0.0
      %v653 = vmax.f32 %v619, 0.0
      %654 = vst [vmem:[%s175] sm:$0xff] %v622
      %655 = vst [vmem:[%s175 + $0x8] sm:$0xff] %v623
      %656 = vst [vmem:[%s175 + $0x10] sm:$0xff] %v624
      %657 = vst [vmem:[%s175 + $0x18] sm:$0xff] %v625
      %658 = vst [vmem:[%s175 + $0x20] sm:$0xff] %v626
      %659 = vst [vmem:[%s175 + $0x28] sm:$0xff] %v627
      %660 = vst [vmem:[%s175 + $0x30] sm:$0xff] %v628
      %661 = vst [vmem:[%s175 + $0x38] sm:$0xff] %v629
      %662 = vst [vmem:[%s175 + $0x40] sm:$0xff] %v630
      %663 = vst [vmem:[%s175 + $0x48] sm:$0xff] %v631
      %664 = vst [vmem:[%s175 + $0x50] sm:$0xff] %v632
      %665 = vst [vmem:[%s175 + $0x58] sm:$0xff] %v633
      %666 = vst [vmem:[%s175 + $0x60] sm:$0xff] %v634
      %667 = vst [vmem:[%s175 + $0x68] sm:$0xff] %v635
      %668 = vst [vmem:[%s175 + $0x70] sm:$0xff] %v636
      %669 = vst [vmem:[%s175 + $0x78] sm:$0xff] %v637
      %670 = vst [vmem:[%s175 + $0x80] sm:$0xff] %v638
      %671 = vst [vmem:[%s175 + $0x88] sm:$0xff] %v639
      %672 = vst [vmem:[%s175 + $0x90] sm:$0xff] %v640
      %673 = vst [vmem:[%s175 + $0x98] sm:$0xff] %v641
      %674 = vst [vmem:[%s175 + $0xa0] sm:$0xff] %v642
      %675 = vst [vmem:[%s175 + $0xa8] sm:$0xff] %v643
      %676 = vst [vmem:[%s175 + $0xb0] sm:$0xff] %v644
      %677 = vst [vmem:[%s175 + $0xb8] sm:$0xff] %v645
      %678 = vst [vmem:[%s175 + $0xc0] sm:$0xff] %v646
      %679 = vst [vmem:[%s175 + $0xc8] sm:$0xff] %v647
      %680 = vst [vmem:[%s175 + $0xd0] sm:$0xff] %v648
      %681 = vst [vmem:[%s175 + $0xd8] sm:$0xff] %v649
      %682 = vst [vmem:[%s175 + $0xe0] sm:$0xff] %v650
      %683 = vst [vmem:[%s175 + $0xe8] sm:$0xff] %v651
      %684 = vst [vmem:[%s175 + $0xf0] sm:$0xff] %v652
      %685 = vst [vmem:[%s175 + $0xf8] sm:$0xff] %v653
      %s686 = smul.u32 32, %s14
      %p687 = scmp.lt.s32.totalorder %s686, 63
      %s688 = scalar_select %p687, %s686, 63
      %s689 = smul.addr %s688, 8
      %s690 = scalar_lea.vmem %s3, %s689
      // Predicated region
      $region33: #{_lambda_.7} parent=31 // pred_check
        %p691 = pneg %p100
      $region34: #{_lambda_.7} parent=31 // pred_check_branch
        %693 = sbr.rel (%p691) target = $region36
      $region35: #{_lambda_.7} parent=31 // pred_region
        %s694 = smul.u32 32, %s14
      $region36: #{_lambda_.7} parent=31 // pred_fallthru
        _
    $region32: #{_lambda_.7} parent=5 // pred_fallthru
      _
    %p695 = scmp.le.s32.totalorder 2, %s9
    // Predicated region
    $region37: #{_lambda_.7} parent=5 // pred_check
      %p696 = pneg %p695
    $region38: #{_lambda_.7} parent=5 // pred_check_branch
      %698 = sbr.rel (%p696) target = $region40
    $region39: #{_lambda_.7} parent=5 // pred_region
      %s699 = ssub.s32 %s9, 2
      // Predicated region
      $region41: #{_lambda_.7} parent=39 // pred_check
        %p700 = pneg %p106
      $region42: #{_lambda_.7} parent=39 // pred_check_branch
        %702 = sbr.rel (%p700) target = $region44
      $region43: #{_lambda_.7} parent=39 // pred_region
        %s703 = smul.u32 32, %s15
        %p704 = scmp.lt.s32.totalorder %s703, 63
        %s705 = scalar_select %p704, %s703, 63
        %s706 = smul.addr %s705, 8
        %s707 = scalar_lea.vmem %s3, %s706
      $region44: #{_lambda_.7} parent=39 // pred_fallthru
        _
    $region40: #{_lambda_.7} parent=5 // pred_fallthru
      _
  $region6: #{_lambda_.7} parent=0 // loop_footer
    %s13 = sadd.s32 1, %s9
  $region7: #{_lambda_.7} parent=0 // loop_footer_branch
    %8 = sbr.rel target = $region3
  $region8: #{_lambda_.7} parent=0 // loop_exit
    _

// kernel: _lambda_.8
$region0: #{_lambda_.8}
  #allocation0 [shape = 'u32[]', space=smem, size = 0x4, offset = 0x4, fixed_abs, tag = 'smem constant byte address 0x4 - core index']
  #allocation1 [shape = 'u32[144,128]{1,0:T(1,128)}', space=vmem, size = 0x12000, scoped, tag = 'internal scratch']
  #allocation2 [shape = 'f32[8,4,10,8]{3,2,1,0:T(8,128)}', space=vmem, size = 0x40000, scoped, tag = 'scratch operand']
  %s0 = inlined_call_operand.vmem [shape: f32[8,10,10,8], index: 0, kind: input, shape index: {}]
  %s1 = inlined_call_operand.vmem [shape: f32[8,4,4,8], index: 1, kind: output, shape index: {}]
  %s2 = sld [smem:[#allocation0]]
  $region14: #{_lambda_.8} parent=0
    _
  %s4 = ssub.s32 1, %s2
  %s5 = scalar_select 0, %s4, %s2
  // Predicated region
  $region2: #{_lambda_.8} parent=0 // pred_check
    _
  $region3: #{_lambda_.8} parent=0 // pred_check_branch
    %7 = sbr.rel (0) target = $region5
  $region4: #{_lambda_.8} parent=0 // pred_region
    _
  $region5: #{_lambda_.8} parent=0 // pred_fallthru
    _
  %v8 = vld [vmem:[%s0] sm:$0xff]
  %v9 = vld [vmem:[%s0 + $0x8] sm:$0x3]
  %v10 = vld [vmem:[%s0 + $0x20] sm:$0xff]
  %v11 = vld [vmem:[%s0 + $0x28] sm:$0x3]
  %v12 = vld [vmem:[%s0 + $0x40] sm:$0xff]
  %v13 = vld [vmem:[%s0 + $0x48] sm:$0x3]
  %v14 = vld [vmem:[%s0 + $0x60] sm:$0xff]
  %v15 = vld [vmem:[%s0 + $0x68] sm:$0x3]
  %v16 = vld [vmem:[%s0 + $0xa0] sm:$0xff]
  %v17 = vld [vmem:[%s0 + $0xa8] sm:$0x3]
  %v18 = vld [vmem:[%s0 + $0xc0] sm:$0xff]
  %v19 = vld [vmem:[%s0 + $0xc8] sm:$0x3]
  %v20 = vld [vmem:[%s0 + $0xe0] sm:$0xff]
  %v21 = vld [vmem:[%s0 + $0xe8] sm:$0x3]
  %v22 = vld [vmem:[%s0 + $0x100] sm:$0xff]
  %v23 = vld [vmem:[%s0 + $0x108] sm:$0x3]
  %v24 = vld [vmem:[%s0 + $0x140] sm:$0xff]
  %v25 = vld [vmem:[%s0 + $0x148] sm:$0x3]
  %v26 = vld [vmem:[%s0 + $0x160] sm:$0xff]
  %v27 = vld [vmem:[%s0 + $0x168] sm:$0x3]
  %v28 = vld [vmem:[%s0 + $0x180] sm:$0xff]
  %v29 = vld [vmem:[%s0 + $0x188] sm:$0x3]
  %v30 = vld [vmem:[%s0 + $0x1a0] sm:$0xff]
  %v31 = vld [vmem:[%s0 + $0x1a8] sm:$0x3]
  %v32 = vld [vmem:[%s0 + $0x1e0] sm:$0xff]
  %v33 = vld [vmem:[%s0 + $0x1e8] sm:$0x3]
  %v34 = vld [vmem:[%s0 + $0x200] sm:$0xff]
  %v35 = vld [vmem:[%s0 + $0x208] sm:$0x3]
  %v36 = vld [vmem:[%s0 + $0x220] sm:$0xff]
  %v37 = vld [vmem:[%s0 + $0x228] sm:$0x3]
  %v38 = vld [vmem:[%s0 + $0x240] sm:$0xff]
  %v39 = vld [vmem:[%s0 + $0x248] sm:$0x3]
  %v40 = vld [vmem:[%s0 + $0x280] sm:$0xff]
  %v41 = vld [vmem:[%s0 + $0x288] sm:$0x3]
  %v42 = vld [vmem:[%s0 + $0x2a0] sm:$0xff]
  %v43 = vld [vmem:[%s0 + $0x2a8] sm:$0x3]
  %v44 = vld [vmem:[%s0 + $0x2c0] sm:$0xff]
  %v45 = vld [vmem:[%s0 + $0x2c8] sm:$0x3]
  %v46 = vld [vmem:[%s0 + $0x2e0] sm:$0xff]
  %v47 = vld [vmem:[%s0 + $0x2e8] sm:$0x3]
  %v48 = vld [vmem:[%s0 + $0x320] sm:$0xff]
  %v49 = vld [vmem:[%s0 + $0x328] sm:$0x3]
  %v50 = vld [vmem:[%s0 + $0x340] sm:$0xff]
  %v51 = vld [vmem:[%s0 + $0x348] sm:$0x3]
  %v52 = vld [vmem:[%s0 + $0x360] sm:$0xff]
  %v53 = vld [vmem:[%s0 + $0x368] sm:$0x3]
  %v54 = vld [vmem:[%s0 + $0x380] sm:$0xff]
  %v55 = vld [vmem:[%s0 + $0x388] sm:$0x3]
  %v56 = vld [vmem:[%s0 + $0x3c0] sm:$0xff]
  %v57 = vld [vmem:[%s0 + $0x3c8] sm:$0x3]
  %v58 = vld [vmem:[%s0 + $0x3e0] sm:$0xff]
  %v59 = vld [vmem:[%s0 + $0x3e8] sm:$0x3]
  %v60 = vld [vmem:[%s0 + $0x400] sm:$0xff]
  %v61 = vld [vmem:[%s0 + $0x408] sm:$0x3]
  %v62 = vld [vmem:[%s0 + $0x420] sm:$0xff]
  %v63 = vld [vmem:[%s0 + $0x428] sm:$0x3]
  %v64 = vld [vmem:[%s0 + $0x460] sm:$0xff]
  %v65 = vld [vmem:[%s0 + $0x468] sm:$0x3]
  %v66 = vld [vmem:[%s0 + $0x480] sm:$0xff]
  %v67 = vld [vmem:[%s0 + $0x488] sm:$0x3]
  %v68 = vld [vmem:[%s0 + $0x4a0] sm:$0xff]
  %v69 = vld [vmem:[%s0 + $0x4a8] sm:$0x3]
  %v70 = vld [vmem:[%s0 + $0x4c0] sm:$0xff]
  %v71 = vld [vmem:[%s0 + $0x4c8] sm:$0x3]
  %s72 = scalar_lea.vmem %s0, 16
  %v73 = vld [vmem:[%s72] sm:$0xff]
  %v74 = vld [vmem:[%s72 + $0x8] sm:$0x3]
  %v75 = vld [vmem:[%s72 + $0x20] sm:$0xff]
  %v76 = vld [vmem:[%s72 + $0x28] sm:$0x3]
  %v77 = vld [vmem:[%s72 + $0x40] sm:$0xff]
  %v78 = vld [vmem:[%s72 + $0x48] sm:$0x3]
  %v79 = vld [vmem:[%s72 + $0x60] sm:$0xff]
  %v80 = vld [vmem:[%s72 + $0x68] sm:$0x3]
  %v81 = vld [vmem:[%s72 + $0xa0] sm:$0xff]
  %v82 = vld [vmem:[%s72 + $0xa8] sm:$0x3]
  %v83 = vld [vmem:[%s72 + $0xc0] sm:$0xff]
  %v84 = vld [vmem:[%s72 + $0xc8] sm:$0x3]
  %v85 = vld [vmem:[%s72 + $0xe0] sm:$0xff]
  %v86 = vld [vmem:[%s72 + $0xe8] sm:$0x3]
  %v87 = vld [vmem:[%s72 + $0x100] sm:$0xff]
  %v88 = vld [vmem:[%s72 + $0x108] sm:$0x3]
  %v89 = vld [vmem:[%s72 + $0x140] sm:$0xff]
  %v90 = vld [vmem:[%s72 + $0x148] sm:$0x3]
  %v91 = vld [vmem:[%s72 + $0x160] sm:$0xff]
  %v92 = vld [vmem:[%s72 + $0x168] sm:$0x3]
  %v93 = vld [vmem:[%s72 + $0x180] sm:$0xff]
  %v94 = vld [vmem:[%s72 + $0x188] sm:$0x3]
  %v95 = vld [vmem:[%s72 + $0x1a0] sm:$0xff]
  %v96 = vld [vmem:[%s72 + $0x1a8] sm:$0x3]
  %v97 = vld [vmem:[%s72 + $0x1e0] sm:$0xff]
  %v98 = vld [vmem:[%s72 + $0x1e8] sm:$0x3]
  %v99 = vld [vmem:[%s72 + $0x200] sm:$0xff]
  %v100 = vld [vmem:[%s72 + $0x208] sm:$0x3]
  %v101 = vld [vmem:[%s72 + $0x220] sm:$0xff]
  %v102 = vld [vmem:[%s72 + $0x228] sm:$0x3]
  %v103 = vld [vmem:[%s72 + $0x240] sm:$0xff]
  %v104 = vld [vmem:[%s72 + $0x248] sm:$0x3]
  %v105 = vld [vmem:[%s72 + $0x280] sm:$0xff]
  %v106 = vld [vmem:[%s72 + $0x288] sm:$0x3]
  %v107 = vld [vmem:[%s72 + $0x2a0] sm:$0xff]
  %v108 = vld [vmem:[%s72 + $0x2a8] sm:$0x3]
  %v109 = vld [vmem:[%s72 + $0x2c0] sm:$0xff]
  %v110 = vld [vmem:[%s72 + $0x2c8] sm:$0x3]
  %v111 = vld [vmem:[%s72 + $0x2e0] sm:$0xff]
  %v112 = vld [vmem:[%s72 + $0x2e8] sm:$0x3]
  %v113 = vld [vmem:[%s72 + $0x320] sm:$0xff]
  %v114 = vld [vmem:[%s72 + $0x328] sm:$0x3]
  %v115 = vld [vmem:[%s72 + $0x340] sm:$0xff]
  %v116 = vld [vmem:[%s72 + $0x348] sm:$0x3]
  %v117 = vld [vmem:[%s72 + $0x360] sm:$0xff]
  %v118 = vld [vmem:[%s72 + $0x368] sm:$0x3]
  %v119 = vld [vmem:[%s72 + $0x380] sm:$0xff]
  %v120 = vld [vmem:[%s72 + $0x388] sm:$0x3]
  %v121 = vld [vmem:[%s72 + $0x3c0] sm:$0xff]
  %v122 = vld [vmem:[%s72 + $0x3c8] sm:$0x3]
  %v123 = vld [vmem:[%s72 + $0x3e0] sm:$0xff]
  %v124 = vld [vmem:[%s72 + $0x3e8] sm:$0x3]
  %v125 = vld [vmem:[%s72 + $0x400] sm:$0xff]
  %v126 = vld [vmem:[%s72 + $0x408] sm:$0x3]
  %v127 = vld [vmem:[%s72 + $0x420] sm:$0xff]
  %v128 = vld [vmem:[%s72 + $0x428] sm:$0x3]
  %v129 = vld [vmem:[%s72 + $0x460] sm:$0xff]
  %v130 = vld [vmem:[%s72 + $0x468] sm:$0x3]
  %v131 = vld [vmem:[%s72 + $0x480] sm:$0xff]
  %v132 = vld [vmem:[%s72 + $0x488] sm:$0x3]
  %v133 = vld [vmem:[%s72 + $0x4a0] sm:$0xff]
  %v134 = vld [vmem:[%s72 + $0x4a8] sm:$0x3]
  %v135 = vld [vmem:[%s72 + $0x4c0] sm:$0xff]
  %v136 = vld [vmem:[%s72 + $0x4c8] sm:$0x3]
  %v137 = vmax.f32 %v8, %v73
  %v138 = vmax.f32 %v9, %v74
  %v139 = vmax.f32 %v10, %v75
  %v140 = vmax.f32 %v11, %v76
  %v141 = vmax.f32 %v12, %v77
  %v142 = vmax.f32 %v13, %v78
  %v143 = vmax.f32 %v14, %v79
  %v144 = vmax.f32 %v15, %v80
  %v145 = vmax.f32 %v16, %v81
  %v146 = vmax.f32 %v17, %v82
  %v147 = vmax.f32 %v18, %v83
  %v148 = vmax.f32 %v19, %v84
  %v149 = vmax.f32 %v20, %v85
  %v150 = vmax.f32 %v21, %v86
  %v151 = vmax.f32 %v22, %v87
  %v152 = vmax.f32 %v23, %v88
  %v153 = vmax.f32 %v24, %v89
  %v154 = vmax.f32 %v25, %v90
  %v155 = vmax.f32 %v26, %v91
  %v156 = vmax.f32 %v27, %v92
  %v157 = vmax.f32 %v28, %v93
  %v158 = vmax.f32 %v29, %v94
  %v159 = vmax.f32 %v30, %v95
  %v160 = vmax.f32 %v31, %v96
  %v161 = vmax.f32 %v32, %v97
  %v162 = vmax.f32 %v33, %v98
  %v163 = vmax.f32 %v34, %v99
  %v164 = vmax.f32 %v35, %v100
  %v165 = vmax.f32 %v36, %v101
  %v166 = vmax.f32 %v37, %v102
  %v167 = vmax.f32 %v38, %v103
  %v168 = vmax.f32 %v39, %v104
  %v169 = vmax.f32 %v40, %v105
  %v170 = vmax.f32 %v41, %v106
  %v171 = vmax.f32 %v42, %v107
  %v172 = vmax.f32 %v43, %v108
  %v173 = vmax.f32 %v44, %v109
  %v174 = vmax.f32 %v45, %v110
  %v175 = vmax.f32 %v46, %v111
  %v176 = vmax.f32 %v47, %v112
  %v177 = vmax.f32 %v48, %v113
  %v178 = vmax.f32 %v49, %v114
  %v179 = vmax.f32 %v50, %v115
  %v180 = vmax.f32 %v51, %v116
  %v181 = vmax.f32 %v52, %v117
  %v182 = vmax.f32 %v53, %v118
  %v183 = vmax.f32 %v54, %v119
  %v184 = vmax.f32 %v55, %v120
  %v185 = vmax.f32 %v56, %v121
  %v186 = vmax.f32 %v57, %v122
  %v187 = vmax.f32 %v58, %v123
  %v188 = vmax.f32 %v59, %v124
  %v189 = vmax.f32 %v60, %v125
  %v190 = vmax.f32 %v61, %v126
  %v191 = vmax.f32 %v62, %v127
  %v192 = vmax.f32 %v63, %v128
  %v193 = vmax.f32 %v64, %v129
  %v194 = vmax.f32 %v65, %v130
  %v195 = vmax.f32 %v66, %v131
  %v196 = vmax.f32 %v67, %v132
  %v197 = vmax.f32 %v68, %v133
  %v198 = vmax.f32 %v69, %v134
  %v199 = vmax.f32 %v70, %v135
  %v200 = vmax.f32 %v71, %v136
  %s201 = scalar_lea.vmem %s0, 32
  %v202 = vld [vmem:[%s201] sm:$0xff]
  %v203 = vld [vmem:[%s201 + $0x8] sm:$0x3]
  %v204 = vld [vmem:[%s201 + $0x20] sm:$0xff]
  %v205 = vld [vmem:[%s201 + $0x28] sm:$0x3]
  %v206 = vld [vmem:[%s201 + $0x40] sm:$0xff]
  %v207 = vld [vmem:[%s201 + $0x48] sm:$0x3]
  %v208 = vld [vmem:[%s201 + $0x60] sm:$0xff]
  %v209 = vld [vmem:[%s201 + $0x68] sm:$0x3]
  %v210 = vld [vmem:[%s201 + $0xa0] sm:$0xff]
  %v211 = vld [vmem:[%s201 + $0xa8] sm:$0x3]
  %v212 = vld [vmem:[%s201 + $0xc0] sm:$0xff]
  %v213 = vld [vmem:[%s201 + $0xc8] sm:$0x3]
  %v214 = vld [vmem:[%s201 + $0xe0] sm:$0xff]
  %v215 = vld [vmem:[%s201 + $0xe8] sm:$0x3]
  %v216 = vld [vmem:[%s201 + $0x100] sm:$0xff]
  %v217 = vld [vmem:[%s201 + $0x108] sm:$0x3]
  %v218 = vld [vmem:[%s201 + $0x140] sm:$0xff]
  %v219 = vld [vmem:[%s201 + $0x148] sm:$0x3]
  %v220 = vld [vmem:[%s201 + $0x160] sm:$0xff]
  %v221 = vld [vmem:[%s201 + $0x168] sm:$0x3]
  %v222 = vld [vmem:[%s201 + $0x180] sm:$0xff]
  %v223 = vld [vmem:[%s201 + $0x188] sm:$0x3]
  %v224 = vld [vmem:[%s201 + $0x1a0] sm:$0xff]
  %v225 = vld [vmem:[%s201 + $0x1a8] sm:$0x3]
  %v226 = vld [vmem:[%s201 + $0x1e0] sm:$0xff]
  %v227 = vld [vmem:[%s201 + $0x1e8] sm:$0x3]
  %v228 = vld [vmem:[%s201 + $0x200] sm:$0xff]
  %v229 = vld [vmem:[%s201 + $0x208] sm:$0x3]
  %v230 = vld [vmem:[%s201 + $0x220] sm:$0xff]
  %v231 = vld [vmem:[%s201 + $0x228] sm:$0x3]
  %v232 = vld [vmem:[%s201 + $0x240] sm:$0xff]
  %v233 = vld [vmem:[%s201 + $0x248] sm:$0x3]
  %v234 = vld [vmem:[%s201 + $0x280] sm:$0xff]
  %v235 = vld [vmem:[%s201 + $0x288] sm:$0x3]
  %v236 = vld [vmem:[%s201 + $0x2a0] sm:$0xff]
  %v237 = vld [vmem:[%s201 + $0x2a8] sm:$0x3]
  %v238 = vld [vmem:[%s201 + $0x2c0] sm:$0xff]
  %v239 = vld [vmem:[%s201 + $0x2c8] sm:$0x3]
  %v240 = vld [vmem:[%s201 + $0x2e0] sm:$0xff]
  %v241 = vld [vmem:[%s201 + $0x2e8] sm:$0x3]
  %v242 = vld [vmem:[%s201 + $0x320] sm:$0xff]
  %v243 = vld [vmem:[%s201 + $0x328] sm:$0x3]
  %v244 = vld [vmem:[%s201 + $0x340] sm:$0xff]
  %v245 = vld [vmem:[%s201 + $0x348] sm:$0x3]
  %v246 = vld [vmem:[%s201 + $0x360] sm:$0xff]
  %v247 = vld [vmem:[%s201 + $0x368] sm:$0x3]
  %v248 = vld [vmem:[%s201 + $0x380] sm:$0xff]
  %v249 = vld [vmem:[%s201 + $0x388] sm:$0x3]
  %v250 = vld [vmem:[%s201 + $0x3c0] sm:$0xff]
  %v251 = vld [vmem:[%s201 + $0x3c8] sm:$0x3]
  %v252 = vld [vmem:[%s201 + $0x3e0] sm:$0xff]
  %v253 = vld [vmem:[%s201 + $0x3e8] sm:$0x3]
  %v254 = vld [vmem:[%s201 + $0x400] sm:$0xff]
  %v255 = vld [vmem:[%s201 + $0x408] sm:$0x3]
  %v256 = vld [vmem:[%s201 + $0x420] sm:$0xff]
  %v257 = vld [vmem:[%s201 + $0x428] sm:$0x3]
  %v258 = vld [vmem:[%s201 + $0x460] sm:$0xff]
  %v259 = vld [vmem:[%s201 + $0x468] sm:$0x3]
  %v260 = vld [vmem:[%s201 + $0x480] sm:$0xff]
  %v261 = vld [vmem:[%s201 + $0x488] sm:$0x3]
  %v262 = vld [vmem:[%s201 + $0x4a0] sm:$0xff]
  %v263 = vld [vmem:[%s201 + $0x4a8] sm:$0x3]
  %v264 = vld [vmem:[%s201 + $0x4c0] sm:$0xff]
  %v265 = vld [vmem:[%s201 + $0x4c8] sm:$0x3]
  %v266 = vmax.f32 %v137, %v202
  %v267 = vmax.f32 %v138, %v203
  %v268 = vmax.f32 %v139, %v204
  %v269 = vmax.f32 %v140, %v205
  %v270 = vmax.f32 %v141, %v206
  %v271 = vmax.f32 %v142, %v207
  %v272 = vmax.f32 %v143, %v208
  %v273 = vmax.f32 %v144, %v209
  %v274 = vmax.f32 %v145, %v210
  %v275 = vmax.f32 %v146, %v211
  %v276 = vmax.f32 %v147, %v212
  %v277 = vmax.f32 %v148, %v213
  %v278 = vmax.f32 %v149, %v214
  %v279 = vmax.f32 %v150, %v215
  %v280 = vmax.f32 %v151, %v216
  %v281 = vmax.f32 %v152, %v217
  %v282 = vmax.f32 %v153, %v218
  %v283 = vmax.f32 %v154, %v219
  %v284 = vmax.f32 %v155, %v220
  %v285 = vmax.f32 %v156, %v221
  %v286 = vmax.f32 %v157, %v222
  %v287 = vmax.f32 %v158, %v223
  %v288 = vmax.f32 %v159, %v224
  %v289 = vmax.f32 %v160, %v225
  %v290 = vmax.f32 %v161, %v226
  %v291 = vmax.f32 %v162, %v227
  %v292 = vmax.f32 %v163, %v228
  %v293 = vmax.f32 %v164, %v229
  %v294 = vmax.f32 %v165, %v230
  %v295 = vmax.f32 %v166, %v231
  %v296 = vmax.f32 %v167, %v232
  %v297 = vmax.f32 %v168, %v233
  %v298 = vmax.f32 %v169, %v234
  %v299 = vmax.f32 %v170, %v235
  %v300 = vmax.f32 %v171, %v236
  %v301 = vmax.f32 %v172, %v237
  %v302 = vmax.f32 %v173, %v238
  %v303 = vmax.f32 %v174, %v239
  %v304 = vmax.f32 %v175, %v240
  %v305 = vmax.f32 %v176, %v241
  %v306 = vmax.f32 %v177, %v242
  %v307 = vmax.f32 %v178, %v243
  %v308 = vmax.f32 %v179, %v244
  %v309 = vmax.f32 %v180, %v245
  %v310 = vmax.f32 %v181, %v246
  %v311 = vmax.f32 %v182, %v247
  %v312 = vmax.f32 %v183, %v248
  %v313 = vmax.f32 %v184, %v249
  %v314 = vmax.f32 %v185, %v250
  %v315 = vmax.f32 %v186, %v251
  %v316 = vmax.f32 %v187, %v252
  %v317 = vmax.f32 %v188, %v253
  %v318 = vmax.f32 %v189, %v254
  %v319 = vmax.f32 %v190, %v255
  %v320 = vmax.f32 %v191, %v256
  %v321 = vmax.f32 %v192, %v257
  %v322 = vmax.f32 %v193, %v258
  %v323 = vmax.f32 %v194, %v259
  %v324 = vmax.f32 %v195, %v260
  %v325 = vmax.f32 %v196, %v261
  %v326 = vmax.f32 %v197, %v262
  %v327 = vmax.f32 %v198, %v263
  %v328 = vmax.f32 %v199, %v264
  %v329 = vmax.f32 %v200, %v265
  %vm330 = vcmask 64512
  %331 = vst.msk [vmem:[#allocation2] sm:$0xff] %vm330, %v266
  %vm332 = vcmask 58368
  %333 = vst.msk [vmem:[#allocation2 + $0x8] sm:$0x3] %vm332, %v267
  %334 = vst.msk [vmem:[#allocation2 + $0x10] sm:$0xff] %vm330, %v268
  %335 = vst.msk [vmem:[#allocation2 + $0x18] sm:$0x3] %vm332, %v269
  %336 = vst.msk [vmem:[#allocation2 + $0x20] sm:$0xff] %vm330, %v270
  %337 = vst.msk [vmem:[#allocation2 + $0x28] sm:$0x3] %vm332, %v271
  %338 = vst.msk [vmem:[#allocation2 + $0x30] sm:$0xff] %vm330, %v272
  %339 = vst.msk [vmem:[#allocation2 + $0x38] sm:$0x3] %vm332, %v273
  %340 = vst.msk [vmem:[#allocation2 + $0x40] sm:$0xff] %vm330, %v274
  %341 = vst.msk [vmem:[#allocation2 + $0x48] sm:$0x3] %vm332, %v275
  %342 = vst.msk [vmem:[#allocation2 + $0x50] sm:$0xff] %vm330, %v276
  %343 = vst.msk [vmem:[#allocation2 + $0x58] sm:$0x3] %vm332, %v277
  %344 = vst.msk [vmem:[#allocation2 + $0x60] sm:$0xff] %vm330, %v278
  %345 = vst.msk [vmem:[#allocation2 + $0x68] sm:$0x3] %vm332, %v279
  %346 = vst.msk [vmem:[#allocation2 + $0x70] sm:$0xff] %vm330, %v280
  %347 = vst.msk [vmem:[#allocation2 + $0x78] sm:$0x3] %vm332, %v281
  %348 = vst.msk [vmem:[#allocation2 + $0x80] sm:$0xff] %vm330, %v282
  %349 = vst.msk [vmem:[#allocation2 + $0x88] sm:$0x3] %vm332, %v283
  %350 = vst.msk [vmem:[#allocation2 + $0x90] sm:$0xff] %vm330, %v284
  %351 = vst.msk [vmem:[#allocation2 + $0x98] sm:$0x3] %vm332, %v285
  %352 = vst.msk [vmem:[#allocation2 + $0xa0] sm:$0xff] %vm330, %v286
  %353 = vst.msk [vmem:[#allocation2 + $0xa8] sm:$0x3] %vm332, %v287
  %354 = vst.msk [vmem:[#allocation2 + $0xb0] sm:$0xff] %vm330, %v288
  %355 = vst.msk [vmem:[#allocation2 + $0xb8] sm:$0x3] %vm332, %v289
  %356 = vst.msk [vmem:[#allocation2 + $0xc0] sm:$0xff] %vm330, %v290
  %357 = vst.msk [vmem:[#allocation2 + $0xc8] sm:$0x3] %vm332, %v291
  %358 = vst.msk [vmem:[#allocation2 + $0xd0] sm:$0xff] %vm330, %v292
  %359 = vst.msk [vmem:[#allocation2 + $0xd8] sm:$0x3] %vm332, %v293
  %360 = vst.msk [vmem:[#allocation2 + $0xe0] sm:$0xff] %vm330, %v294
  %361 = vst.msk [vmem:[#allocation2 + $0xe8] sm:$0x3] %vm332, %v295
  %362 = vst.msk [vmem:[#allocation2 + $0xf0] sm:$0xff] %vm330, %v296
  %363 = vst.msk [vmem:[#allocation2 + $0xf8] sm:$0x3] %vm332, %v297
  %364 = vst.msk [vmem:[#allocation2 + $0x100] sm:$0xff] %vm330, %v298
  %365 = vst.msk [vmem:[#allocation2 + $0x108] sm:$0x3] %vm332, %v299
  %366 = vst.msk [vmem:[#allocation2 + $0x110] sm:$0xff] %vm330, %v300
  %367 = vst.msk [vmem:[#allocation2 + $0x118] sm:$0x3] %vm332, %v301
  %368 = vst.msk [vmem:[#allocation2 + $0x120] sm:$0xff] %vm330, %v302
  %369 = vst.msk [vmem:[#allocation2 + $0x128] sm:$0x3] %vm332, %v303
  %370 = vst.msk [vmem:[#allocation2 + $0x130] sm:$0xff] %vm330, %v304
  %371 = vst.msk [vmem:[#allocation2 + $0x138] sm:$0x3] %vm332, %v305
  %372 = vst.msk [vmem:[#allocation2 + $0x140] sm:$0xff] %vm330, %v306
  %373 = vst.msk [vmem:[#allocation2 + $0x148] sm:$0x3] %vm332, %v307
  %374 = vst.msk [vmem:[#allocation2 + $0x150] sm:$0xff] %vm330, %v308
  %375 = vst.msk [vmem:[#allocation2 + $0x158] sm:$0x3] %vm332, %v309
  %376 = vst.msk [vmem:[#allocation2 + $0x160] sm:$0xff] %vm330, %v310
  %377 = vst.msk [vmem:[#allocation2 + $0x168] sm:$0x3] %vm332, %v311
  %378 = vst.msk [vmem:[#allocation2 + $0x170] sm:$0xff] %vm330, %v312
  %379 = vst.msk [vmem:[#allocation2 + $0x178] sm:$0x3] %vm332, %v313
  %380 = vst.msk [vmem:[#allocation2 + $0x180] sm:$0xff] %vm330, %v314
  %381 = vst.msk [vmem:[#allocation2 + $0x188] sm:$0x3] %vm332, %v315
  %382 = vst.msk [vmem:[#allocation2 + $0x190] sm:$0xff] %vm330, %v316
  %383 = vst.msk [vmem:[#allocation2 + $0x198] sm:$0x3] %vm332, %v317
  %384 = vst.msk [vmem:[#allocation2 + $0x1a0] sm:$0xff] %vm330, %v318
  %385 = vst.msk [vmem:[#allocation2 + $0x1a8] sm:$0x3] %vm332, %v319
  %386 = vst.msk [vmem:[#allocation2 + $0x1b0] sm:$0xff] %vm330, %v320
  %387 = vst.msk [vmem:[#allocation2 + $0x1b8] sm:$0x3] %vm332, %v321
  %388 = vst.msk [vmem:[#allocation2 + $0x1c0] sm:$0xff] %vm330, %v322
  %389 = vst.msk [vmem:[#allocation2 + $0x1c8] sm:$0x3] %vm332, %v323
  %390 = vst.msk [vmem:[#allocation2 + $0x1d0] sm:$0xff] %vm330, %v324
  %391 = vst.msk [vmem:[#allocation2 + $0x1d8] sm:$0x3] %vm332, %v325
  %392 = vst.msk [vmem:[#allocation2 + $0x1e0] sm:$0xff] %vm330, %v326
  %393 = vst.msk [vmem:[#allocation2 + $0x1e8] sm:$0x3] %vm332, %v327
  %394 = vst.msk [vmem:[#allocation2 + $0x1f0] sm:$0xff] %vm330, %v328
  %395 = vst.msk [vmem:[#allocation2 + $0x1f8] sm:$0x3] %vm332, %v329
  %v396 = vld [vmem:[#allocation2] ss:$2 sm:$0xf]
  %s397 = scalar_lea.vmem [#allocation2], 16
  %v398 = vld [vmem:[%s397] ss:$2 sm:$0xf]
  %s399 = scalar_lea.vmem [#allocation2], 32
  %v400 = vld [vmem:[%s399] ss:$2 sm:$0xf]
  %s401 = scalar_lea.vmem [#allocation2], 48
  %v402 = vld [vmem:[%s401] ss:$2 sm:$0xf]
  %s403 = scalar_lea.vmem [#allocation2], 64
  %v404 = vld [vmem:[%s403] ss:$2 sm:$0xf]
  %s405 = scalar_lea.vmem [#allocation2], 80
  %v406 = vld [vmem:[%s405] ss:$2 sm:$0xf]
  %s407 = scalar_lea.vmem [#allocation2], 96
  %v408 = vld [vmem:[%s407] ss:$2 sm:$0xf]
  %s409 = scalar_lea.vmem [#allocation2], 112
  %v410 = vld [vmem:[%s409] ss:$2 sm:$0xf]
  %s411 = scalar_lea.vmem [#allocation2], 128
  %v412 = vld [vmem:[%s411] ss:$2 sm:$0xf]
  %s413 = scalar_lea.vmem [#allocation2], 144
  %v414 = vld [vmem:[%s413] ss:$2 sm:$0xf]
  %s415 = scalar_lea.vmem [#allocation2], 160
  %v416 = vld [vmem:[%s415] ss:$2 sm:$0xf]
  %s417 = scalar_lea.vmem [#allocation2], 176
  %v418 = vld [vmem:[%s417] ss:$2 sm:$0xf]
  %s419 = scalar_lea.vmem [#allocation2], 192
  %v420 = vld [vmem:[%s419] ss:$2 sm:$0xf]
  %s421 = scalar_lea.vmem [#allocation2], 208
  %v422 = vld [vmem:[%s421] ss:$2 sm:$0xf]
  %s423 = scalar_lea.vmem [#allocation2], 224
  %v424 = vld [vmem:[%s423] ss:$2 sm:$0xf]
  %s425 = scalar_lea.vmem [#allocation2], 240
  %v426 = vld [vmem:[%s425] ss:$2 sm:$0xf]
  %s427 = scalar_lea.vmem [#allocation2], 256
  %v428 = vld [vmem:[%s427] ss:$2 sm:$0xf]
  %s429 = scalar_lea.vmem [#allocation2], 272
  %v430 = vld [vmem:[%s429] ss:$2 sm:$0xf]
  %s431 = scalar_lea.vmem [#allocation2], 288
  %v432 = vld [vmem:[%s431] ss:$2 sm:$0xf]
  %s433 = scalar_lea.vmem [#allocation2], 304
  %v434 = vld [vmem:[%s433] ss:$2 sm:$0xf]
  %s435 = scalar_lea.vmem [#allocation2], 320
  %v436 = vld [vmem:[%s435] ss:$2 sm:$0xf]
  %s437 = scalar_lea.vmem [#allocation2], 336
  %v438 = vld [vmem:[%s437] ss:$2 sm:$0xf]
  %s439 = scalar_lea.vmem [#allocation2], 352
  %v440 = vld [vmem:[%s439] ss:$2 sm:$0xf]
  %s441 = scalar_lea.vmem [#allocation2], 368
  %v442 = vld [vmem:[%s441] ss:$2 sm:$0xf]
  %s443 = scalar_lea.vmem [#allocation2], 384
  %v444 = vld [vmem:[%s443] ss:$2 sm:$0xf]
  %s445 = scalar_lea.vmem [#allocation2], 400
  %v446 = vld [vmem:[%s445] ss:$2 sm:$0xf]
  %s447 = scalar_lea.vmem [#allocation2], 416
  %v448 = vld [vmem:[%s447] ss:$2 sm:$0xf]
  %s449 = scalar_lea.vmem [#allocation2], 432
  %v450 = vld [vmem:[%s449] ss:$2 sm:$0xf]
  %s451 = scalar_lea.vmem [#allocation2], 448
  %v452 = vld [vmem:[%s451] ss:$2 sm:$0xf]
  %s453 = scalar_lea.vmem [#allocation2], 464
  %v454 = vld [vmem:[%s453] ss:$2 sm:$0xf]
  %s455 = scalar_lea.vmem [#allocation2], 480
  %v456 = vld [vmem:[%s455] ss:$2 sm:$0xf]
  %s457 = scalar_lea.vmem [#allocation2], 496
  %v458 = vld [vmem:[%s457] ss:$2 sm:$0xf]
  %s459 = scalar_lea.vmem [#allocation2], 1
  %v460 = vld [vmem:[%s459] ss:$2 sm:$0xf]
  %s461 = scalar_lea.vmem [#allocation2], 17
  %v462 = vld [vmem:[%s461] ss:$2 sm:$0xf]
  %s463 = scalar_lea.vmem [#allocation2], 33
  %v464 = vld [vmem:[%s463] ss:$2 sm:$0xf]
  %s465 = scalar_lea.vmem [#allocation2], 49
  %v466 = vld [vmem:[%s465] ss:$2 sm:$0xf]
  %s467 = scalar_lea.vmem [#allocation2], 65
  %v468 = vld [vmem:[%s467] ss:$2 sm:$0xf]
  %s469 = scalar_lea.vmem [#allocation2], 81
  %v470 = vld [vmem:[%s469] ss:$2 sm:$0xf]
  %s471 = scalar_lea.vmem [#allocation2], 97
  %v472 = vld [vmem:[%s471] ss:$2 sm:$0xf]
  %s473 = scalar_lea.vmem [#allocation2], 113
  %v474 = vld [vmem:[%s473] ss:$2 sm:$0xf]
  %s475 = scalar_lea.vmem [#allocation2], 129
  %v476 = vld [vmem:[%s475] ss:$2 sm:$0xf]
  %s477 = scalar_lea.vmem [#allocation2], 145
  %v478 = vld [vmem:[%s477] ss:$2 sm:$0xf]
  %s479 = scalar_lea.vmem [#allocation2], 161
  %v480 = vld [vmem:[%s479] ss:$2 sm:$0xf]
  %s481 = scalar_lea.vmem [#allocation2], 177
  %v482 = vld [vmem:[%s481] ss:$2 sm:$0xf]
  %s483 = scalar_lea.vmem [#allocation2], 193
  %v484 = vld [vmem:[%s483] ss:$2 sm:$0xf]
  %s485 = scalar_lea.vmem [#allocation2], 209
  %v486 = vld [vmem:[%s485] ss:$2 sm:$0xf]
  %s487 = scalar_lea.vmem [#allocation2], 225
  %v488 = vld [vmem:[%s487] ss:$2 sm:$0xf]
  %s489 = scalar_lea.vmem [#allocation2], 241
  %v490 = vld [vmem:[%s489] ss:$2 sm:$0xf]
  %s491 = scalar_lea.vmem [#allocation2], 257
  %v492 = vld [vmem:[%s491] ss:$2 sm:$0xf]
  %s493 = scalar_lea.vmem [#allocation2], 273
  %v494 = vld [vmem:[%s493] ss:$2 sm:$0xf]
  %s495 = scalar_lea.vmem [#allocation2], 289
  %v496 = vld [vmem:[%s495] ss:$2 sm:$0xf]
  %s497 = scalar_lea.vmem [#allocation2], 305
  %v498 = vld [vmem:[%s497] ss:$2 sm:$0xf]
  %s499 = scalar_lea.vmem [#allocation2], 321
  %v500 = vld [vmem:[%s499] ss:$2 sm:$0xf]
  %s501 = scalar_lea.vmem [#allocation2], 337
  %v502 = vld [vmem:[%s501] ss:$2 sm:$0xf]
  %s503 = scalar_lea.vmem [#allocation2], 353
  %v504 = vld [vmem:[%s503] ss:$2 sm:$0xf]
  %s505 = scalar_lea.vmem [#allocation2], 369
  %v506 = vld [vmem:[%s505] ss:$2 sm:$0xf]
  %s507 = scalar_lea.vmem [#allocation2], 385
  %v508 = vld [vmem:[%s507] ss:$2 sm:$0xf]
  %s509 = scalar_lea.vmem [#allocation2], 401
  %v510 = vld [vmem:[%s509] ss:$2 sm:$0xf]
  %s511 = scalar_lea.vmem [#allocation2], 417
  %v512 = vld [vmem:[%s511] ss:$2 sm:$0xf]
  %s513 = scalar_lea.vmem [#allocation2], 433
  %v514 = vld [vmem:[%s513] ss:$2 sm:$0xf]
  %s515 = scalar_lea.vmem [#allocation2], 449
  %v516 = vld [vmem:[%s515] ss:$2 sm:$0xf]
  %s517 = scalar_lea.vmem [#allocation2], 465
  %v518 = vld [vmem:[%s517] ss:$2 sm:$0xf]
  %s519 = scalar_lea.vmem [#allocation2], 481
  %v520 = vld [vmem:[%s519] ss:$2 sm:$0xf]
  %s521 = scalar_lea.vmem [#allocation2], 497
  %v522 = vld [vmem:[%s521] ss:$2 sm:$0xf]
  %v523 = vmax.f32 %v396, %v460
  %v524 = vmax.f32 %v398, %v462
  %v525 = vmax.f32 %v400, %v464
  %v526 = vmax.f32 %v402, %v466
  %v527 = vmax.f32 %v404, %v468
  %v528 = vmax.f32 %v406, %v470
  %v529 = vmax.f32 %v408, %v472
  %v530 = vmax.f32 %v410, %v474
  %v531 = vmax.f32 %v412, %v476
  %v532 = vmax.f32 %v414, %v478
  %v533 = vmax.f32 %v416, %v480
  %v534 = vmax.f32 %v418, %v482
  %v535 = vmax.f32 %v420, %v484
  %v536 = vmax.f32 %v422, %v486
  %v537 = vmax.f32 %v424, %v488
  %v538 = vmax.f32 %v426, %v490
  %v539 = vmax.f32 %v428, %v492
  %v540 = vmax.f32 %v430, %v494
  %v541 = vmax.f32 %v432, %v496
  %v542 = vmax.f32 %v434, %v498
  %v543 = vmax.f32 %v436, %v500
  %v544 = vmax.f32 %v438, %v502
  %v545 = vmax.f32 %v440, %v504
  %v546 = vmax.f32 %v442, %v506
  %v547 = vmax.f32 %v444, %v508
  %v548 = vmax.f32 %v446, %v510
  %v549 = vmax.f32 %v448, %v512
  %v550 = vmax.f32 %v450, %v514
  %v551 = vmax.f32 %v452, %v516
  %v552 = vmax.f32 %v454, %v518
  %v553 = vmax.f32 %v456, %v520
  %v554 = vmax.f32 %v458, %v522
  %s555 = scalar_lea.vmem [#allocation2], 2
  %v556 = vld [vmem:[%s555] ss:$2 sm:$0xf]
  %s557 = scalar_lea.vmem [#allocation2], 18
  %v558 = vld [vmem:[%s557] ss:$2 sm:$0xf]
  %s559 = scalar_lea.vmem [#allocation2], 34
  %v560 = vld [vmem:[%s559] ss:$2 sm:$0xf]
  %s561 = scalar_lea.vmem [#allocation2], 50
  %v562 = vld [vmem:[%s561] ss:$2 sm:$0xf]
  %s563 = scalar_lea.vmem [#allocation2], 66
  %v564 = vld [vmem:[%s563] ss:$2 sm:$0xf]
  %s565 = scalar_lea.vmem [#allocation2], 82
  %v566 = vld [vmem:[%s565] ss:$2 sm:$0xf]
  %s567 = scalar_lea.vmem [#allocation2], 98
  %v568 = vld [vmem:[%s567] ss:$2 sm:$0xf]
  %s569 = scalar_lea.vmem [#allocation2], 114
  %v570 = vld [vmem:[%s569] ss:$2 sm:$0xf]
  %s571 = scalar_lea.vmem [#allocation2], 130
  %v572 = vld [vmem:[%s571] ss:$2 sm:$0xf]
  %s573 = scalar_lea.vmem [#allocation2], 146
  %v574 = vld [vmem:[%s573] ss:$2 sm:$0xf]
  %s575 = scalar_lea.vmem [#allocation2], 162
  %v576 = vld [vmem:[%s575] ss:$2 sm:$0xf]
  %s577 = scalar_lea.vmem [#allocation2], 178
  %v578 = vld [vmem:[%s577] ss:$2 sm:$0xf]
  %s579 = scalar_lea.vmem [#allocation2], 194
  %v580 = vld [vmem:[%s579] ss:$2 sm:$0xf]
  %s581 = scalar_lea.vmem [#allocation2], 210
  %v582 = vld [vmem:[%s581] ss:$2 sm:$0xf]
  %s583 = scalar_lea.vmem [#allocation2], 226
  %v584 = vld [vmem:[%s583] ss:$2 sm:$0xf]
  %s585 = scalar_lea.vmem [#allocation2], 242
  %v586 = vld [vmem:[%s585] ss:$2 sm:$0xf]
  %s587 = scalar_lea.vmem [#allocation2], 258
  %v588 = vld [vmem:[%s587] ss:$2 sm:$0xf]
  %s589 = scalar_lea.vmem [#allocation2], 274
  %v590 = vld [vmem:[%s589] ss:$2 sm:$0xf]
  %s591 = scalar_lea.vmem [#allocation2], 290
  %v592 = vld [vmem:[%s591] ss:$2 sm:$0xf]
  %s593 = scalar_lea.vmem [#allocation2], 306
  %v594 = vld [vmem:[%s593] ss:$2 sm:$0xf]
  %s595 = scalar_lea.vmem [#allocation2], 322
  %v596 = vld [vmem:[%s595] ss:$2 sm:$0xf]
  %s597 = scalar_lea.vmem [#allocation2], 338
  %v598 = vld [vmem:[%s597] ss:$2 sm:$0xf]
  %s599 = scalar_lea.vmem [#allocation2], 354
  %v600 = vld [vmem:[%s599] ss:$2 sm:$0xf]
  %s601 = scalar_lea.vmem [#allocation2], 370
  %v602 = vld [vmem:[%s601] ss:$2 sm:$0xf]
  %s603 = scalar_lea.vmem [#allocation2], 386
  %v604 = vld [vmem:[%s603] ss:$2 sm:$0xf]
  %s605 = scalar_lea.vmem [#allocation2], 402
  %v606 = vld [vmem:[%s605] ss:$2 sm:$0xf]
  %s607 = scalar_lea.vmem [#allocation2], 418
  %v608 = vld [vmem:[%s607] ss:$2 sm:$0xf]
  %s609 = scalar_lea.vmem [#allocation2], 434
  %v610 = vld [vmem:[%s609] ss:$2 sm:$0xf]
  %s611 = scalar_lea.vmem [#allocation2], 450
  %v612 = vld [vmem:[%s611] ss:$2 sm:$0xf]
  %s613 = scalar_lea.vmem [#allocation2], 466
  %v614 = vld [vmem:[%s613] ss:$2 sm:$0xf]
  %s615 = scalar_lea.vmem [#allocation2], 482
  %v616 = vld [vmem:[%s615] ss:$2 sm:$0xf]
  %s617 = scalar_lea.vmem [#allocation2], 498
  %v618 = vld [vmem:[%s617] ss:$2 sm:$0xf]
  %v619 = vmax.f32 %v523, %v556
  %v620 = vmax.f32 %v524, %v558
  %v621 = vmax.f32 %v525, %v560
  %v622 = vmax.f32 %v526, %v562
  %v623 = vmax.f32 %v527, %v564
  %v624 = vmax.f32 %v528, %v566
  %v625 = vmax.f32 %v529, %v568
  %v626 = vmax.f32 %v530, %v570
  %v627 = vmax.f32 %v531, %v572
  %v628 = vmax.f32 %v532, %v574
  %v629 = vmax.f32 %v533, %v576
  %v630 = vmax.f32 %v534, %v578
  %v631 = vmax.f32 %v535, %v580
  %v632 = vmax.f32 %v536, %v582
  %v633 = vmax.f32 %v537, %v584
  %v634 = vmax.f32 %v538, %v586
  %v635 = vmax.f32 %v539, %v588
  %v636 = vmax.f32 %v540, %v590
  %v637 = vmax.f32 %v541, %v592
  %v638 = vmax.f32 %v542, %v594
  %v639 = vmax.f32 %v543, %v596
  %v640 = vmax.f32 %v544, %v598
  %v641 = vmax.f32 %v545, %v600
  %v642 = vmax.f32 %v546, %v602
  %v643 = vmax.f32 %v547, %v604
  %v644 = vmax.f32 %v548, %v606
  %v645 = vmax.f32 %v549, %v608
  %v646 = vmax.f32 %v550, %v610
  %v647 = vmax.f32 %v551, %v612
  %v648 = vmax.f32 %v552, %v614
  %v649 = vmax.f32 %v553, %v616
  %v650 = vmax.f32 %v554, %v618
  %vm651 = vcmask 60416
  %652 = vst.msk [vmem:[%s1] sm:$0xf] %vm651, %v619
  %653 = vst.msk [vmem:[%s1 + $0x4] sm:$0xf] %vm651, %v620
  %654 = vst.msk [vmem:[%s1 + $0x8] sm:$0xf] %vm651, %v621
  %655 = vst.msk [vmem:[%s1 + $0xc] sm:$0xf] %vm651, %v622
  %656 = vst.msk [vmem:[%s1 + $0x10] sm:$0xf] %vm651, %v623
  %657 = vst.msk [vmem:[%s1 + $0x14] sm:$0xf] %vm651, %v624
  %658 = vst.msk [vmem:[%s1 + $0x18] sm:$0xf] %vm651, %v625
  %659 = vst.msk [vmem:[%s1 + $0x1c] sm:$0xf] %vm651, %v626
  %660 = vst.msk [vmem:[%s1 + $0x20] sm:$0xf] %vm651, %v627
  %661 = vst.msk [vmem:[%s1 + $0x24] sm:$0xf] %vm651, %v628
  %662 = vst.msk [vmem:[%s1 + $0x28] sm:$0xf] %vm651, %v629
  %663 = vst.msk [vmem:[%s1 + $0x2c] sm:$0xf] %vm651, %v630
  %664 = vst.msk [vmem:[%s1 + $0x30] sm:$0xf] %vm651, %v631
  %665 = vst.msk [vmem:[%s1 + $0x34] sm:$0xf] %vm651, %v632
  %666 = vst.msk [vmem:[%s1 + $0x38] sm:$0xf] %vm651, %v633
  %667 = vst.msk [vmem:[%s1 + $0x3c] sm:$0xf] %vm651, %v634
  %668 = vst.msk [vmem:[%s1 + $0x40] sm:$0xf] %vm651, %v635
  %669 = vst.msk [vmem:[%s1 + $0x44] sm:$0xf] %vm651, %v636
  %670 = vst.msk [vmem:[%s1 + $0x48] sm:$0xf] %vm651, %v637
  %671 = vst.msk [vmem:[%s1 + $0x4c] sm:$0xf] %vm651, %v638
  %672 = vst.msk [vmem:[%s1 + $0x50] sm:$0xf] %vm651, %v639
  %673 = vst.msk [vmem:[%s1 + $0x54] sm:$0xf] %vm651, %v640
  %674 = vst.msk [vmem:[%s1 + $0x58] sm:$0xf] %vm651, %v641
  %675 = vst.msk [vmem:[%s1 + $0x5c] sm:$0xf] %vm651, %v642
  %676 = vst.msk [vmem:[%s1 + $0x60] sm:$0xf] %vm651, %v643
  %677 = vst.msk [vmem:[%s1 + $0x64] sm:$0xf] %vm651, %v644
  %678 = vst.msk [vmem:[%s1 + $0x68] sm:$0xf] %vm651, %v645
  %679 = vst.msk [vmem:[%s1 + $0x6c] sm:$0xf] %vm651, %v646
  %680 = vst.msk [vmem:[%s1 + $0x70] sm:$0xf] %vm651, %v647
  %681 = vst.msk [vmem:[%s1 + $0x74] sm:$0xf] %vm651, %v648
  %682 = vst.msk [vmem:[%s1 + $0x78] sm:$0xf] %vm651, %v649
  %683 = vst.msk [vmem:[%s1 + $0x7c] sm:$0xf] %vm651, %v650
  // Predicated region
  $region6: #{_lambda_.8} parent=0 // pred_check
    _
  $region7: #{_lambda_.8} parent=0 // pred_check_branch
    %685 = sbr.rel (0) target = $region9
  $region8: #{_lambda_.8} parent=0 // pred_region
    _
  $region9: #{_lambda_.8} parent=0 // pred_fallthru
    _
  // Predicated region
  $region10: #{_lambda_.8} parent=0 // pred_check
    _
  $region11: #{_lambda_.8} parent=0 // pred_check_branch
    %687 = sbr.rel (0) target = $region13
  $region12: #{_lambda_.8} parent=0 // pred_region
    _
  $region13: #{_lambda_.8} parent=0 // pred_fallthru
    _

// kernel: _lambda_.9
$region0: #{_lambda_.9}
  #allocation0 [shape = 'u32[]', space=smem, size = 0x4, offset = 0x4, fixed_abs, tag = 'smem constant byte address 0x4 - core index']
  #allocation1 [shape = 'u32[144,128]{1,0:T(1,128)}', space=vmem, size = 0x12000, scoped, tag = 'internal scratch']
  %s0 = inlined_call_operand.vmem [shape: f32[128,72], index: 0, kind: input, shape index: {}]
  %s1 = inlined_call_operand.vmem [shape: bf16[72,128], index: 1, kind: input, shape index: {}]
  %s2 = inlined_call_operand.vmem [shape: f32[1,128], index: 2, kind: input, shape index: {}]
  %s3 = inlined_call_operand.vmem [shape: f32[128,128], index: 3, kind: output, shape index: {}]
  %s4 = sld [smem:[#allocation0]]
  $region22: #{_lambda_.9} parent=0
    _
  %s6 = ssub.s32 1, %s4
  %s7 = scalar_select 0, %s6, %s4
  // Predicated region
  $region2: #{_lambda_.9} parent=0 // pred_check
    _
  $region3: #{_lambda_.9} parent=0 // pred_check_branch
    %9 = sbr.rel (0) target = $region5
  $region4: #{_lambda_.9} parent=0 // pred_region
    _
  $region5: #{_lambda_.9} parent=0 // pred_fallthru
    _
  // Predicated region
  $region6: #{_lambda_.9} parent=0 // pred_check
    _
  $region7: #{_lambda_.9} parent=0 // pred_check_branch
    %11 = sbr.rel (0) target = $region9
  $region8: #{_lambda_.9} parent=0 // pred_region
    _
  $region9: #{_lambda_.9} parent=0 // pred_fallthru
    _
  // Predicated region
  $region10: #{_lambda_.9} parent=0 // pred_check
    _
  $region11: #{_lambda_.9} parent=0 // pred_check_branch
    %13 = sbr.rel (0) target = $region13
  $region12: #{_lambda_.9} parent=0 // pred_region
    _
  $region13: #{_lambda_.9} parent=0 // pred_fallthru
    _
  %v15 = vld [vmem:[%s0] sm:$0xff]
  %v16 = vld [vmem:[%s0 + $0x8] sm:$0xff]
  %v17 = vld [vmem:[%s0 + $0x10] sm:$0xff]
  %v18 = vld [vmem:[%s0 + $0x18] sm:$0xff]
  %v19 = vld [vmem:[%s0 + $0x20] sm:$0xff]
  %v20 = vld [vmem:[%s0 + $0x28] sm:$0xff]
  %v21 = vld [vmem:[%s0 + $0x30] sm:$0xff]
  %v22 = vld [vmem:[%s0 + $0x38] sm:$0xff]
  %v23 = vld [vmem:[%s0 + $0x40] sm:$0xff]
  %v24 = vld [vmem:[%s0 + $0x48] sm:$0xff]
  %v25 = vld [vmem:[%s0 + $0x50] sm:$0xff]
  %v26 = vld [vmem:[%s0 + $0x58] sm:$0xff]
  %v27 = vld [vmem:[%s0 + $0x60] sm:$0xff]
  %v28 = vld [vmem:[%s0 + $0x68] sm:$0xff]
  %v29 = vld [vmem:[%s0 + $0x70] sm:$0xff]
  %v30 = vld [vmem:[%s0 + $0x78] sm:$0xff]
  %v31 = vpack.c.bf16 %v16, %v15
  %v32 = vpack.c.bf16 %v18, %v17
  %v33 = vpack.c.bf16 %v20, %v19
  %v34 = vpack.c.bf16 %v22, %v21
  %v35 = vpack.c.bf16 %v24, %v23
  %v36 = vpack.c.bf16 %v26, %v25
  %v37 = vpack.c.bf16 %v28, %v27
  %v38 = vpack.c.bf16 %v30, %v29
  %v39 = vld [vmem:[%s1] sm:$0xf]
  %v40 = vld [vmem:[%s1 + $0x4] sm:$0xf]
  %v41 = vld [vmem:[%s1 + $0x8] sm:$0xf]
  %v42 = vld [vmem:[%s1 + $0xc] sm:$0xf]
  %v43 = vld [vmem:[%s1 + $0x10] sm:$0xf]
  %v44 = vld [vmem:[%s1 + $0x14] sm:$0xf]
  %v45 = vld [vmem:[%s1 + $0x18] sm:$0xf]
  %v46 = vld [vmem:[%s1 + $0x1c] sm:$0xf]
  %v47 = vld [vmem:[%s1 + $0x20] sm:$0xf]
  %v48 = vld [vmem:[%s2] sm:$0x1]
  %v50 = vlaneseq
  %v51 = vshrl.u32 %v50, 7
  %v52 = vsub.s32 0, %v51
  %v53 = vrot.slane %v48, %v52
  %v64 = vunpack.c.l.b16 %v39
  %v65 = vunpack.c.l.b16 %v40
  %v66 = vunpack.c.l.b16 %v41
  %v67 = vunpack.c.l.b16 %v42
  %v68 = vunpack.c.l.b16 %v43
  %v69 = vunpack.c.l.b16 %v44
  %v70 = vunpack.c.l.b16 %v45
  %v71 = vunpack.c.l.b16 %v46
  %v72 = vunpack.c.l.b16 %v47
  %v73 = vpack.c.b16 %v65, %v64
  %v74 = vpack.c.b16 %v67, %v66
  %v75 = vpack.c.b16 %v69, %v68
  %v76 = vpack.c.b16 %v71, %v70
  %v77 = vpack.c.b16 %v72, %v72
  %vm82 = vcmask 588800
  %v84 = vsel %vm82, %v31, 0
  %v87 = vsel %vm82, %v32, 0
  %v90 = vsel %vm82, %v33, 0
  %v93 = vsel %vm82, %v34, 0
  %v96 = vsel %vm82, %v35, 0
  %v99 = vsel %vm82, %v36, 0
  %v102 = vsel %vm82, %v37, 0
  %v105 = vsel %vm82, %v38, 0
  %vm107 = vcmask 1043456
  %v109 = vsel %vm107, %v77, 0
  %111 = vmatprep.subr.bf16.mxu0 0
  %112 = vmatpush1.bf16.msra.mxu0 %v73
  %113 = vmatprep.subr.bf16.mxu0 0
  %114 = vmatpush1.bf16.msra.mxu0 %v74
  %115 = vmatprep.subr.bf16.mxu0 0
  %116 = vmatpush1.bf16.msra.mxu0 %v75
  %117 = vmatprep.subr.bf16.mxu0 0
  %118 = vmatpush1.bf16.msra.mxu0 %v76
  %119 = vmatprep.subr.bf16.mxu0 0
  %120 = vmatpush1.bf16.msra.mxu0 %v109
  %121 = vmatprep.subr.bf16.mxu0 0
  %122 = vmatpush1.bf16.msra.mxu0 0
  %123 = vmatprep.subr.bf16.mxu0 0
  %124 = vmatpush1.bf16.msra.mxu0 0
  %125 = vmatprep.subr.bf16.mxu0 0
  %126 = vmatpush1.bf16.msra.mxu0 0
  %127 = vmatprep.subr.bf16.mxu0 0
  %128 = vmatpush1.bf16.msra.mxu0 0
  %129 = vmatprep.subr.bf16.mxu0 0
  %130 = vmatpush1.bf16.msra.mxu0 0
  %131 = vmatprep.subr.bf16.mxu0 0
  %132 = vmatpush1.bf16.msra.mxu0 0
  %133 = vmatprep.subr.bf16.mxu0 0
  %134 = vmatpush1.bf16.msra.mxu0 0
  %135 = vmatprep.subr.bf16.mxu0 0
  %136 = vmatpush1.bf16.msra.mxu0 0
  %137 = vmatprep.subr.bf16.mxu0 0
  %138 = vmatpush1.bf16.msra.mxu0 0
  %139 = vmatprep.subr.bf16.mxu0 0
  %140 = vmatpush1.bf16.msra.mxu0 0
  %141 = vmatprep.subr.bf16.mxu0 0
  %142 = vmatpush1.bf16.msra.mxu0 0
  %143 = vmatprep.mubr.bf16.mxu0 0
  %144 = vmatmul.mubr.bf16.gmra.mrb[0].mxu0 %v84
  %v145 = vpop.f32.mrb[0].mxu0
  %v146 = vadd.f32 %v53, %v145
  %v147 = vpop.f32.mrb[0].mxu0
  %v148 = vpop.f32.mrb[0].mxu0
  %v149 = vadd.f32 %v53, %v148
  %v150 = vpop.f32.mrb[0].mxu0
  %151 = vmatprep.mubr.bf16.mxu0 0
  %152 = vmatmul.mubr.bf16.gmra.mrb[0].mxu0 %v87
  %v153 = vpop.f32.mrb[0].mxu0
  %v154 = vadd.f32 %v53, %v153
  %v155 = vpop.f32.mrb[0].mxu0
  %v156 = vpop.f32.mrb[0].mxu0
  %v157 = vadd.f32 %v53, %v156
  %v158 = vpop.f32.mrb[0].mxu0
  %159 = vmatprep.mubr.bf16.mxu0 0
  %160 = vmatmul.mubr.bf16.gmra.mrb[0].mxu0 %v90
  %v161 = vpop.f32.mrb[0].mxu0
  %v162 = vadd.f32 %v53, %v161
  %v163 = vpop.f32.mrb[0].mxu0
  %v164 = vpop.f32.mrb[0].mxu0
  %v165 = vadd.f32 %v53, %v164
  %v166 = vpop.f32.mrb[0].mxu0
  %167 = vmatprep.mubr.bf16.mxu0 0
  %168 = vmatmul.mubr.bf16.gmra.mrb[0].mxu0 %v93
  %v169 = vpop.f32.mrb[0].mxu0
  %v170 = vadd.f32 %v53, %v169
  %v171 = vpop.f32.mrb[0].mxu0
  %v172 = vpop.f32.mrb[0].mxu0
  %v173 = vadd.f32 %v53, %v172
  %v174 = vpop.f32.mrb[0].mxu0
  %175 = vmatprep.mubr.bf16.mxu0 0
  %176 = vmatmul.mubr.bf16.gmra.mrb[0].mxu0 %v96
  %v177 = vpop.f32.mrb[0].mxu0
  %v178 = vadd.f32 %v53, %v177
  %v179 = vpop.f32.mrb[0].mxu0
  %v180 = vpop.f32.mrb[0].mxu0
  %v181 = vadd.f32 %v53, %v180
  %v182 = vpop.f32.mrb[0].mxu0
  %183 = vmatprep.mubr.bf16.mxu0 0
  %184 = vmatmul.mubr.bf16.gmra.mrb[0].mxu0 %v99
  %v185 = vpop.f32.mrb[0].mxu0
  %v186 = vadd.f32 %v53, %v185
  %v187 = vpop.f32.mrb[0].mxu0
  %v188 = vpop.f32.mrb[0].mxu0
  %v189 = vadd.f32 %v53, %v188
  %v190 = vpop.f32.mrb[0].mxu0
  %191 = vmatprep.mubr.bf16.mxu0 0
  %192 = vmatmul.mubr.bf16.gmra.mrb[0].mxu0 %v102
  %v193 = vpop.f32.mrb[0].mxu0
  %v194 = vadd.f32 %v53, %v193
  %v195 = vpop.f32.mrb[0].mxu0
  %v196 = vpop.f32.mrb[0].mxu0
  %v197 = vadd.f32 %v53, %v196
  %v198 = vpop.f32.mrb[0].mxu0
  %199 = vmatprep.mubr.bf16.mxu0 0
  %200 = vmatmul.mubr.bf16.gmra.mrb[0].mxu0 %v105
  %v201 = vpop.f32.mrb[0].mxu0
  %v202 = vadd.f32 %v53, %v201
  %v203 = vpop.f32.mrb[0].mxu0
  %v204 = vpop.f32.mrb[0].mxu0
  %v205 = vadd.f32 %v53, %v204
  %v206 = vpop.f32.mrb[0].mxu0
  %207 = vdwg.mxu0
  %v208 = vmax.f32 %v146, 0.0
  %v209 = vmax.f32 %v149, 0.0
  %v210 = vmax.f32 %v154, 0.0
  %v211 = vmax.f32 %v157, 0.0
  %v212 = vmax.f32 %v162, 0.0
  %v213 = vmax.f32 %v165, 0.0
  %v214 = vmax.f32 %v170, 0.0
  %v215 = vmax.f32 %v173, 0.0
  %v216 = vmax.f32 %v178, 0.0
  %v217 = vmax.f32 %v181, 0.0
  %v218 = vmax.f32 %v186, 0.0
  %v219 = vmax.f32 %v189, 0.0
  %v220 = vmax.f32 %v194, 0.0
  %v221 = vmax.f32 %v197, 0.0
  %v222 = vmax.f32 %v202, 0.0
  %v223 = vmax.f32 %v205, 0.0
  %224 = vst [vmem:[%s3] sm:$0xff] %v208
  %225 = vst [vmem:[%s3 + $0x8] sm:$0xff] %v209
  %226 = vst [vmem:[%s3 + $0x10] sm:$0xff] %v210
  %227 = vst [vmem:[%s3 + $0x18] sm:$0xff] %v211
  %228 = vst [vmem:[%s3 + $0x20] sm:$0xff] %v212
  %229 = vst [vmem:[%s3 + $0x28] sm:$0xff] %v213
  %230 = vst [vmem:[%s3 + $0x30] sm:$0xff] %v214
  %231 = vst [vmem:[%s3 + $0x38] sm:$0xff] %v215
  %232 = vst [vmem:[%s3 + $0x40] sm:$0xff] %v216
  %233 = vst [vmem:[%s3 + $0x48] sm:$0xff] %v217
  %234 = vst [vmem:[%s3 + $0x50] sm:$0xff] %v218
  %235 = vst [vmem:[%s3 + $0x58] sm:$0xff] %v219
  %236 = vst [vmem:[%s3 + $0x60] sm:$0xff] %v220
  %237 = vst [vmem:[%s3 + $0x68] sm:$0xff] %v221
  %238 = vst [vmem:[%s3 + $0x70] sm:$0xff] %v222
  %239 = vst [vmem:[%s3 + $0x78] sm:$0xff] %v223
  // Predicated region
  $region14: #{_lambda_.9} parent=0 // pred_check
    _
  $region15: #{_lambda_.9} parent=0 // pred_check_branch
    %241 = sbr.rel (0) target = $region17
  $region16: #{_lambda_.9} parent=0 // pred_region
    _
  $region17: #{_lambda_.9} parent=0 // pred_fallthru
    _
  // Predicated region
  $region18: #{_lambda_.9} parent=0 // pred_check
    _
  $region19: #{_lambda_.9} parent=0 // pred_check_branch
    %243 = sbr.rel (0) target = $region21
  $region20: #{_lambda_.9} parent=0 // pred_region
    _
  $region21: #{_lambda_.9} parent=0 // pred_fallthru
    _

// kernel: _lambda_.10
$region0: #{_lambda_.10}
  #allocation0 [shape = 'u32[]', space=smem, size = 0x4, offset = 0x4, fixed_abs, tag = 'smem constant byte address 0x4 - core index']
  #allocation1 [shape = 'u32[144,128]{1,0:T(1,128)}', space=vmem, size = 0x12000, scoped, tag = 'internal scratch']
  %s0 = inlined_call_operand.vmem [shape: f32[128,72], index: 0, kind: input, shape index: {}]
  %s1 = inlined_call_operand.vmem [shape: bf16[72,128], index: 1, kind: input, shape index: {}]
  %s2 = inlined_call_operand.vmem [shape: f32[1,128], index: 2, kind: input, shape index: {}]
  %s3 = inlined_call_operand.vmem [shape: f32[128,128], index: 3, kind: input, shape index: {}]
  %s4 = inlined_call_operand.vmem [shape: bf16[128,128], index: 4, kind: input, shape index: {}]
  %s5 = inlined_call_operand.vmem [shape: f32[1,128], index: 5, kind: input, shape index: {}]
  %s6 = inlined_call_operand.vmem [shape: f32[8,128], index: 6, kind: output, shape index: {}]
  %s7 = sld [smem:[#allocation0]]
  $region34: #{_lambda_.10} parent=0
    _
  %s9 = ssub.s32 1, %s7
  %s10 = scalar_select 0, %s9, %s7
  // Predicated region
  $region2: #{_lambda_.10} parent=0 // pred_check
    _
  $region3: #{_lambda_.10} parent=0 // pred_check_branch
    %12 = sbr.rel (0) target = $region5
  $region4: #{_lambda_.10} parent=0 // pred_region
    _
  $region5: #{_lambda_.10} parent=0 // pred_fallthru
    _
  // Predicated region
  $region6: #{_lambda_.10} parent=0 // pred_check
    _
  $region7: #{_lambda_.10} parent=0 // pred_check_branch
    %14 = sbr.rel (0) target = $region9
  $region8: #{_lambda_.10} parent=0 // pred_region
    _
  $region9: #{_lambda_.10} parent=0 // pred_fallthru
    _
  // Predicated region
  $region10: #{_lambda_.10} parent=0 // pred_check
    _
  $region11: #{_lambda_.10} parent=0 // pred_check_branch
    %16 = sbr.rel (0) target = $region13
  $region12: #{_lambda_.10} parent=0 // pred_region
    _
  $region13: #{_lambda_.10} parent=0 // pred_fallthru
    _
  // Predicated region
  $region14: #{_lambda_.10} parent=0 // pred_check
    _
  $region15: #{_lambda_.10} parent=0 // pred_check_branch
    %18 = sbr.rel (0) target = $region17
  $region16: #{_lambda_.10} parent=0 // pred_region
    _
  $region17: #{_lambda_.10} parent=0 // pred_fallthru
    _
  // Predicated region
  $region18: #{_lambda_.10} parent=0 // pred_check
    _
  $region19: #{_lambda_.10} parent=0 // pred_check_branch
    %20 = sbr.rel (0) target = $region21
  $region20: #{_lambda_.10} parent=0 // pred_region
    _
  $region21: #{_lambda_.10} parent=0 // pred_fallthru
    _
  // Predicated region
  $region22: #{_lambda_.10} parent=0 // pred_check
    _
  $region23: #{_lambda_.10} parent=0 // pred_check_branch
    %22 = sbr.rel (0) target = $region25
  $region24: #{_lambda_.10} parent=0 // pred_region
    _
  $region25: #{_lambda_.10} parent=0 // pred_fallthru
    _
  %v24 = vld [vmem:[%s0] sm:$0xff]
  %v25 = vld [vmem:[%s0 + $0x8] sm:$0xff]
  %v26 = vld [vmem:[%s0 + $0x10] sm:$0xff]
  %v27 = vld [vmem:[%s0 + $0x18] sm:$0xff]
  %v28 = vld [vmem:[%s0 + $0x20] sm:$0xff]
  %v29 = vld [vmem:[%s0 + $0x28] sm:$0xff]
  %v30 = vld [vmem:[%s0 + $0x30] sm:$0xff]
  %v31 = vld [vmem:[%s0 + $0x38] sm:$0xff]
  %v32 = vld [vmem:[%s0 + $0x40] sm:$0xff]
  %v33 = vld [vmem:[%s0 + $0x48] sm:$0xff]
  %v34 = vld [vmem:[%s0 + $0x50] sm:$0xff]
  %v35 = vld [vmem:[%s0 + $0x58] sm:$0xff]
  %v36 = vld [vmem:[%s0 + $0x60] sm:$0xff]
  %v37 = vld [vmem:[%s0 + $0x68] sm:$0xff]
  %v38 = vld [vmem:[%s0 + $0x70] sm:$0xff]
  %v39 = vld [vmem:[%s0 + $0x78] sm:$0xff]
  %v40 = vpack.c.bf16 %v25, %v24
  %v41 = vpack.c.bf16 %v27, %v26
  %v42 = vpack.c.bf16 %v29, %v28
  %v43 = vpack.c.bf16 %v31, %v30
  %v44 = vpack.c.bf16 %v33, %v32
  %v45 = vpack.c.bf16 %v35, %v34
  %v46 = vpack.c.bf16 %v37, %v36
  %v47 = vpack.c.bf16 %v39, %v38
  %v48 = vld [vmem:[%s1] sm:$0xf]
  %v49 = vld [vmem:[%s1 + $0x4] sm:$0xf]
  %v50 = vld [vmem:[%s1 + $0x8] sm:$0xf]
  %v51 = vld [vmem:[%s1 + $0xc] sm:$0xf]
  %v52 = vld [vmem:[%s1 + $0x10] sm:$0xf]
  %v53 = vld [vmem:[%s1 + $0x14] sm:$0xf]
  %v54 = vld [vmem:[%s1 + $0x18] sm:$0xf]
  %v55 = vld [vmem:[%s1 + $0x1c] sm:$0xf]
  %v56 = vld [vmem:[%s1 + $0x20] sm:$0xf]
  %v57 = vld [vmem:[%s2] sm:$0x1]
  %v59 = vlaneseq
  %v60 = vshrl.u32 %v59, 7
  %v61 = vsub.s32 0, %v60
  %v62 = vrot.slane %v57, %v61
  %v73 = vunpack.c.l.b16 %v48
  %v74 = vunpack.c.l.b16 %v49
  %v75 = vunpack.c.l.b16 %v50
  %v76 = vunpack.c.l.b16 %v51
  %v77 = vunpack.c.l.b16 %v52
  %v78 = vunpack.c.l.b16 %v53
  %v79 = vunpack.c.l.b16 %v54
  %v80 = vunpack.c.l.b16 %v55
  %v81 = vunpack.c.l.b16 %v56
  %v82 = vpack.c.b16 %v74, %v73
  %v83 = vpack.c.b16 %v76, %v75
  %v84 = vpack.c.b16 %v78, %v77
  %v85 = vpack.c.b16 %v80, %v79
  %v86 = vpack.c.b16 %v81, %v81
  %vm91 = vcmask 588800
  %v93 = vsel %vm91, %v40, 0
  %v96 = vsel %vm91, %v41, 0
  %v99 = vsel %vm91, %v42, 0
  %v102 = vsel %vm91, %v43, 0
  %v105 = vsel %vm91, %v44, 0
  %v108 = vsel %vm91, %v45, 0
  %v111 = vsel %vm91, %v46, 0
  %v114 = vsel %vm91, %v47, 0
  %vm116 = vcmask 1043456
  %v118 = vsel %vm116, %v86, 0
  %120 = vmatprep.subr.bf16.mxu0 0
  %121 = vmatpush1.bf16.msra.mxu0 %v82
  %122 = vmatprep.subr.bf16.mxu0 0
  %123 = vmatpush1.bf16.msra.mxu0 %v83
  %124 = vmatprep.subr.bf16.mxu0 0
  %125 = vmatpush1.bf16.msra.mxu0 %v84
  %126 = vmatprep.subr.bf16.mxu0 0
  %127 = vmatpush1.bf16.msra.mxu0 %v85
  %128 = vmatprep.subr.bf16.mxu0 0
  %129 = vmatpush1.bf16.msra.mxu0 %v118
  %130 = vmatprep.subr.bf16.mxu0 0
  %131 = vmatpush1.bf16.msra.mxu0 0
  %132 = vmatprep.subr.bf16.mxu0 0
  %133 = vmatpush1.bf16.msra.mxu0 0
  %134 = vmatprep.subr.bf16.mxu0 0
  %135 = vmatpush1.bf16.msra.mxu0 0
  %136 = vmatprep.subr.bf16.mxu0 0
  %137 = vmatpush1.bf16.msra.mxu0 0
  %138 = vmatprep.subr.bf16.mxu0 0
  %139 = vmatpush1.bf16.msra.mxu0 0
  %140 = vmatprep.subr.bf16.mxu0 0
  %141 = vmatpush1.bf16.msra.mxu0 0
  %142 = vmatprep.subr.bf16.mxu0 0
  %143 = vmatpush1.bf16.msra.mxu0 0
  %144 = vmatprep.subr.bf16.mxu0 0
  %145 = vmatpush1.bf16.msra.mxu0 0
  %146 = vmatprep.subr.bf16.mxu0 0
  %147 = vmatpush1.bf16.msra.mxu0 0
  %148 = vmatprep.subr.bf16.mxu0 0
  %149 = vmatpush1.bf16.msra.mxu0 0
  %150 = vmatprep.subr.bf16.mxu0 0
  %151 = vmatpush1.bf16.msra.mxu0 0
  %152 = vmatprep.mubr.bf16.mxu0 0
  %153 = vmatmul.mubr.bf16.gmra.mrb[0].mxu0 %v93
  %v154 = vpop.f32.mrb[0].mxu0
  %v155 = vadd.f32 %v62, %v154
  %v156 = vpop.f32.mrb[0].mxu0
  %v157 = vpop.f32.mrb[0].mxu0
  %v158 = vadd.f32 %v62, %v157
  %v159 = vpop.f32.mrb[0].mxu0
  %160 = vmatprep.mubr.bf16.mxu0 0
  %161 = vmatmul.mubr.bf16.gmra.mrb[0].mxu0 %v96
  %v162 = vpop.f32.mrb[0].mxu0
  %v163 = vadd.f32 %v62, %v162
  %v164 = vpop.f32.mrb[0].mxu0
  %v165 = vpop.f32.mrb[0].mxu0
  %v166 = vadd.f32 %v62, %v165
  %v167 = vpop.f32.mrb[0].mxu0
  %168 = vmatprep.mubr.bf16.mxu0 0
  %169 = vmatmul.mubr.bf16.gmra.mrb[0].mxu0 %v99
  %v170 = vpop.f32.mrb[0].mxu0
  %v171 = vadd.f32 %v62, %v170
  %v172 = vpop.f32.mrb[0].mxu0
  %v173 = vpop.f32.mrb[0].mxu0
  %v174 = vadd.f32 %v62, %v173
  %v175 = vpop.f32.mrb[0].mxu0
  %176 = vmatprep.mubr.bf16.mxu0 0
  %177 = vmatmul.mubr.bf16.gmra.mrb[0].mxu0 %v102
  %v178 = vpop.f32.mrb[0].mxu0
  %v179 = vadd.f32 %v62, %v178
  %v180 = vpop.f32.mrb[0].mxu0
  %v181 = vpop.f32.mrb[0].mxu0
  %v182 = vadd.f32 %v62, %v181
  %v183 = vpop.f32.mrb[0].mxu0
  %184 = vmatprep.mubr.bf16.mxu0 0
  %185 = vmatmul.mubr.bf16.gmra.mrb[0].mxu0 %v105
  %v186 = vpop.f32.mrb[0].mxu0
  %v187 = vadd.f32 %v62, %v186
  %v188 = vpop.f32.mrb[0].mxu0
  %v189 = vpop.f32.mrb[0].mxu0
  %v190 = vadd.f32 %v62, %v189
  %v191 = vpop.f32.mrb[0].mxu0
  %192 = vmatprep.mubr.bf16.mxu0 0
  %193 = vmatmul.mubr.bf16.gmra.mrb[0].mxu0 %v108
  %v194 = vpop.f32.mrb[0].mxu0
  %v195 = vadd.f32 %v62, %v194
  %v196 = vpop.f32.mrb[0].mxu0
  %v197 = vpop.f32.mrb[0].mxu0
  %v198 = vadd.f32 %v62, %v197
  %v199 = vpop.f32.mrb[0].mxu0
  %200 = vmatprep.mubr.bf16.mxu0 0
  %201 = vmatmul.mubr.bf16.gmra.mrb[0].mxu0 %v111
  %v202 = vpop.f32.mrb[0].mxu0
  %v203 = vadd.f32 %v62, %v202
  %v204 = vpop.f32.mrb[0].mxu0
  %v205 = vpop.f32.mrb[0].mxu0
  %v206 = vadd.f32 %v62, %v205
  %v207 = vpop.f32.mrb[0].mxu0
  %208 = vmatprep.mubr.bf16.mxu0 0
  %209 = vmatmul.mubr.bf16.gmra.mrb[0].mxu0 %v114
  %v210 = vpop.f32.mrb[0].mxu0
  %v211 = vadd.f32 %v62, %v210
  %v212 = vpop.f32.mrb[0].mxu0
  %v213 = vpop.f32.mrb[0].mxu0
  %v214 = vadd.f32 %v62, %v213
  %v215 = vpop.f32.mrb[0].mxu0
  %216 = vdwg.mxu0
  %v217 = vld [vmem:[%s3] sm:$0xff]
  %v218 = vld [vmem:[%s3 + $0x8] sm:$0xff]
  %v219 = vld [vmem:[%s3 + $0x10] sm:$0xff]
  %v220 = vld [vmem:[%s3 + $0x18] sm:$0xff]
  %v221 = vld [vmem:[%s3 + $0x20] sm:$0xff]
  %v222 = vld [vmem:[%s3 + $0x28] sm:$0xff]
  %v223 = vld [vmem:[%s3 + $0x30] sm:$0xff]
  %v224 = vld [vmem:[%s3 + $0x38] sm:$0xff]
  %v225 = vld [vmem:[%s3 + $0x40] sm:$0xff]
  %v226 = vld [vmem:[%s3 + $0x48] sm:$0xff]
  %v227 = vld [vmem:[%s3 + $0x50] sm:$0xff]
  %v228 = vld [vmem:[%s3 + $0x58] sm:$0xff]
  %v229 = vld [vmem:[%s3 + $0x60] sm:$0xff]
  %v230 = vld [vmem:[%s3 + $0x68] sm:$0xff]
  %v231 = vld [vmem:[%s3 + $0x70] sm:$0xff]
  %v232 = vld [vmem:[%s3 + $0x78] sm:$0xff]
  %v233 = vadd.f32 %v155, %v217
  %v234 = vadd.f32 %v158, %v218
  %v235 = vadd.f32 %v163, %v219
  %v236 = vadd.f32 %v166, %v220
  %v237 = vadd.f32 %v171, %v221
  %v238 = vadd.f32 %v174, %v222
  %v239 = vadd.f32 %v179, %v223
  %v240 = vadd.f32 %v182, %v224
  %v241 = vadd.f32 %v187, %v225
  %v242 = vadd.f32 %v190, %v226
  %v243 = vadd.f32 %v195, %v227
  %v244 = vadd.f32 %v198, %v228
  %v245 = vadd.f32 %v203, %v229
  %v246 = vadd.f32 %v206, %v230
  %v247 = vadd.f32 %v211, %v231
  %v248 = vadd.f32 %v214, %v232
  %v249 = vmax.f32 %v233, 0.0
  %v250 = vmax.f32 %v234, 0.0
  %v251 = vmax.f32 %v235, 0.0
  %v252 = vmax.f32 %v236, 0.0
  %v253 = vmax.f32 %v237, 0.0
  %v254 = vmax.f32 %v238, 0.0
  %v255 = vmax.f32 %v239, 0.0
  %v256 = vmax.f32 %v240, 0.0
  %v257 = vmax.f32 %v241, 0.0
  %v258 = vmax.f32 %v242, 0.0
  %v259 = vmax.f32 %v243, 0.0
  %v260 = vmax.f32 %v244, 0.0
  %v261 = vmax.f32 %v245, 0.0
  %v262 = vmax.f32 %v246, 0.0
  %v263 = vmax.f32 %v247, 0.0
  %v264 = vmax.f32 %v248, 0.0
  %v265 = vadd.f32 %v249, %v250
  %v266 = vrot.slane %v265, 4
  %v267 = vadd.f32 %v265, %v266
  %v268 = vrot.slane %v267, 2
  %v269 = vadd.f32 %v267, %v268
  %v270 = vrot.slane %v269, 1
  %v271 = vadd.f32 %v269, %v270
  %v272 = vadd.f32 %v251, %v252
  %v273 = vrot.slane %v272, 4
  %v274 = vadd.f32 %v272, %v273
  %v275 = vrot.slane %v274, 2
  %v276 = vadd.f32 %v274, %v275
  %v277 = vrot.slane %v276, 1
  %v278 = vadd.f32 %v276, %v277
  %v279 = vadd.f32 %v253, %v254
  %v280 = vrot.slane %v279, 4
  %v281 = vadd.f32 %v279, %v280
  %v282 = vrot.slane %v281, 2
  %v283 = vadd.f32 %v281, %v282
  %v284 = vrot.slane %v283, 1
  %v285 = vadd.f32 %v283, %v284
  %v286 = vadd.f32 %v255, %v256
  %v287 = vrot.slane %v286, 4
  %v288 = vadd.f32 %v286, %v287
  %v289 = vrot.slane %v288, 2
  %v290 = vadd.f32 %v288, %v289
  %v291 = vrot.slane %v290, 1
  %v292 = vadd.f32 %v290, %v291
  %v293 = vadd.f32 %v257, %v258
  %v294 = vrot.slane %v293, 4
  %v295 = vadd.f32 %v293, %v294
  %v296 = vrot.slane %v295, 2
  %v297 = vadd.f32 %v295, %v296
  %v298 = vrot.slane %v297, 1
  %v299 = vadd.f32 %v297, %v298
  %v300 = vadd.f32 %v259, %v260
  %v301 = vrot.slane %v300, 4
  %v302 = vadd.f32 %v300, %v301
  %v303 = vrot.slane %v302, 2
  %v304 = vadd.f32 %v302, %v303
  %v305 = vrot.slane %v304, 1
  %v306 = vadd.f32 %v304, %v305
  %v307 = vadd.f32 %v261, %v262
  %v308 = vrot.slane %v307, 4
  %v309 = vadd.f32 %v307, %v308
  %v310 = vrot.slane %v309, 2
  %v311 = vadd.f32 %v309, %v310
  %v312 = vrot.slane %v311, 1
  %v313 = vadd.f32 %v311, %v312
  %v314 = vadd.f32 %v263, %v264
  %v315 = vrot.slane %v314, 4
  %v316 = vadd.f32 %v314, %v315
  %v317 = vrot.slane %v316, 2
  %v318 = vadd.f32 %v316, %v317
  %v319 = vrot.slane %v318, 1
  %v320 = vadd.f32 %v318, %v319
  %v321 = vrcp.pop 16.0
  %v322 = vmul.f32 %v271, %v321
  %v323 = vmul.f32 %v278, %v321
  %v324 = vmul.f32 %v285, %v321
  %v325 = vmul.f32 %v292, %v321
  %v326 = vmul.f32 %v299, %v321
  %v327 = vmul.f32 %v306, %v321
  %v328 = vmul.f32 %v313, %v321
  %v329 = vmul.f32 %v320, %v321
  %v330 = vpack.c.bf16 %v322, %v322
  %v331 = vpack.c.bf16 %v323, %v323
  %v332 = vpack.c.bf16 %v324, %v324
  %v333 = vpack.c.bf16 %v325, %v325
  %v334 = vpack.c.bf16 %v326, %v326
  %v335 = vpack.c.bf16 %v327, %v327
  %v336 = vpack.c.bf16 %v328, %v328
  %v337 = vpack.c.bf16 %v329, %v329
  %v338 = vld [vmem:[%s4] sm:$0xf]
  %v339 = vld [vmem:[%s4 + $0x4] sm:$0xf]
  %v340 = vld [vmem:[%s4 + $0x8] sm:$0xf]
  %v341 = vld [vmem:[%s4 + $0xc] sm:$0xf]
  %v342 = vld [vmem:[%s4 + $0x10] sm:$0xf]
  %v343 = vld [vmem:[%s4 + $0x14] sm:$0xf]
  %v344 = vld [vmem:[%s4 + $0x18] sm:$0xf]
  %v345 = vld [vmem:[%s4 + $0x1c] sm:$0xf]
  %v346 = vld [vmem:[%s4 + $0x20] sm:$0xf]
  %v347 = vld [vmem:[%s4 + $0x24] sm:$0xf]
  %v348 = vld [vmem:[%s4 + $0x28] sm:$0xf]
  %v349 = vld [vmem:[%s4 + $0x2c] sm:$0xf]
  %v350 = vld [vmem:[%s4 + $0x30] sm:$0xf]
  %v351 = vld [vmem:[%s4 + $0x34] sm:$0xf]
  %v352 = vld [vmem:[%s4 + $0x38] sm:$0xf]
  %v353 = vld [vmem:[%s4 + $0x3c] sm:$0xf]
  %v354 = vld [vmem:[%s5] sm:$0x1]
  %v356 = vlaneseq
  %v357 = vshrl.u32 %v356, 7
  %v358 = vsub.s32 0, %v357
  %v359 = vrot.slane %v354, %v358
  %v369 = vunpack.c.l.b16 %v330
  %v370 = vunpack.c.l.b16 %v331
  %v371 = vunpack.c.l.b16 %v332
  %v372 = vunpack.c.l.b16 %v333
  %v373 = vunpack.c.l.b16 %v334
  %v374 = vunpack.c.l.b16 %v335
  %v375 = vunpack.c.l.b16 %v336
  %v376 = vunpack.c.l.b16 %v337
  %vm377 = vcmask 1041409
  %v378 = vsel %vm377, %v370, %v369
  %vm379 = vcmask 1042434
  %v380 = vsel %vm379, %v371, %v378
  %vm381 = vcmask 1043459
  %v382 = vsel %vm381, %v372, %v380
  %vm383 = vcmask 1044484
  %v384 = vsel %vm383, %v373, %v382
  %vm385 = vcmask 1045509
  %v386 = vsel %vm385, %v374, %v384
  %vm387 = vcmask 1046534
  %v388 = vsel %vm387, %v375, %v386
  %vm389 = vcmask 1047559
  %v390 = vsel %vm389, %v376, %v388
  %v391 = vpack.c.b16 %v390, %v390
  %v409 = vunpack.c.l.b16 %v338
  %v410 = vunpack.c.l.b16 %v339
  %v411 = vunpack.c.l.b16 %v340
  %v412 = vunpack.c.l.b16 %v341
  %v413 = vunpack.c.l.b16 %v342
  %v414 = vunpack.c.l.b16 %v343
  %v415 = vunpack.c.l.b16 %v344
  %v416 = vunpack.c.l.b16 %v345
  %v417 = vunpack.c.l.b16 %v346
  %v418 = vunpack.c.l.b16 %v347
  %v419 = vunpack.c.l.b16 %v348
  %v420 = vunpack.c.l.b16 %v349
  %v421 = vunpack.c.l.b16 %v350
  %v422 = vunpack.c.l.b16 %v351
  %v423 = vunpack.c.l.b16 %v352
  %v424 = vunpack.c.l.b16 %v353
  %v425 = vpack.c.b16 %v410, %v409
  %v426 = vpack.c.b16 %v412, %v411
  %v427 = vpack.c.b16 %v414, %v413
  %v428 = vpack.c.b16 %v416, %v415
  %v429 = vpack.c.b16 %v418, %v417
  %v430 = vpack.c.b16 %v420, %v419
  %v431 = vpack.c.b16 %v422, %v421
  %v432 = vpack.c.b16 %v424, %v423
  %441 = vmatprep.subr.bf16.mxu0 0
  %442 = vmatpush1.bf16.msra.mxu0 %v425
  %443 = vmatprep.subr.bf16.mxu0 0
  %444 = vmatpush1.bf16.msra.mxu0 %v426
  %445 = vmatprep.subr.bf16.mxu0 0
  %446 = vmatpush1.bf16.msra.mxu0 %v427
  %447 = vmatprep.subr.bf16.mxu0 0
  %448 = vmatpush1.bf16.msra.mxu0 %v428
  %449 = vmatprep.subr.bf16.mxu0 0
  %450 = vmatpush1.bf16.msra.mxu0 %v429
  %451 = vmatprep.subr.bf16.mxu0 0
  %452 = vmatpush1.bf16.msra.mxu0 %v430
  %453 = vmatprep.subr.bf16.mxu0 0
  %454 = vmatpush1.bf16.msra.mxu0 %v431
  %455 = vmatprep.subr.bf16.mxu0 0
  %456 = vmatpush1.bf16.msra.mxu0 %v432
  %457 = vmatprep.subr.bf16.mxu0 0
  %458 = vmatpush1.bf16.msra.mxu0 0
  %459 = vmatprep.subr.bf16.mxu0 0
  %460 = vmatpush1.bf16.msra.mxu0 0
  %461 = vmatprep.subr.bf16.mxu0 0
  %462 = vmatpush1.bf16.msra.mxu0 0
  %463 = vmatprep.subr.bf16.mxu0 0
  %464 = vmatpush1.bf16.msra.mxu0 0
  %465 = vmatprep.subr.bf16.mxu0 0
  %466 = vmatpush1.bf16.msra.mxu0 0
  %467 = vmatprep.subr.bf16.mxu0 0
  %468 = vmatpush1.bf16.msra.mxu0 0
  %469 = vmatprep.subr.bf16.mxu0 0
  %470 = vmatpush1.bf16.msra.mxu0 0
  %471 = vmatprep.subr.bf16.mxu0 0
  %472 = vmatpush1.bf16.msra.mxu0 0
  %473 = vmatprep.mubr.bf16.mxu0 0
  %474 = vmatmul.mubr.bf16.gmra.mrb[0].mxu0 %v391
  %v475 = vpop.f32.mrb[0].mxu0
  %v476 = vadd.f32 %v359, %v475
  %v477 = vpop.f32.mrb[0].mxu0
  %v478 = vpop.f32.mrb[0].mxu0
  %v479 = vpop.f32.mrb[0].mxu0
  %480 = vdwg.mxu0
  %481 = vst [vmem:[%s6] sm:$0xff] %v476
  // Predicated region
  $region26: #{_lambda_.10} parent=0 // pred_check
    _
  $region27: #{_lambda_.10} parent=0 // pred_check_branch
    %483 = sbr.rel (0) target = $region29
  $region28: #{_lambda_.10} parent=0 // pred_region
    _
  $region29: #{_lambda_.10} parent=0 // pred_fallthru
    _
  // Predicated region
  $region30: #{_lambda_.10} parent=0 // pred_check
    _
  $region31: #{_lambda_.10} parent=0 // pred_check_branch
    %485 = sbr.rel (0) target = $region33
  $region32: #{_lambda_.10} parent=0 // pred_region
    _
  $region33: #{_lambda_.10} parent=0 // pred_fallthru
    _

// kernel: _lambda_.11
$region0: #{_lambda_.11}
  #allocation0 [shape = 'u32[]', space=smem, size = 0x4, offset = 0x4, fixed_abs, tag = 'smem constant byte address 0x4 - core index']
  #allocation1 [shape = 'u32[144,128]{1,0:T(1,128)}', space=vmem, size = 0x12000, scoped, tag = 'internal scratch']
  #allocation2 [shape = 'f32[2,16]{1,0:T(2,128)}', space=vmem, size = 0x400, scoped, tag = 'scratch operand']
  #allocation3 [shape = 'f32[2,16]{1,0:T(2,128)}', space=vmem, size = 0x400, scoped, tag = 'scratch operand']
  #allocation4 [shape = 'f32[4,2,64]{2,1,0:T(2,128)}', space=vmem, size = 0x1000, scoped, tag = 'scratch operand']
  %s0 = inlined_call_operand.vmem [shape: f32[8,16], index: 0, kind: input, shape index: {}]
  %s1 = inlined_call_operand.vmem [shape: f32[2,16,64], index: 1, kind: input, shape index: {}]
  %s2 = inlined_call_operand.vmem [shape: f32[2,1,64], index: 2, kind: input, shape index: {}]
  %s3 = inlined_call_operand.vmem [shape: f32[2,16,64], index: 3, kind: input, shape index: {}]
  %s4 = inlined_call_operand.vmem [shape: f32[2,4,2,16], index: 4, kind: output, shape index: {}]
  %s5 = sld [smem:[#allocation0]]
  $region49: #{_lambda_.11} parent=0
    _
  %s7 = ssub.s32 1, %s5
  %s8 = scalar_select 0, %s7, %s5
  loop: start=0, step=1, limit=4
  $region2: #{_lambda_.11} parent=0 // loop_pre_header
    _
  $region3: #{_lambda_.11} parent=0 // loop_header
    %s10 = sphi 0, %s14
    %p11 = scmp.ge.s32.totalorder %s10, 4
    %s18 = sphi 0, %s18
    %s20 = sphi 0, %s18
    %s21 = sphi 0, %s20
    %s35 = sphi 0, %s21
    %s41 = sphi 0, %s43
    %s44 = sphi 0, %s41
    %s45 = sphi 0, %s44
    %s61 = sphi 0, %s45
    %s67 = sphi 0, %s69
    %s70 = sphi 0, %s67
    %s71 = sphi 0, %s70
    %s87 = sphi 0, %s71
    %s93 = sphi 0, %s95
    %s96 = sphi 0, %s93
    %s97 = sphi 0, %s96
    %s113 = sphi 0, %s97
    %s119 = sphi 0, %s121
    %s122 = sphi 0, %s119
    %s123 = sphi 0, %s122
    %s139 = sphi 0, %s123
  $region4: #{_lambda_.11} parent=0 // loop_header_branch
    %13 = sbr.rel (%p11) target = $region8
  $region5: #{_lambda_.11} parent=0 // loop_body
    %s15 = ssub.s32 %s10, 1
    %s16 = ssub.s32 %s10, 2
    %s17 = sadd.s32 %s10, 1
    %s19 = sadd.s32 %s18, 1
    %p22 = scmp.eq.s32.totalorder %s10, 1
    %p23 = scmp.ne.s32.totalorder %s18, %s20
    %p24 = scmp.eq.s32.totalorder %s10, 0
    %p25 = por %p23, %p24
    %p26 = scmp.ne.s32.totalorder %s18, %s20
    %p27 = scmp.eq.s32.totalorder %s15, 1
    %p28 = por %p26, %p27
    %p29 = scmp.ne.s32.totalorder %s20, %s21
    %p30 = scmp.eq.s32.totalorder %s15, 0
    %p31 = por %p29, %p30
    %p32 = scmp.ne.s32.totalorder %s20, %s21
    %p33 = scmp.eq.s32.totalorder %s16, 1
    %p34 = por %p32, %p33
    %p36 = scmp.ne.s32.totalorder %s21, %s35
    %p37 = scmp.eq.s32.totalorder %s16, 0
    %p38 = por %p36, %p37
    %s39 = ssub.s32 %s10, %s17
    %p40 = scmp.eq.s32.totalorder %s39, 0
    %s42 = sadd.s32 %s41, 1
    %s43 = scalar_select %p40, %s41, %s42
    %p46 = pneg %p40
    %p47 = scmp.eq.s32.totalorder %s10, 1
    %p48 = por %p46, %p47
    %p49 = scmp.ne.s32.totalorder %s41, %s44
    %p50 = scmp.eq.s32.totalorder %s10, 0
    %p51 = por %p49, %p50
    %p52 = scmp.ne.s32.totalorder %s41, %s44
    %p53 = scmp.eq.s32.totalorder %s15, 1
    %p54 = por %p52, %p53
    %p55 = scmp.ne.s32.totalorder %s44, %s45
    %p56 = scmp.eq.s32.totalorder %s15, 0
    %p57 = por %p55, %p56
    %p58 = scmp.ne.s32.totalorder %s44, %s45
    %p59 = scmp.eq.s32.totalorder %s16, 1
    %p60 = por %p58, %p59
    %p62 = scmp.ne.s32.totalorder %s45, %s61
    %p63 = scmp.eq.s32.totalorder %s16, 0
    %p64 = por %p62, %p63
    %s65 = ssub.s32 %s10, %s17
    %p66 = scmp.eq.s32.totalorder %s65, 0
    %s68 = sadd.s32 %s67, 1
    %s69 = scalar_select %p66, %s67, %s68
    %p72 = pneg %p66
    %p73 = scmp.eq.s32.totalorder %s10, 1
    %p74 = por %p72, %p73
    %p75 = scmp.ne.s32.totalorder %s67, %s70
    %p76 = scmp.eq.s32.totalorder %s10, 0
    %p77 = por %p75, %p76
    %p78 = scmp.ne.s32.totalorder %s67, %s70
    %p79 = scmp.eq.s32.totalorder %s15, 1
    %p80 = por %p78, %p79
    %p81 = scmp.ne.s32.totalorder %s70, %s71
    %p82 = scmp.eq.s32.totalorder %s15, 0
    %p83 = por %p81, %p82
    %p84 = scmp.ne.s32.totalorder %s70, %s71
    %p85 = scmp.eq.s32.totalorder %s16, 1
    %p86 = por %p84, %p85
    %p88 = scmp.ne.s32.totalorder %s71, %s87
    %p89 = scmp.eq.s32.totalorder %s16, 0
    %p90 = por %p88, %p89
    %s91 = ssub.s32 %s10, %s17
    %p92 = scmp.eq.s32.totalorder %s91, 0
    %s94 = sadd.s32 %s93, 1
    %s95 = scalar_select %p92, %s93, %s94
    %p98 = pneg %p92
    %p99 = scmp.eq.s32.totalorder %s10, 1
    %p100 = por %p98, %p99
    %p101 = scmp.ne.s32.totalorder %s93, %s96
    %p102 = scmp.eq.s32.totalorder %s10, 0
    %p103 = por %p101, %p102
    %p104 = scmp.ne.s32.totalorder %s93, %s96
    %p105 = scmp.eq.s32.totalorder %s15, 1
    %p106 = por %p104, %p105
    %p107 = scmp.ne.s32.totalorder %s96, %s97
    %p108 = scmp.eq.s32.totalorder %s15, 0
    %p109 = por %p107, %p108
    %p110 = scmp.ne.s32.totalorder %s96, %s97
    %p111 = scmp.eq.s32.totalorder %s16, 1
    %p112 = por %p110, %p111
    %p114 = scmp.ne.s32.totalorder %s97, %s113
    %p115 = scmp.eq.s32.totalorder %s16, 0
    %p116 = por %p114, %p115
    %s117 = ssub.s32 %s10, %s17
    %p118 = scmp.eq.s32.totalorder %s117, 0
    %s120 = sadd.s32 %s119, 1
    %s121 = scalar_select %p118, %s119, %s120
    %p124 = pneg %p118
    %p125 = scmp.eq.s32.totalorder %s10, 1
    %p126 = por %p124, %p125
    %p127 = scmp.ne.s32.totalorder %s119, %s122
    %p128 = scmp.eq.s32.totalorder %s10, 0
    %p129 = por %p127, %p128
    %p130 = scmp.ne.s32.totalorder %s119, %s122
    %p131 = scmp.eq.s32.totalorder %s15, 1
    %p132 = por %p130, %p131
    %p133 = scmp.ne.s32.totalorder %s122, %s123
    %p134 = scmp.eq.s32.totalorder %s15, 0
    %p135 = por %p133, %p134
    %p136 = scmp.ne.s32.totalorder %s122, %s123
    %p137 = scmp.eq.s32.totalorder %s16, 1
    %p138 = por %p136, %p137
    %p140 = scmp.ne.s32.totalorder %s123, %s139
    %p141 = scmp.eq.s32.totalorder %s16, 0
    %p142 = por %p140, %p141
    %p143 = scmp.le.s32.totalorder 1, %s10
    %p144 = scmp.lt.s32.totalorder %s10, 3
    %p145 = pnand %p143, %p144
    %p146 = pneg %p145
    // Predicated region
    $region9: #{_lambda_.11} parent=5 // pred_check
      _
    $region10: #{_lambda_.11} parent=5 // pred_check_branch
      %148 = sbr.rel (%p145) target = $region12
    $region11: #{_lambda_.11} parent=5 // pred_region
      %s149 = ssub.s32 %s10, 1
      // Predicated region
      $region13: #{_lambda_.11} parent=11 // pred_check
        %p150 = pneg %p31
      $region14: #{_lambda_.11} parent=11 // pred_check_branch
        %152 = sbr.rel (%p150) target = $region16
      $region15: #{_lambda_.11} parent=11 // pred_region
        _
      $region16: #{_lambda_.11} parent=11 // pred_fallthru
        _
    $region12: #{_lambda_.11} parent=5 // pred_fallthru
      _
    %p153 = scmp.lt.s32.totalorder %s10, 2
    // Predicated region
    $region17: #{_lambda_.11} parent=5 // pred_check
      %p154 = pneg %p153
    $region18: #{_lambda_.11} parent=5 // pred_check_branch
      %156 = sbr.rel (%p154) target = $region20
    $region19: #{_lambda_.11} parent=5 // pred_region
      // Predicated region
      $region21: #{_lambda_.11} parent=19 // pred_check
        %p157 = pneg %p51
      $region22: #{_lambda_.11} parent=19 // pred_check_branch
        %159 = sbr.rel (%p157) target = $region24
      $region23: #{_lambda_.11} parent=19 // pred_region
        %p160 = scmp.lt.s32.totalorder %s10, 1
        %s161 = scalar_select %p160, %s10, 1
        %s162 = smul.addr %s161, 2
        %s163 = smul.addr %s162, 8
        %s164 = scalar_lea.vmem %s1, %s163
      $region24: #{_lambda_.11} parent=19 // pred_fallthru
        _
      // Predicated region
      $region25: #{_lambda_.11} parent=19 // pred_check
        %p165 = pneg %p77
      $region26: #{_lambda_.11} parent=19 // pred_check_branch
        %167 = sbr.rel (%p165) target = $region28
      $region27: #{_lambda_.11} parent=19 // pred_region
        %p168 = scmp.lt.s32.totalorder %s10, 1
        %s169 = scalar_select %p168, %s10, 1
        %s170 = scalar_lea.vmem %s2, %s169
      $region28: #{_lambda_.11} parent=19 // pred_fallthru
        _
      // Predicated region
      $region29: #{_lambda_.11} parent=19 // pred_check
        %p171 = pneg %p103
      $region30: #{_lambda_.11} parent=19 // pred_check_branch
        %173 = sbr.rel (%p171) target = $region32
      $region31: #{_lambda_.11} parent=19 // pred_region
        %p174 = scmp.lt.s32.totalorder %s10, 1
        %s175 = scalar_select %p174, %s10, 1
        %s176 = smul.addr %s175, 2
        %s177 = smul.addr %s176, 8
        %s178 = scalar_lea.vmem %s3, %s177
      $region32: #{_lambda_.11} parent=19 // pred_fallthru
        _
    $region20: #{_lambda_.11} parent=5 // pred_fallthru
      _
    %p179 = scmp.le.s32.totalorder 1, %s10
    %p180 = scmp.lt.s32.totalorder %s10, 3
    %p181 = pnand %p179, %p180
    %p182 = pneg %p181
    // Predicated region
    $region33: #{_lambda_.11} parent=5 // pred_check
      _
    $region34: #{_lambda_.11} parent=5 // pred_check_branch
      %184 = sbr.rel (%p181) target = $region36
    $region35: #{_lambda_.11} parent=5 // pred_region
      %s185 = ssub.s32 %s10, 1
      %p186 = pneg %p31
      %p187 = pneg %p28
      %p188 = scmp.lt.s32.totalorder %s15, 1
      %s189 = scalar_select %p188, %s15, 1
      %s190 = smul.addr %s189, 2
      %s191 = smul.addr %s190, 8
      %s192 = scalar_lea.vmem %s1, %s191
      %p193 = pneg %p57
      %p194 = pneg %p54
      %p195 = scmp.lt.s32.totalorder %s15, 1
      %s196 = scalar_select %p195, %s15, 1
      %s197 = scalar_lea.vmem %s2, %s196
      %p198 = pneg %p83
      %p199 = pneg %p80
      %p200 = scmp.lt.s32.totalorder %s15, 1
      %s201 = scalar_select %p200, %s15, 1
      %s202 = smul.addr %s201, 2
      %s203 = smul.addr %s202, 8
      %s204 = scalar_lea.vmem %s3, %s203
      %p205 = pneg %p109
      %p206 = pneg %p106
      %p207 = pneg %p135
      %p208 = pneg %p132
      %p209 = scmp.lt.s32.totalorder %s15, 1
      %s210 = scalar_select %p209, %s15, 1
      %s211 = smul.addr %s210, 4
      %s212 = smul.addr %s211, 2
      %s213 = scalar_lea.vmem %s4, %s212
      %p214 = scmp.lt.s32.totalorder %s15, 1
      %s215 = scalar_select %p214, %s15, 1
      %s216 = smul.addr %s215, 2
      %s217 = smul.addr %s216, 8
      %s218 = scalar_lea.vmem %s1, %s217
      %p219 = scmp.lt.s32.totalorder %s15, 1
      %s220 = scalar_select %p219, %s15, 1
      %s221 = scalar_lea.vmem %s2, %s220
      %p222 = scmp.lt.s32.totalorder %s15, 1
      %s223 = scalar_select %p222, %s15, 1
      %s224 = smul.addr %s223, 2
      %s225 = smul.addr %s224, 8
      %s226 = scalar_lea.vmem %s3, %s225
      %p227 = scmp.lt.s32.totalorder %s15, 1
      %s228 = scalar_select %p227, %s15, 1
      %s229 = smul.addr %s228, 4
      %s230 = smul.addr %s229, 2
      %s231 = scalar_lea.vmem %s4, %s230
      %v233 = vld [vmem:[%s0] sm:$0xff]
      %v234 = vpack.c.bf16 %v233, %v233
      %v235 = vld [vmem:[%s218] sm:$0xff]
      %v236 = vld [vmem:[%s218 + $0x8] sm:$0xff]
      %v237 = vpack.c.bf16 %v236, %v235
      %v238 = vld [vmem:[%s221] sm:$0x1]
      %v240 = vlaneseq
      %v241 = vshrl.u32 %v240, 7
      %v242 = vsub.s32 0, %v241
      %v243 = vrot.slane %v238, %v242
      %vm245 = vcmask 130048
      %v247 = vsel %vm245, %v234, 0
      %249 = vmatprep.subr.bf16.mxu0 0
      %250 = vmatpush1.bf16.msra.mxu0 %v237
      %251 = vmatprep.subr.bf16.mxu0 0
      %252 = vmatpush1.bf16.msra.mxu0 0
      %253 = vmatprep.subr.bf16.mxu0 0
      %254 = vmatpush1.bf16.msra.mxu0 0
      %255 = vmatprep.subr.bf16.mxu0 0
      %256 = vmatpush1.bf16.msra.mxu0 0
      %257 = vmatprep.subr.bf16.mxu0 0
      %258 = vmatpush1.bf16.msra.mxu0 0
      %259 = vmatprep.subr.bf16.mxu0 0
      %260 = vmatpush1.bf16.msra.mxu0 0
      %261 = vmatprep.subr.bf16.mxu0 0
      %262 = vmatpush1.bf16.msra.mxu0 0
      %263 = vmatprep.subr.bf16.mxu0 0
      %264 = vmatpush1.bf16.msra.mxu0 0
      %265 = vmatprep.subr.bf16.mxu0 0
      %266 = vmatpush1.bf16.msra.mxu0 0
      %267 = vmatprep.subr.bf16.mxu0 0
      %268 = vmatpush1.bf16.msra.mxu0 0
      %269 = vmatprep.subr.bf16.mxu0 0
      %270 = vmatpush1.bf16.msra.mxu0 0
      %271 = vmatprep.subr.bf16.mxu0 0
      %272 = vmatpush1.bf16.msra.mxu0 0
      %273 = vmatprep.subr.bf16.mxu0 0
      %274 = vmatpush1.bf16.msra.mxu0 0
      %275 = vmatprep.subr.bf16.mxu0 0
      %276 = vmatpush1.bf16.msra.mxu0 0
      %277 = vmatprep.subr.bf16.mxu0 0
      %278 = vmatpush1.bf16.msra.mxu0 0
      %279 = vmatprep.subr.bf16.mxu0 0
      %280 = vmatpush1.bf16.msra.mxu0 0
      %281 = vmatprep.mubr.bf16.mxu0 0
      %282 = vmatmul.mubr.bf16.gmra.mrb[0].mxu0 %v247
      %v283 = vpop.f32.mrb[0].mxu0
      %v284 = vadd.f32 %v243, %v283
      %v285 = vpop.f32.mrb[0].mxu0
      %v286 = vpop.f32.mrb[0].mxu0
      %v287 = vpop.f32.mrb[0].mxu0
      %288 = vdwg.mxu0
      %v290 = vcombine.high %v284, %v284
      %v292 = vunpack.c.l.s4 1983009808
      %v293 = vunpack.c.0.s8 %v292
      %v294 = vlaneseq
      %v295 = vshrl.u32 %v294, 7
      %v296 = vsub.s32 %v293, %v295
      %v297 = vrot.slane %v284, %v296
      %v299 = vunpack.c.l.s4 1983009808
      %v300 = vunpack.c.0.s8 %v299
      %v301 = vlaneseq
      %v302 = vshrl.u32 %v301, 7
      %v303 = vsub.s32 %v300, %v302
      %v304 = vrot.slane %v290, %v303
      %v305 = vcombine.high %v297, %v297
      %v306 = vcombine.high %v304, %v304
      %vm311 = vcmask 517120
      %312 = vst.msk [vmem:[#allocation4] sm:$0x3] %vm311, %v297
      %313 = vst.msk [vmem:[#allocation4 + $0x2] sm:$0x3] %vm311, %v305
      %314 = vst.msk [vmem:[#allocation4 + $0x4] sm:$0x3] %vm311, %v304
      %315 = vst.msk [vmem:[#allocation4 + $0x6] sm:$0x3] %vm311, %v306
      %vm316 = vcmask 123904
      %317 = vst.msk [vmem:[#allocation2] sm:$0x3] %vm316, 0.0
      %318 = vst.msk [vmem:[#allocation3] sm:$0x3] %vm316, 0.0
      %v319 = vld [vmem:[%s226] sm:$0xff]
      %v320 = vld [vmem:[%s226 + $0x8] sm:$0xff]
      %v321 = vpack.c.bf16 %v320, %v319
      %p322 = scmp.eq.s32.totalorder %s15, 0
      %s323 = scalar_select %p322, 0, 3
      %s324 = smul.u32 %s323, 2
      %s325 = scalar_lea.vmem [#allocation4], %s324
      %v326 = vld [vmem:[%s325] sm:$0x3]
      %v327 = vld [vmem:[#allocation2] sm:$0x3]
      %v328 = vpack.c.bf16 %v327, %v327
      %v330 = vsel %vm245, %v328, 0
      %332 = vmatprep.subr.bf16.mxu0 0
      %333 = vmatpush1.bf16.msra.mxu0 %v321
      %334 = vmatprep.subr.bf16.mxu0 0
      %335 = vmatpush1.bf16.msra.mxu0 0
      %336 = vmatprep.subr.bf16.mxu0 0
      %337 = vmatpush1.bf16.msra.mxu0 0
      %338 = vmatprep.subr.bf16.mxu0 0
      %339 = vmatpush1.bf16.msra.mxu0 0
      %340 = vmatprep.subr.bf16.mxu0 0
      %341 = vmatpush1.bf16.msra.mxu0 0
      %342 = vmatprep.subr.bf16.mxu0 0
      %343 = vmatpush1.bf16.msra.mxu0 0
      %344 = vmatprep.subr.bf16.mxu0 0
      %345 = vmatpush1.bf16.msra.mxu0 0
      %346 = vmatprep.subr.bf16.mxu0 0
      %347 = vmatpush1.bf16.msra.mxu0 0
      %348 = vmatprep.subr.bf16.mxu0 0
      %349 = vmatpush1.bf16.msra.mxu0 0
      %350 = vmatprep.subr.bf16.mxu0 0
      %351 = vmatpush1.bf16.msra.mxu0 0
      %352 = vmatprep.subr.bf16.mxu0 0
      %353 = vmatpush1.bf16.msra.mxu0 0
      %354 = vmatprep.subr.bf16.mxu0 0
      %355 = vmatpush1.bf16.msra.mxu0 0
      %356 = vmatprep.subr.bf16.mxu0 0
      %357 = vmatpush1.bf16.msra.mxu0 0
      %358 = vmatprep.subr.bf16.mxu0 0
      %359 = vmatpush1.bf16.msra.mxu0 0
      %360 = vmatprep.subr.bf16.mxu0 0
      %361 = vmatpush1.bf16.msra.mxu0 0
      %362 = vmatprep.subr.bf16.mxu0 0
      %363 = vmatpush1.bf16.msra.mxu0 0
      %364 = vmatprep.mubr.bf16.mxu0 0
      %365 = vmatmul.mubr.bf16.gmra.mrb[0].mxu0 %v330
      %v366 = vpop.f32.mrb[0].mxu0
      %v367 = vadd.f32 0.0, %v366
      %v368 = vpop.f32.mrb[0].mxu0
      %v369 = vpop.f32.mrb[0].mxu0
      %v370 = vpop.f32.mrb[0].mxu0
      %371 = vdwg.mxu0
      %v372 = vadd.f32 %v326, %v367
      %v373 = vxor.u32 %v372, 2147483648
      %v374 = vmul.f32 %v373, 1.442695
      %v375 = vpow.pop %v374
      %v376 = vadd.f32 %v375, 1.0
      %v377 = vrcp.pop %v376
      %v378 = vmul.f32 1.0, %v377
      %v379 = vtanh.pop %v372
      %v380 = vld [vmem:[#allocation3] sm:$0x3]
      %382 = vrot.lane.b32.xlu0 %v380, 16
      %v383 = vpop.permute.xlu0 %382
      %v385 = vmul.f32 %v378, %v383
      %387 = vrot.lane.b32.xlu0 %v379, 96
      %v388 = vpop.permute.xlu0 %387
      %v390 = vmul.f32 %v378, %v388
      %392 = vrot.lane.b32.xlu0 %v390, 16
      %v393 = vpop.permute.xlu0 %392
      %v395 = vadd.f32 %v385, %v393
      %v396 = vtanh.pop %v395
      %398 = vrot.lane.b32.xlu0 %v396, 32
      %v399 = vpop.permute.xlu0 %398
      %v401 = vmul.f32 %v378, %v399
      %403 = vrot.lane.b32.xlu0 %v395, 112
      %v404 = vpop.permute.xlu0 %403
      %406 = vst.msk [vmem:[#allocation3] sm:$0x3] %vm316, %v404
      %408 = vrot.lane.b32.xlu0 %v401, 80
      %v409 = vpop.permute.xlu0 %408
      %411 = vst.msk [vmem:[#allocation2] sm:$0x3] %vm316, %v409
      %s412 = scalar_lea.vmem %s231, %s324
      %413 = vst.msk [vmem:[%s412] sm:$0x3] %vm316, %v409
      %s414 = scalar_select %p322, 1, 2
      %s415 = smul.u32 %s414, 2
      %s416 = scalar_lea.vmem [#allocation4], %s415
      %v417 = vld [vmem:[%s416] sm:$0x3]
      %v418 = vld [vmem:[#allocation2] sm:$0x3]
      %v419 = vpack.c.bf16 %v418, %v418
      %v421 = vsel %vm245, %v419, 0
      %423 = vmatprep.subr.bf16.mxu0 0
      %424 = vmatpush1.bf16.msra.mxu0 %v321
      %425 = vmatprep.subr.bf16.mxu0 0
      %426 = vmatpush1.bf16.msra.mxu0 0
      %427 = vmatprep.subr.bf16.mxu0 0
      %428 = vmatpush1.bf16.msra.mxu0 0
      %429 = vmatprep.subr.bf16.mxu0 0
      %430 = vmatpush1.bf16.msra.mxu0 0
      %431 = vmatprep.subr.bf16.mxu0 0
      %432 = vmatpush1.bf16.msra.mxu0 0
      %433 = vmatprep.subr.bf16.mxu0 0
      %434 = vmatpush1.bf16.msra.mxu0 0
      %435 = vmatprep.subr.bf16.mxu0 0
      %436 = vmatpush1.bf16.msra.mxu0 0
      %437 = vmatprep.subr.bf16.mxu0 0
      %438 = vmatpush1.bf16.msra.mxu0 0
      %439 = vmatprep.subr.bf16.mxu0 0
      %440 = vmatpush1.bf16.msra.mxu0 0
      %441 = vmatprep.subr.bf16.mxu0 0
      %442 = vmatpush1.bf16.msra.mxu0 0
      %443 = vmatprep.subr.bf16.mxu0 0
      %444 = vmatpush1.bf16.msra.mxu0 0
      %445 = vmatprep.subr.bf16.mxu0 0
      %446 = vmatpush1.bf16.msra.mxu0 0
      %447 = vmatprep.subr.bf16.mxu0 0
      %448 = vmatpush1.bf16.msra.mxu0 0
      %449 = vmatprep.subr.bf16.mxu0 0
      %450 = vmatpush1.bf16.msra.mxu0 0
      %451 = vmatprep.subr.bf16.mxu0 0
      %452 = vmatpush1.bf16.msra.mxu0 0
      %453 = vmatprep.subr.bf16.mxu0 0
      %454 = vmatpush1.bf16.msra.mxu0 0
      %455 = vmatprep.mubr.bf16.mxu0 0
      %456 = vmatmul.mubr.bf16.gmra.mrb[0].mxu0 %v421
      %v457 = vpop.f32.mrb[0].mxu0
      %v458 = vadd.f32 0.0, %v457
      %v459 = vpop.f32.mrb[0].mxu0
      %v460 = vpop.f32.mrb[0].mxu0
      %v461 = vpop.f32.mrb[0].mxu0
      %462 = vdwg.mxu0
      %v463 = vadd.f32 %v417, %v458
      %v464 = vxor.u32 %v463, 2147483648
      %v465 = vmul.f32 %v464, 1.442695
      %v466 = vpow.pop %v465
      %v467 = vadd.f32 %v466, 1.0
      %v468 = vrcp.pop %v467
      %v469 = vmul.f32 1.0, %v468
      %v470 = vtanh.pop %v463
      %v471 = vld [vmem:[#allocation3] sm:$0x3]
      %473 = vrot.lane.b32.xlu0 %v471, 16
      %v474 = vpop.permute.xlu0 %473
      %v476 = vmul.f32 %v469, %v474
      %478 = vrot.lane.b32.xlu0 %v470, 96
      %v479 = vpop.permute.xlu0 %478
      %v481 = vmul.f32 %v469, %v479
      %483 = vrot.lane.b32.xlu0 %v481, 16
      %v484 = vpop.permute.xlu0 %483
      %v486 = vadd.f32 %v476, %v484
      %v487 = vtanh.pop %v486
      %489 = vrot.lane.b32.xlu0 %v487, 32
      %v490 = vpop.permute.xlu0 %489
      %v492 = vmul.f32 %v469, %v490
      %494 = vrot.lane.b32.xlu0 %v486, 112
      %v495 = vpop.permute.xlu0 %494
      %497 = vst.msk [vmem:[#allocation3] sm:$0x3] %vm316, %v495
      %499 = vrot.lane.b32.xlu0 %v492, 80
      %v500 = vpop.permute.xlu0 %499
      %502 = vst.msk [vmem:[#allocation2] sm:$0x3] %vm316, %v500
      %s503 = scalar_lea.vmem %s231, %s415
      %504 = vst.msk [vmem:[%s503] sm:$0x3] %vm316, %v500
      %s505 = scalar_select %p322, 2, 1
      %s506 = smul.u32 %s505, 2
      %s507 = scalar_lea.vmem [#allocation4], %s506
      %v508 = vld [vmem:[%s507] sm:$0x3]
      %v509 = vld [vmem:[#allocation2] sm:$0x3]
      %v510 = vpack.c.bf16 %v509, %v509
      %v512 = vsel %vm245, %v510, 0
      %514 = vmatprep.subr.bf16.mxu0 0
      %515 = vmatpush1.bf16.msra.mxu0 %v321
      %516 = vmatprep.subr.bf16.mxu0 0
      %517 = vmatpush1.bf16.msra.mxu0 0
      %518 = vmatprep.subr.bf16.mxu0 0
      %519 = vmatpush1.bf16.msra.mxu0 0
      %520 = vmatprep.subr.bf16.mxu0 0
      %521 = vmatpush1.bf16.msra.mxu0 0
      %522 = vmatprep.subr.bf16.mxu0 0
      %523 = vmatpush1.bf16.msra.mxu0 0
      %524 = vmatprep.subr.bf16.mxu0 0
      %525 = vmatpush1.bf16.msra.mxu0 0
      %526 = vmatprep.subr.bf16.mxu0 0
      %527 = vmatpush1.bf16.msra.mxu0 0
      %528 = vmatprep.subr.bf16.mxu0 0
      %529 = vmatpush1.bf16.msra.mxu0 0
      %530 = vmatprep.subr.bf16.mxu0 0
      %531 = vmatpush1.bf16.msra.mxu0 0
      %532 = vmatprep.subr.bf16.mxu0 0
      %533 = vmatpush1.bf16.msra.mxu0 0
      %534 = vmatprep.subr.bf16.mxu0 0
      %535 = vmatpush1.bf16.msra.mxu0 0
      %536 = vmatprep.subr.bf16.mxu0 0
      %537 = vmatpush1.bf16.msra.mxu0 0
      %538 = vmatprep.subr.bf16.mxu0 0
      %539 = vmatpush1.bf16.msra.mxu0 0
      %540 = vmatprep.subr.bf16.mxu0 0
      %541 = vmatpush1.bf16.msra.mxu0 0
      %542 = vmatprep.subr.bf16.mxu0 0
      %543 = vmatpush1.bf16.msra.mxu0 0
      %544 = vmatprep.subr.bf16.mxu0 0
      %545 = vmatpush1.bf16.msra.mxu0 0
      %546 = vmatprep.mubr.bf16.mxu0 0
      %547 = vmatmul.mubr.bf16.gmra.mrb[0].mxu0 %v512
      %v548 = vpop.f32.mrb[0].mxu0
      %v549 = vadd.f32 0.0, %v548
      %v550 = vpop.f32.mrb[0].mxu0
      %v551 = vpop.f32.mrb[0].mxu0
      %v552 = vpop.f32.mrb[0].mxu0
      %553 = vdwg.mxu0
      %v554 = vadd.f32 %v508, %v549
      %v555 = vxor.u32 %v554, 2147483648
      %v556 = vmul.f32 %v555, 1.442695
      %v557 = vpow.pop %v556
      %v558 = vadd.f32 %v557, 1.0
      %v559 = vrcp.pop %v558
      %v560 = vmul.f32 1.0, %v559
      %v561 = vtanh.pop %v554
      %v562 = vld [vmem:[#allocation3] sm:$0x3]
      %564 = vrot.lane.b32.xlu0 %v562, 16
      %v565 = vpop.permute.xlu0 %564
      %v567 = vmul.f32 %v560, %v565
      %569 = vrot.lane.b32.xlu0 %v561, 96
      %v570 = vpop.permute.xlu0 %569
      %v572 = vmul.f32 %v560, %v570
      %574 = vrot.lane.b32.xlu0 %v572, 16
      %v575 = vpop.permute.xlu0 %574
      %v577 = vadd.f32 %v567, %v575
      %v578 = vtanh.pop %v577
      %580 = vrot.lane.b32.xlu0 %v578, 32
      %v581 = vpop.permute.xlu0 %580
      %v583 = vmul.f32 %v560, %v581
      %585 = vrot.lane.b32.xlu0 %v577, 112
      %v586 = vpop.permute.xlu0 %585
      %588 = vst.msk [vmem:[#allocation3] sm:$0x3] %vm316, %v586
      %590 = vrot.lane.b32.xlu0 %v583, 80
      %v591 = vpop.permute.xlu0 %590
      %593 = vst.msk [vmem:[#allocation2] sm:$0x3] %vm316, %v591
      %s594 = scalar_lea.vmem %s231, %s506
      %595 = vst.msk [vmem:[%s594] sm:$0x3] %vm316, %v591
      %s596 = scalar_select %p322, 3, 0
      %s597 = smul.u32 %s596, 2
      %s598 = scalar_lea.vmem [#allocation4], %s597
      %v599 = vld [vmem:[%s598] sm:$0x3]
      %v600 = vld [vmem:[#allocation2] sm:$0x3]
      %v601 = vpack.c.bf16 %v600, %v600
      %v603 = vsel %vm245, %v601, 0
      %605 = vmatprep.subr.bf16.mxu0 0
      %606 = vmatpush1.bf16.msra.mxu0 %v321
      %607 = vmatprep.subr.bf16.mxu0 0
      %608 = vmatpush1.bf16.msra.mxu0 0
      %609 = vmatprep.subr.bf16.mxu0 0
      %610 = vmatpush1.bf16.msra.mxu0 0
      %611 = vmatprep.subr.bf16.mxu0 0
      %612 = vmatpush1.bf16.msra.mxu0 0
      %613 = vmatprep.subr.bf16.mxu0 0
      %614 = vmatpush1.bf16.msra.mxu0 0
      %615 = vmatprep.subr.bf16.mxu0 0
      %616 = vmatpush1.bf16.msra.mxu0 0
      %617 = vmatprep.subr.bf16.mxu0 0
      %618 = vmatpush1.bf16.msra.mxu0 0
      %619 = vmatprep.subr.bf16.mxu0 0
      %620 = vmatpush1.bf16.msra.mxu0 0
      %621 = vmatprep.subr.bf16.mxu0 0
      %622 = vmatpush1.bf16.msra.mxu0 0
      %623 = vmatprep.subr.bf16.mxu0 0
      %624 = vmatpush1.bf16.msra.mxu0 0
      %625 = vmatprep.subr.bf16.mxu0 0
      %626 = vmatpush1.bf16.msra.mxu0 0
      %627 = vmatprep.subr.bf16.mxu0 0
      %628 = vmatpush1.bf16.msra.mxu0 0
      %629 = vmatprep.subr.bf16.mxu0 0
      %630 = vmatpush1.bf16.msra.mxu0 0
      %631 = vmatprep.subr.bf16.mxu0 0
      %632 = vmatpush1.bf16.msra.mxu0 0
      %633 = vmatprep.subr.bf16.mxu0 0
      %634 = vmatpush1.bf16.msra.mxu0 0
      %635 = vmatprep.subr.bf16.mxu0 0
      %636 = vmatpush1.bf16.msra.mxu0 0
      %637 = vmatprep.mubr.bf16.mxu0 0
      %638 = vmatmul.mubr.bf16.gmra.mrb[0].mxu0 %v603
      %v639 = vpop.f32.mrb[0].mxu0
      %v640 = vadd.f32 0.0, %v639
      %v641 = vpop.f32.mrb[0].mxu0
      %v642 = vpop.f32.mrb[0].mxu0
      %v643 = vpop.f32.mrb[0].mxu0
      %644 = vdwg.mxu0
      %v645 = vadd.f32 %v599, %v640
      %v646 = vxor.u32 %v645, 2147483648
      %v647 = vmul.f32 %v646, 1.442695
      %v648 = vpow.pop %v647
      %v649 = vadd.f32 %v648, 1.0
      %v650 = vrcp.pop %v649
      %v651 = vmul.f32 1.0, %v650
      %v652 = vtanh.pop %v645
      %v653 = vld [vmem:[#allocation3] sm:$0x3]
      %655 = vrot.lane.b32.xlu0 %v653, 16
      %v656 = vpop.permute.xlu0 %655
      %v658 = vmul.f32 %v651, %v656
      %660 = vrot.lane.b32.xlu0 %v652, 96
      %v661 = vpop.permute.xlu0 %660
      %v663 = vmul.f32 %v651, %v661
      %665 = vrot.lane.b32.xlu0 %v663, 16
      %v666 = vpop.permute.xlu0 %665
      %v668 = vadd.f32 %v658, %v666
      %v669 = vtanh.pop %v668
      %671 = vrot.lane.b32.xlu0 %v669, 32
      %v672 = vpop.permute.xlu0 %671
      %v674 = vmul.f32 %v651, %v672
      %676 = vrot.lane.b32.xlu0 %v668, 112
      %v677 = vpop.permute.xlu0 %676
      %679 = vst.msk [vmem:[#allocation3] sm:$0x3] %vm316, %v677
      %681 = vrot.lane.b32.xlu0 %v674, 80
      %v682 = vpop.permute.xlu0 %681
      %684 = vst.msk [vmem:[#allocation2] sm:$0x3] %vm316, %v682
      %s685 = scalar_lea.vmem %s231, %s597
      %686 = vst.msk [vmem:[%s685] sm:$0x3] %vm316, %v682
      %p687 = scmp.lt.s32.totalorder %s15, 1
      %s688 = scalar_select %p687, %s15, 1
      %s689 = smul.addr %s688, 4
      %s690 = smul.addr %s689, 2
      %s691 = scalar_lea.vmem %s4, %s690
      // Predicated region
      $region37: #{_lambda_.11} parent=35 // pred_check
        %p692 = pneg %p132
      $region38: #{_lambda_.11} parent=35 // pred_check_branch
        %694 = sbr.rel (%p692) target = $region40
      $region39: #{_lambda_.11} parent=35 // pred_region
        _
      $region40: #{_lambda_.11} parent=35 // pred_fallthru
        _
    $region36: #{_lambda_.11} parent=5 // pred_fallthru
      _
    %p695 = scmp.le.s32.totalorder 2, %s10
    // Predicated region
    $region41: #{_lambda_.11} parent=5 // pred_check
      %p696 = pneg %p695
    $region42: #{_lambda_.11} parent=5 // pred_check_branch
      %698 = sbr.rel (%p696) target = $region44
    $region43: #{_lambda_.11} parent=5 // pred_region
      %s699 = ssub.s32 %s10, 2
      // Predicated region
      $region45: #{_lambda_.11} parent=43 // pred_check
        %p700 = pneg %p138
      $region46: #{_lambda_.11} parent=43 // pred_check_branch
        %702 = sbr.rel (%p700) target = $region48
      $region47: #{_lambda_.11} parent=43 // pred_region
        %p703 = scmp.lt.s32.totalorder %s16, 1
        %s704 = scalar_select %p703, %s16, 1
        %s705 = smul.addr %s704, 4
        %s706 = smul.addr %s705, 2
        %s707 = scalar_lea.vmem %s4, %s706
      $region48: #{_lambda_.11} parent=43 // pred_fallthru
        _
    $region44: #{_lambda_.11} parent=5 // pred_fallthru
      _
  $region6: #{_lambda_.11} parent=0 // loop_footer
    %s14 = sadd.s32 1, %s10
  $region7: #{_lambda_.11} parent=0 // loop_footer_branch
    %9 = sbr.rel target = $region3
  $region8: #{_lambda_.11} parent=0 // loop_exit
    _

// kernel: _lambda_.12
$region0: #{_lambda_.12}
  #allocation0 [shape = 'u32[]', space=smem, size = 0x4, offset = 0x4, fixed_abs, tag = 'smem constant byte address 0x4 - core index']
  #allocation1 [shape = 'u32[144,128]{1,0:T(1,128)}', space=vmem, size = 0x12000, scoped, tag = 'internal scratch']
  #allocation2 [shape = 'f32[2,16]{1,0:T(2,128)}', space=vmem, size = 0x400, scoped, tag = 'scratch operand']
  #allocation3 [shape = 'f32[2,16]{1,0:T(2,128)}', space=vmem, size = 0x400, scoped, tag = 'scratch operand']
  #allocation4 [shape = 'f32[4,2,64]{2,1,0:T(2,128)}', space=vmem, size = 0x1000, scoped, tag = 'scratch operand']
  %s0 = inlined_call_operand.vmem [shape: f32[8,32], index: 0, kind: input, shape index: {}]
  %s1 = inlined_call_operand.vmem [shape: f32[2,32,64], index: 1, kind: input, shape index: {}]
  %s2 = inlined_call_operand.vmem [shape: f32[2,1,64], index: 2, kind: input, shape index: {}]
  %s3 = inlined_call_operand.vmem [shape: f32[2,16,64], index: 3, kind: input, shape index: {}]
  %s4 = inlined_call_operand.vmem [shape: f32[2,4,2,16], index: 4, kind: output, shape index: {}]
  %s5 = sld [smem:[#allocation0]]
  $region49: #{_lambda_.12} parent=0
    _
  %s7 = ssub.s32 1, %s5
  %s8 = scalar_select 0, %s7, %s5
  loop: start=0, step=1, limit=4
  $region2: #{_lambda_.12} parent=0 // loop_pre_header
    _
  $region3: #{_lambda_.12} parent=0 // loop_header
    %s10 = sphi 0, %s14
    %p11 = scmp.ge.s32.totalorder %s10, 4
    %s18 = sphi 0, %s18
    %s20 = sphi 0, %s18
    %s21 = sphi 0, %s20
    %s35 = sphi 0, %s21
    %s41 = sphi 0, %s43
    %s44 = sphi 0, %s41
    %s45 = sphi 0, %s44
    %s61 = sphi 0, %s45
    %s67 = sphi 0, %s69
    %s70 = sphi 0, %s67
    %s71 = sphi 0, %s70
    %s87 = sphi 0, %s71
    %s93 = sphi 0, %s95
    %s96 = sphi 0, %s93
    %s97 = sphi 0, %s96
    %s113 = sphi 0, %s97
    %s119 = sphi 0, %s121
    %s122 = sphi 0, %s119
    %s123 = sphi 0, %s122
    %s139 = sphi 0, %s123
  $region4: #{_lambda_.12} parent=0 // loop_header_branch
    %13 = sbr.rel (%p11) target = $region8
  $region5: #{_lambda_.12} parent=0 // loop_body
    %s15 = ssub.s32 %s10, 1
    %s16 = ssub.s32 %s10, 2
    %s17 = sadd.s32 %s10, 1
    %s19 = sadd.s32 %s18, 1
    %p22 = scmp.eq.s32.totalorder %s10, 1
    %p23 = scmp.ne.s32.totalorder %s18, %s20
    %p24 = scmp.eq.s32.totalorder %s10, 0
    %p25 = por %p23, %p24
    %p26 = scmp.ne.s32.totalorder %s18, %s20
    %p27 = scmp.eq.s32.totalorder %s15, 1
    %p28 = por %p26, %p27
    %p29 = scmp.ne.s32.totalorder %s20, %s21
    %p30 = scmp.eq.s32.totalorder %s15, 0
    %p31 = por %p29, %p30
    %p32 = scmp.ne.s32.totalorder %s20, %s21
    %p33 = scmp.eq.s32.totalorder %s16, 1
    %p34 = por %p32, %p33
    %p36 = scmp.ne.s32.totalorder %s21, %s35
    %p37 = scmp.eq.s32.totalorder %s16, 0
    %p38 = por %p36, %p37
    %s39 = ssub.s32 %s10, %s17
    %p40 = scmp.eq.s32.totalorder %s39, 0
    %s42 = sadd.s32 %s41, 1
    %s43 = scalar_select %p40, %s41, %s42
    %p46 = pneg %p40
    %p47 = scmp.eq.s32.totalorder %s10, 1
    %p48 = por %p46, %p47
    %p49 = scmp.ne.s32.totalorder %s41, %s44
    %p50 = scmp.eq.s32.totalorder %s10, 0
    %p51 = por %p49, %p50
    %p52 = scmp.ne.s32.totalorder %s41, %s44
    %p53 = scmp.eq.s32.totalorder %s15, 1
    %p54 = por %p52, %p53
    %p55 = scmp.ne.s32.totalorder %s44, %s45
    %p56 = scmp.eq.s32.totalorder %s15, 0
    %p57 = por %p55, %p56
    %p58 = scmp.ne.s32.totalorder %s44, %s45
    %p59 = scmp.eq.s32.totalorder %s16, 1
    %p60 = por %p58, %p59
    %p62 = scmp.ne.s32.totalorder %s45, %s61
    %p63 = scmp.eq.s32.totalorder %s16, 0
    %p64 = por %p62, %p63
    %s65 = ssub.s32 %s10, %s17
    %p66 = scmp.eq.s32.totalorder %s65, 0
    %s68 = sadd.s32 %s67, 1
    %s69 = scalar_select %p66, %s67, %s68
    %p72 = pneg %p66
    %p73 = scmp.eq.s32.totalorder %s10, 1
    %p74 = por %p72, %p73
    %p75 = scmp.ne.s32.totalorder %s67, %s70
    %p76 = scmp.eq.s32.totalorder %s10, 0
    %p77 = por %p75, %p76
    %p78 = scmp.ne.s32.totalorder %s67, %s70
    %p79 = scmp.eq.s32.totalorder %s15, 1
    %p80 = por %p78, %p79
    %p81 = scmp.ne.s32.totalorder %s70, %s71
    %p82 = scmp.eq.s32.totalorder %s15, 0
    %p83 = por %p81, %p82
    %p84 = scmp.ne.s32.totalorder %s70, %s71
    %p85 = scmp.eq.s32.totalorder %s16, 1
    %p86 = por %p84, %p85
    %p88 = scmp.ne.s32.totalorder %s71, %s87
    %p89 = scmp.eq.s32.totalorder %s16, 0
    %p90 = por %p88, %p89
    %s91 = ssub.s32 %s10, %s17
    %p92 = scmp.eq.s32.totalorder %s91, 0
    %s94 = sadd.s32 %s93, 1
    %s95 = scalar_select %p92, %s93, %s94
    %p98 = pneg %p92
    %p99 = scmp.eq.s32.totalorder %s10, 1
    %p100 = por %p98, %p99
    %p101 = scmp.ne.s32.totalorder %s93, %s96
    %p102 = scmp.eq.s32.totalorder %s10, 0
    %p103 = por %p101, %p102
    %p104 = scmp.ne.s32.totalorder %s93, %s96
    %p105 = scmp.eq.s32.totalorder %s15, 1
    %p106 = por %p104, %p105
    %p107 = scmp.ne.s32.totalorder %s96, %s97
    %p108 = scmp.eq.s32.totalorder %s15, 0
    %p109 = por %p107, %p108
    %p110 = scmp.ne.s32.totalorder %s96, %s97
    %p111 = scmp.eq.s32.totalorder %s16, 1
    %p112 = por %p110, %p111
    %p114 = scmp.ne.s32.totalorder %s97, %s113
    %p115 = scmp.eq.s32.totalorder %s16, 0
    %p116 = por %p114, %p115
    %s117 = ssub.s32 %s10, %s17
    %p118 = scmp.eq.s32.totalorder %s117, 0
    %s120 = sadd.s32 %s119, 1
    %s121 = scalar_select %p118, %s119, %s120
    %p124 = pneg %p118
    %p125 = scmp.eq.s32.totalorder %s10, 1
    %p126 = por %p124, %p125
    %p127 = scmp.ne.s32.totalorder %s119, %s122
    %p128 = scmp.eq.s32.totalorder %s10, 0
    %p129 = por %p127, %p128
    %p130 = scmp.ne.s32.totalorder %s119, %s122
    %p131 = scmp.eq.s32.totalorder %s15, 1
    %p132 = por %p130, %p131
    %p133 = scmp.ne.s32.totalorder %s122, %s123
    %p134 = scmp.eq.s32.totalorder %s15, 0
    %p135 = por %p133, %p134
    %p136 = scmp.ne.s32.totalorder %s122, %s123
    %p137 = scmp.eq.s32.totalorder %s16, 1
    %p138 = por %p136, %p137
    %p140 = scmp.ne.s32.totalorder %s123, %s139
    %p141 = scmp.eq.s32.totalorder %s16, 0
    %p142 = por %p140, %p141
    %p143 = scmp.le.s32.totalorder 1, %s10
    %p144 = scmp.lt.s32.totalorder %s10, 3
    %p145 = pnand %p143, %p144
    %p146 = pneg %p145
    // Predicated region
    $region9: #{_lambda_.12} parent=5 // pred_check
      _
    $region10: #{_lambda_.12} parent=5 // pred_check_branch
      %148 = sbr.rel (%p145) target = $region12
    $region11: #{_lambda_.12} parent=5 // pred_region
      %s149 = ssub.s32 %s10, 1
      // Predicated region
      $region13: #{_lambda_.12} parent=11 // pred_check
        %p150 = pneg %p31
      $region14: #{_lambda_.12} parent=11 // pred_check_branch
        %152 = sbr.rel (%p150) target = $region16
      $region15: #{_lambda_.12} parent=11 // pred_region
        _
      $region16: #{_lambda_.12} parent=11 // pred_fallthru
        _
    $region12: #{_lambda_.12} parent=5 // pred_fallthru
      _
    %p153 = scmp.lt.s32.totalorder %s10, 2
    // Predicated region
    $region17: #{_lambda_.12} parent=5 // pred_check
      %p154 = pneg %p153
    $region18: #{_lambda_.12} parent=5 // pred_check_branch
      %156 = sbr.rel (%p154) target = $region20
    $region19: #{_lambda_.12} parent=5 // pred_region
      // Predicated region
      $region21: #{_lambda_.12} parent=19 // pred_check
        %p157 = pneg %p51
      $region22: #{_lambda_.12} parent=19 // pred_check_branch
        %159 = sbr.rel (%p157) target = $region24
      $region23: #{_lambda_.12} parent=19 // pred_region
        %p160 = scmp.lt.s32.totalorder %s10, 1
        %s161 = scalar_select %p160, %s10, 1
        %s162 = smul.addr %s161, 4
        %s163 = smul.addr %s162, 8
        %s164 = scalar_lea.vmem %s1, %s163
      $region24: #{_lambda_.12} parent=19 // pred_fallthru
        _
      // Predicated region
      $region25: #{_lambda_.12} parent=19 // pred_check
        %p165 = pneg %p77
      $region26: #{_lambda_.12} parent=19 // pred_check_branch
        %167 = sbr.rel (%p165) target = $region28
      $region27: #{_lambda_.12} parent=19 // pred_region
        %p168 = scmp.lt.s32.totalorder %s10, 1
        %s169 = scalar_select %p168, %s10, 1
        %s170 = scalar_lea.vmem %s2, %s169
      $region28: #{_lambda_.12} parent=19 // pred_fallthru
        _
      // Predicated region
      $region29: #{_lambda_.12} parent=19 // pred_check
        %p171 = pneg %p103
      $region30: #{_lambda_.12} parent=19 // pred_check_branch
        %173 = sbr.rel (%p171) target = $region32
      $region31: #{_lambda_.12} parent=19 // pred_region
        %p174 = scmp.lt.s32.totalorder %s10, 1
        %s175 = scalar_select %p174, %s10, 1
        %s176 = smul.addr %s175, 2
        %s177 = smul.addr %s176, 8
        %s178 = scalar_lea.vmem %s3, %s177
      $region32: #{_lambda_.12} parent=19 // pred_fallthru
        _
    $region20: #{_lambda_.12} parent=5 // pred_fallthru
      _
    %p179 = scmp.le.s32.totalorder 1, %s10
    %p180 = scmp.lt.s32.totalorder %s10, 3
    %p181 = pnand %p179, %p180
    %p182 = pneg %p181
    // Predicated region
    $region33: #{_lambda_.12} parent=5 // pred_check
      _
    $region34: #{_lambda_.12} parent=5 // pred_check_branch
      %184 = sbr.rel (%p181) target = $region36
    $region35: #{_lambda_.12} parent=5 // pred_region
      %s185 = ssub.s32 %s10, 1
      %p186 = pneg %p31
      %p187 = pneg %p28
      %p188 = scmp.lt.s32.totalorder %s15, 1
      %s189 = scalar_select %p188, %s15, 1
      %s190 = smul.addr %s189, 4
      %s191 = smul.addr %s190, 8
      %s192 = scalar_lea.vmem %s1, %s191
      %p193 = pneg %p57
      %p194 = pneg %p54
      %p195 = scmp.lt.s32.totalorder %s15, 1
      %s196 = scalar_select %p195, %s15, 1
      %s197 = scalar_lea.vmem %s2, %s196
      %p198 = pneg %p83
      %p199 = pneg %p80
      %p200 = scmp.lt.s32.totalorder %s15, 1
      %s201 = scalar_select %p200, %s15, 1
      %s202 = smul.addr %s201, 2
      %s203 = smul.addr %s202, 8
      %s204 = scalar_lea.vmem %s3, %s203
      %p205 = pneg %p109
      %p206 = pneg %p106
      %p207 = pneg %p135
      %p208 = pneg %p132
      %p209 = scmp.lt.s32.totalorder %s15, 1
      %s210 = scalar_select %p209, %s15, 1
      %s211 = smul.addr %s210, 4
      %s212 = smul.addr %s211, 2
      %s213 = scalar_lea.vmem %s4, %s212
      %p214 = scmp.lt.s32.totalorder %s15, 1
      %s215 = scalar_select %p214, %s15, 1
      %s216 = smul.addr %s215, 4
      %s217 = smul.addr %s216, 8
      %s218 = scalar_lea.vmem %s1, %s217
      %p219 = scmp.lt.s32.totalorder %s15, 1
      %s220 = scalar_select %p219, %s15, 1
      %s221 = scalar_lea.vmem %s2, %s220
      %p222 = scmp.lt.s32.totalorder %s15, 1
      %s223 = scalar_select %p222, %s15, 1
      %s224 = smul.addr %s223, 2
      %s225 = smul.addr %s224, 8
      %s226 = scalar_lea.vmem %s3, %s225
      %p227 = scmp.lt.s32.totalorder %s15, 1
      %s228 = scalar_select %p227, %s15, 1
      %s229 = smul.addr %s228, 4
      %s230 = smul.addr %s229, 2
      %s231 = scalar_lea.vmem %s4, %s230
      %v233 = vld [vmem:[%s0] sm:$0xff]
      %v234 = vpack.c.bf16 %v233, %v233
      %v235 = vld [vmem:[%s218] sm:$0xff]
      %v236 = vld [vmem:[%s218 + $0x8] sm:$0xff]
      %v237 = vld [vmem:[%s218 + $0x10] sm:$0xff]
      %v238 = vld [vmem:[%s218 + $0x18] sm:$0xff]
      %v239 = vpack.c.bf16 %v236, %v235
      %v240 = vpack.c.bf16 %v238, %v237
      %v241 = vld [vmem:[%s221] sm:$0x1]
      %v243 = vlaneseq
      %v244 = vshrl.u32 %v243, 7
      %v245 = vsub.s32 0, %v244
      %v246 = vrot.slane %v241, %v245
      %vm248 = vcmask 261120
      %v250 = vsel %vm248, %v234, 0
      %252 = vmatprep.subr.bf16.mxu0 0
      %253 = vmatpush1.bf16.msra.mxu0 %v239
      %254 = vmatprep.subr.bf16.mxu0 0
      %255 = vmatpush1.bf16.msra.mxu0 %v240
      %256 = vmatprep.subr.bf16.mxu0 0
      %257 = vmatpush1.bf16.msra.mxu0 0
      %258 = vmatprep.subr.bf16.mxu0 0
      %259 = vmatpush1.bf16.msra.mxu0 0
      %260 = vmatprep.subr.bf16.mxu0 0
      %261 = vmatpush1.bf16.msra.mxu0 0
      %262 = vmatprep.subr.bf16.mxu0 0
      %263 = vmatpush1.bf16.msra.mxu0 0
      %264 = vmatprep.subr.bf16.mxu0 0
      %265 = vmatpush1.bf16.msra.mxu0 0
      %266 = vmatprep.subr.bf16.mxu0 0
      %267 = vmatpush1.bf16.msra.mxu0 0
      %268 = vmatprep.subr.bf16.mxu0 0
      %269 = vmatpush1.bf16.msra.mxu0 0
      %270 = vmatprep.subr.bf16.mxu0 0
      %271 = vmatpush1.bf16.msra.mxu0 0
      %272 = vmatprep.subr.bf16.mxu0 0
      %273 = vmatpush1.bf16.msra.mxu0 0
      %274 = vmatprep.subr.bf16.mxu0 0
      %275 = vmatpush1.bf16.msra.mxu0 0
      %276 = vmatprep.subr.bf16.mxu0 0
      %277 = vmatpush1.bf16.msra.mxu0 0
      %278 = vmatprep.subr.bf16.mxu0 0
      %279 = vmatpush1.bf16.msra.mxu0 0
      %280 = vmatprep.subr.bf16.mxu0 0
      %281 = vmatpush1.bf16.msra.mxu0 0
      %282 = vmatprep.subr.bf16.mxu0 0
      %283 = vmatpush1.bf16.msra.mxu0 0
      %284 = vmatprep.mubr.bf16.mxu0 0
      %285 = vmatmul.mubr.bf16.gmra.mrb[0].mxu0 %v250
      %v286 = vpop.f32.mrb[0].mxu0
      %v287 = vadd.f32 %v246, %v286
      %v288 = vpop.f32.mrb[0].mxu0
      %v289 = vpop.f32.mrb[0].mxu0
      %v290 = vpop.f32.mrb[0].mxu0
      %291 = vdwg.mxu0
      %v293 = vcombine.high %v287, %v287
      %v295 = vunpack.c.l.s4 1983009808
      %v296 = vunpack.c.0.s8 %v295
      %v297 = vlaneseq
      %v298 = vshrl.u32 %v297, 7
      %v299 = vsub.s32 %v296, %v298
      %v300 = vrot.slane %v287, %v299
      %v302 = vunpack.c.l.s4 1983009808
      %v303 = vunpack.c.0.s8 %v302
      %v304 = vlaneseq
      %v305 = vshrl.u32 %v304, 7
      %v306 = vsub.s32 %v303, %v305
      %v307 = vrot.slane %v293, %v306
      %v308 = vcombine.high %v300, %v300
      %v309 = vcombine.high %v307, %v307
      %vm314 = vcmask 517120
      %315 = vst.msk [vmem:[#allocation4] sm:$0x3] %vm314, %v300
      %316 = vst.msk [vmem:[#allocation4 + $0x2] sm:$0x3] %vm314, %v308
      %317 = vst.msk [vmem:[#allocation4 + $0x4] sm:$0x3] %vm314, %v307
      %318 = vst.msk [vmem:[#allocation4 + $0x6] sm:$0x3] %vm314, %v309
      %vm319 = vcmask 123904
      %320 = vst.msk [vmem:[#allocation2] sm:$0x3] %vm319, 0.0
      %321 = vst.msk [vmem:[#allocation3] sm:$0x3] %vm319, 0.0
      %v322 = vld [vmem:[%s226] sm:$0xff]
      %v323 = vld [vmem:[%s226 + $0x8] sm:$0xff]
      %v324 = vpack.c.bf16 %v323, %v322
      %p325 = scmp.eq.s32.totalorder %s15, 0
      %s326 = scalar_select %p325, 0, 3
      %s327 = smul.u32 %s326, 2
      %s328 = scalar_lea.vmem [#allocation4], %s327
      %v329 = vld [vmem:[%s328] sm:$0x3]
      %v330 = vld [vmem:[#allocation2] sm:$0x3]
      %v331 = vpack.c.bf16 %v330, %v330
      %vm332 = vcmask 130048
      %v334 = vsel %vm332, %v331, 0
      %336 = vmatprep.subr.bf16.mxu0 0
      %337 = vmatpush1.bf16.msra.mxu0 %v324
      %338 = vmatprep.subr.bf16.mxu0 0
      %339 = vmatpush1.bf16.msra.mxu0 0
      %340 = vmatprep.subr.bf16.mxu0 0
      %341 = vmatpush1.bf16.msra.mxu0 0
      %342 = vmatprep.subr.bf16.mxu0 0
      %343 = vmatpush1.bf16.msra.mxu0 0
      %344 = vmatprep.subr.bf16.mxu0 0
      %345 = vmatpush1.bf16.msra.mxu0 0
      %346 = vmatprep.subr.bf16.mxu0 0
      %347 = vmatpush1.bf16.msra.mxu0 0
      %348 = vmatprep.subr.bf16.mxu0 0
      %349 = vmatpush1.bf16.msra.mxu0 0
      %350 = vmatprep.subr.bf16.mxu0 0
      %351 = vmatpush1.bf16.msra.mxu0 0
      %352 = vmatprep.subr.bf16.mxu0 0
      %353 = vmatpush1.bf16.msra.mxu0 0
      %354 = vmatprep.subr.bf16.mxu0 0
      %355 = vmatpush1.bf16.msra.mxu0 0
      %356 = vmatprep.subr.bf16.mxu0 0
      %357 = vmatpush1.bf16.msra.mxu0 0
      %358 = vmatprep.subr.bf16.mxu0 0
      %359 = vmatpush1.bf16.msra.mxu0 0
      %360 = vmatprep.subr.bf16.mxu0 0
      %361 = vmatpush1.bf16.msra.mxu0 0
      %362 = vmatprep.subr.bf16.mxu0 0
      %363 = vmatpush1.bf16.msra.mxu0 0
      %364 = vmatprep.subr.bf16.mxu0 0
      %365 = vmatpush1.bf16.msra.mxu0 0
      %366 = vmatprep.subr.bf16.mxu0 0
      %367 = vmatpush1.bf16.msra.mxu0 0
      %368 = vmatprep.mubr.bf16.mxu0 0
      %369 = vmatmul.mubr.bf16.gmra.mrb[0].mxu0 %v334
      %v370 = vpop.f32.mrb[0].mxu0
      %v371 = vadd.f32 0.0, %v370
      %v372 = vpop.f32.mrb[0].mxu0
      %v373 = vpop.f32.mrb[0].mxu0
      %v374 = vpop.f32.mrb[0].mxu0
      %375 = vdwg.mxu0
      %v376 = vadd.f32 %v329, %v371
      %v377 = vxor.u32 %v376, 2147483648
      %v378 = vmul.f32 %v377, 1.442695
      %v379 = vpow.pop %v378
      %v380 = vadd.f32 %v379, 1.0
      %v381 = vrcp.pop %v380
      %v382 = vmul.f32 1.0, %v381
      %v383 = vtanh.pop %v376
      %v384 = vld [vmem:[#allocation3] sm:$0x3]
      %386 = vrot.lane.b32.xlu0 %v384, 16
      %v387 = vpop.permute.xlu0 %386
      %v389 = vmul.f32 %v382, %v387
      %391 = vrot.lane.b32.xlu0 %v383, 96
      %v392 = vpop.permute.xlu0 %391
      %v394 = vmul.f32 %v382, %v392
      %396 = vrot.lane.b32.xlu0 %v394, 16
      %v397 = vpop.permute.xlu0 %396
      %v399 = vadd.f32 %v389, %v397
      %v400 = vtanh.pop %v399
      %402 = vrot.lane.b32.xlu0 %v400, 32
      %v403 = vpop.permute.xlu0 %402
      %v405 = vmul.f32 %v382, %v403
      %407 = vrot.lane.b32.xlu0 %v399, 112
      %v408 = vpop.permute.xlu0 %407
      %410 = vst.msk [vmem:[#allocation3] sm:$0x3] %vm319, %v408
      %412 = vrot.lane.b32.xlu0 %v405, 80
      %v413 = vpop.permute.xlu0 %412
      %415 = vst.msk [vmem:[#allocation2] sm:$0x3] %vm319, %v413
      %s416 = scalar_lea.vmem %s231, %s327
      %417 = vst.msk [vmem:[%s416] sm:$0x3] %vm319, %v413
      %s418 = scalar_select %p325, 1, 2
      %s419 = smul.u32 %s418, 2
      %s420 = scalar_lea.vmem [#allocation4], %s419
      %v421 = vld [vmem:[%s420] sm:$0x3]
      %v422 = vld [vmem:[#allocation2] sm:$0x3]
      %v423 = vpack.c.bf16 %v422, %v422
      %v425 = vsel %vm332, %v423, 0
      %427 = vmatprep.subr.bf16.mxu0 0
      %428 = vmatpush1.bf16.msra.mxu0 %v324
      %429 = vmatprep.subr.bf16.mxu0 0
      %430 = vmatpush1.bf16.msra.mxu0 0
      %431 = vmatprep.subr.bf16.mxu0 0
      %432 = vmatpush1.bf16.msra.mxu0 0
      %433 = vmatprep.subr.bf16.mxu0 0
      %434 = vmatpush1.bf16.msra.mxu0 0
      %435 = vmatprep.subr.bf16.mxu0 0
      %436 = vmatpush1.bf16.msra.mxu0 0
      %437 = vmatprep.subr.bf16.mxu0 0
      %438 = vmatpush1.bf16.msra.mxu0 0
      %439 = vmatprep.subr.bf16.mxu0 0
      %440 = vmatpush1.bf16.msra.mxu0 0
      %441 = vmatprep.subr.bf16.mxu0 0
      %442 = vmatpush1.bf16.msra.mxu0 0
      %443 = vmatprep.subr.bf16.mxu0 0
      %444 = vmatpush1.bf16.msra.mxu0 0
      %445 = vmatprep.subr.bf16.mxu0 0
      %446 = vmatpush1.bf16.msra.mxu0 0
      %447 = vmatprep.subr.bf16.mxu0 0
      %448 = vmatpush1.bf16.msra.mxu0 0
      %449 = vmatprep.subr.bf16.mxu0 0
      %450 = vmatpush1.bf16.msra.mxu0 0
      %451 = vmatprep.subr.bf16.mxu0 0
      %452 = vmatpush1.bf16.msra.mxu0 0
      %453 = vmatprep.subr.bf16.mxu0 0
      %454 = vmatpush1.bf16.msra.mxu0 0
      %455 = vmatprep.subr.bf16.mxu0 0
      %456 = vmatpush1.bf16.msra.mxu0 0
      %457 = vmatprep.subr.bf16.mxu0 0
      %458 = vmatpush1.bf16.msra.mxu0 0
      %459 = vmatprep.mubr.bf16.mxu0 0
      %460 = vmatmul.mubr.bf16.gmra.mrb[0].mxu0 %v425
      %v461 = vpop.f32.mrb[0].mxu0
      %v462 = vadd.f32 0.0, %v461
      %v463 = vpop.f32.mrb[0].mxu0
      %v464 = vpop.f32.mrb[0].mxu0
      %v465 = vpop.f32.mrb[0].mxu0
      %466 = vdwg.mxu0
      %v467 = vadd.f32 %v421, %v462
      %v468 = vxor.u32 %v467, 2147483648
      %v469 = vmul.f32 %v468, 1.442695
      %v470 = vpow.pop %v469
      %v471 = vadd.f32 %v470, 1.0
      %v472 = vrcp.pop %v471
      %v473 = vmul.f32 1.0, %v472
      %v474 = vtanh.pop %v467
      %v475 = vld [vmem:[#allocation3] sm:$0x3]
      %477 = vrot.lane.b32.xlu0 %v475, 16
      %v478 = vpop.permute.xlu0 %477
      %v480 = vmul.f32 %v473, %v478
      %482 = vrot.lane.b32.xlu0 %v474, 96
      %v483 = vpop.permute.xlu0 %482
      %v485 = vmul.f32 %v473, %v483
      %487 = vrot.lane.b32.xlu0 %v485, 16
      %v488 = vpop.permute.xlu0 %487
      %v490 = vadd.f32 %v480, %v488
      %v491 = vtanh.pop %v490
      %493 = vrot.lane.b32.xlu0 %v491, 32
      %v494 = vpop.permute.xlu0 %493
      %v496 = vmul.f32 %v473, %v494
      %498 = vrot.lane.b32.xlu0 %v490, 112
      %v499 = vpop.permute.xlu0 %498
      %501 = vst.msk [vmem:[#allocation3] sm:$0x3] %vm319, %v499
      %503 = vrot.lane.b32.xlu0 %v496, 80
      %v504 = vpop.permute.xlu0 %503
      %506 = vst.msk [vmem:[#allocation2] sm:$0x3] %vm319, %v504
      %s507 = scalar_lea.vmem %s231, %s419
      %508 = vst.msk [vmem:[%s507] sm:$0x3] %vm319, %v504
      %s509 = scalar_select %p325, 2, 1
      %s510 = smul.u32 %s509, 2
      %s511 = scalar_lea.vmem [#allocation4], %s510
      %v512 = vld [vmem:[%s511] sm:$0x3]
      %v513 = vld [vmem:[#allocation2] sm:$0x3]
      %v514 = vpack.c.bf16 %v513, %v513
      %v516 = vsel %vm332, %v514, 0
      %518 = vmatprep.subr.bf16.mxu0 0
      %519 = vmatpush1.bf16.msra.mxu0 %v324
      %520 = vmatprep.subr.bf16.mxu0 0
      %521 = vmatpush1.bf16.msra.mxu0 0
      %522 = vmatprep.subr.bf16.mxu0 0
      %523 = vmatpush1.bf16.msra.mxu0 0
      %524 = vmatprep.subr.bf16.mxu0 0
      %525 = vmatpush1.bf16.msra.mxu0 0
      %526 = vmatprep.subr.bf16.mxu0 0
      %527 = vmatpush1.bf16.msra.mxu0 0
      %528 = vmatprep.subr.bf16.mxu0 0
      %529 = vmatpush1.bf16.msra.mxu0 0
      %530 = vmatprep.subr.bf16.mxu0 0
      %531 = vmatpush1.bf16.msra.mxu0 0
      %532 = vmatprep.subr.bf16.mxu0 0
      %533 = vmatpush1.bf16.msra.mxu0 0
      %534 = vmatprep.subr.bf16.mxu0 0
      %535 = vmatpush1.bf16.msra.mxu0 0
      %536 = vmatprep.subr.bf16.mxu0 0
      %537 = vmatpush1.bf16.msra.mxu0 0
      %538 = vmatprep.subr.bf16.mxu0 0
      %539 = vmatpush1.bf16.msra.mxu0 0
      %540 = vmatprep.subr.bf16.mxu0 0
      %541 = vmatpush1.bf16.msra.mxu0 0
      %542 = vmatprep.subr.bf16.mxu0 0
      %543 = vmatpush1.bf16.msra.mxu0 0
      %544 = vmatprep.subr.bf16.mxu0 0
      %545 = vmatpush1.bf16.msra.mxu0 0
      %546 = vmatprep.subr.bf16.mxu0 0
      %547 = vmatpush1.bf16.msra.mxu0 0
      %548 = vmatprep.subr.bf16.mxu0 0
      %549 = vmatpush1.bf16.msra.mxu0 0
      %550 = vmatprep.mubr.bf16.mxu0 0
      %551 = vmatmul.mubr.bf16.gmra.mrb[0].mxu0 %v516
      %v552 = vpop.f32.mrb[0].mxu0
      %v553 = vadd.f32 0.0, %v552
      %v554 = vpop.f32.mrb[0].mxu0
      %v555 = vpop.f32.mrb[0].mxu0
      %v556 = vpop.f32.mrb[0].mxu0
      %557 = vdwg.mxu0
      %v558 = vadd.f32 %v512, %v553
      %v559 = vxor.u32 %v558, 2147483648
      %v560 = vmul.f32 %v559, 1.442695
      %v561 = vpow.pop %v560
      %v562 = vadd.f32 %v561, 1.0
      %v563 = vrcp.pop %v562
      %v564 = vmul.f32 1.0, %v563
      %v565 = vtanh.pop %v558
      %v566 = vld [vmem:[#allocation3] sm:$0x3]
      %568 = vrot.lane.b32.xlu0 %v566, 16
      %v569 = vpop.permute.xlu0 %568
      %v571 = vmul.f32 %v564, %v569
      %573 = vrot.lane.b32.xlu0 %v565, 96
      %v574 = vpop.permute.xlu0 %573
      %v576 = vmul.f32 %v564, %v574
      %578 = vrot.lane.b32.xlu0 %v576, 16
      %v579 = vpop.permute.xlu0 %578
      %v581 = vadd.f32 %v571, %v579
      %v582 = vtanh.pop %v581
      %584 = vrot.lane.b32.xlu0 %v582, 32
      %v585 = vpop.permute.xlu0 %584
      %v587 = vmul.f32 %v564, %v585
      %589 = vrot.lane.b32.xlu0 %v581, 112
      %v590 = vpop.permute.xlu0 %589
      %592 = vst.msk [vmem:[#allocation3] sm:$0x3] %vm319, %v590
      %594 = vrot.lane.b32.xlu0 %v587, 80
      %v595 = vpop.permute.xlu0 %594
      %597 = vst.msk [vmem:[#allocation2] sm:$0x3] %vm319, %v595
      %s598 = scalar_lea.vmem %s231, %s510
      %599 = vst.msk [vmem:[%s598] sm:$0x3] %vm319, %v595
      %s600 = scalar_select %p325, 3, 0
      %s601 = smul.u32 %s600, 2
      %s602 = scalar_lea.vmem [#allocation4], %s601
      %v603 = vld [vmem:[%s602] sm:$0x3]
      %v604 = vld [vmem:[#allocation2] sm:$0x3]
      %v605 = vpack.c.bf16 %v604, %v604
      %v607 = vsel %vm332, %v605, 0
      %609 = vmatprep.subr.bf16.mxu0 0
      %610 = vmatpush1.bf16.msra.mxu0 %v324
      %611 = vmatprep.subr.bf16.mxu0 0
      %612 = vmatpush1.bf16.msra.mxu0 0
      %613 = vmatprep.subr.bf16.mxu0 0
      %614 = vmatpush1.bf16.msra.mxu0 0
      %615 = vmatprep.subr.bf16.mxu0 0
      %616 = vmatpush1.bf16.msra.mxu0 0
      %617 = vmatprep.subr.bf16.mxu0 0
      %618 = vmatpush1.bf16.msra.mxu0 0
      %619 = vmatprep.subr.bf16.mxu0 0
      %620 = vmatpush1.bf16.msra.mxu0 0
      %621 = vmatprep.subr.bf16.mxu0 0
      %622 = vmatpush1.bf16.msra.mxu0 0
      %623 = vmatprep.subr.bf16.mxu0 0
      %624 = vmatpush1.bf16.msra.mxu0 0
      %625 = vmatprep.subr.bf16.mxu0 0
      %626 = vmatpush1.bf16.msra.mxu0 0
      %627 = vmatprep.subr.bf16.mxu0 0
      %628 = vmatpush1.bf16.msra.mxu0 0
      %629 = vmatprep.subr.bf16.mxu0 0
      %630 = vmatpush1.bf16.msra.mxu0 0
      %631 = vmatprep.subr.bf16.mxu0 0
      %632 = vmatpush1.bf16.msra.mxu0 0
      %633 = vmatprep.subr.bf16.mxu0 0
      %634 = vmatpush1.bf16.msra.mxu0 0
      %635 = vmatprep.subr.bf16.mxu0 0
      %636 = vmatpush1.bf16.msra.mxu0 0
      %637 = vmatprep.subr.bf16.mxu0 0
      %638 = vmatpush1.bf16.msra.mxu0 0
      %639 = vmatprep.subr.bf16.mxu0 0
      %640 = vmatpush1.bf16.msra.mxu0 0
      %641 = vmatprep.mubr.bf16.mxu0 0
      %642 = vmatmul.mubr.bf16.gmra.mrb[0].mxu0 %v607
      %v643 = vpop.f32.mrb[0].mxu0
      %v644 = vadd.f32 0.0, %v643
      %v645 = vpop.f32.mrb[0].mxu0
      %v646 = vpop.f32.mrb[0].mxu0
      %v647 = vpop.f32.mrb[0].mxu0
      %648 = vdwg.mxu0
      %v649 = vadd.f32 %v603, %v644
      %v650 = vxor.u32 %v649, 2147483648
      %v651 = vmul.f32 %v650, 1.442695
      %v652 = vpow.pop %v651
      %v653 = vadd.f32 %v652, 1.0
      %v654 = vrcp.pop %v653
      %v655 = vmul.f32 1.0, %v654
      %v656 = vtanh.pop %v649
      %v657 = vld [vmem:[#allocation3] sm:$0x3]
      %659 = vrot.lane.b32.xlu0 %v657, 16
      %v660 = vpop.permute.xlu0 %659
      %v662 = vmul.f32 %v655, %v660
      %664 = vrot.lane.b32.xlu0 %v656, 96
      %v665 = vpop.permute.xlu0 %664
      %v667 = vmul.f32 %v655, %v665
      %669 = vrot.lane.b32.xlu0 %v667, 16
      %v670 = vpop.permute.xlu0 %669
      %v672 = vadd.f32 %v662, %v670
      %v673 = vtanh.pop %v672
      %675 = vrot.lane.b32.xlu0 %v673, 32
      %v676 = vpop.permute.xlu0 %675
      %v678 = vmul.f32 %v655, %v676
      %680 = vrot.lane.b32.xlu0 %v672, 112
      %v681 = vpop.permute.xlu0 %680
      %683 = vst.msk [vmem:[#allocation3] sm:$0x3] %vm319, %v681
      %685 = vrot.lane.b32.xlu0 %v678, 80
      %v686 = vpop.permute.xlu0 %685
      %688 = vst.msk [vmem:[#allocation2] sm:$0x3] %vm319, %v686
      %s689 = scalar_lea.vmem %s231, %s601
      %690 = vst.msk [vmem:[%s689] sm:$0x3] %vm319, %v686
      %p691 = scmp.lt.s32.totalorder %s15, 1
      %s692 = scalar_select %p691, %s15, 1
      %s693 = smul.addr %s692, 4
      %s694 = smul.addr %s693, 2
      %s695 = scalar_lea.vmem %s4, %s694
      // Predicated region
      $region37: #{_lambda_.12} parent=35 // pred_check
        %p696 = pneg %p132
      $region38: #{_lambda_.12} parent=35 // pred_check_branch
        %698 = sbr.rel (%p696) target = $region40
      $region39: #{_lambda_.12} parent=35 // pred_region
        _
      $region40: #{_lambda_.12} parent=35 // pred_fallthru
        _
    $region36: #{_lambda_.12} parent=5 // pred_fallthru
      _
    %p699 = scmp.le.s32.totalorder 2, %s10
    // Predicated region
    $region41: #{_lambda_.12} parent=5 // pred_check
      %p700 = pneg %p699
    $region42: #{_lambda_.12} parent=5 // pred_check_branch
      %702 = sbr.rel (%p700) target = $region44
    $region43: #{_lambda_.12} parent=5 // pred_region
      %s703 = ssub.s32 %s10, 2
      // Predicated region
      $region45: #{_lambda_.12} parent=43 // pred_check
        %p704 = pneg %p138
      $region46: #{_lambda_.12} parent=43 // pred_check_branch
        %706 = sbr.rel (%p704) target = $region48
      $region47: #{_lambda_.12} parent=43 // pred_region
        %p707 = scmp.lt.s32.totalorder %s16, 1
        %s708 = scalar_select %p707, %s16, 1
        %s709 = smul.addr %s708, 4
        %s710 = smul.addr %s709, 2
        %s711 = scalar_lea.vmem %s4, %s710
      $region48: #{_lambda_.12} parent=43 // pred_fallthru
        _
    $region44: #{_lambda_.12} parent=5 // pred_fallthru
      _
  $region6: #{_lambda_.12} parent=0 // loop_footer
    %s14 = sadd.s32 1, %s10
  $region7: #{_lambda_.12} parent=0 // loop_footer_branch
    %9 = sbr.rel target = $region3
  $region8: #{_lambda_.12} parent=0 // loop_exit
    _

// kernel: _lambda_.13
$region0: #{_lambda_.13}
  #allocation0 [shape = 'u32[]', space=smem, size = 0x4, offset = 0x4, fixed_abs, tag = 'smem constant byte address 0x4 - core index']
  #allocation1 [shape = 'u32[144,128]{1,0:T(1,128)}', space=vmem, size = 0x12000, scoped, tag = 'internal scratch']
  %s0 = inlined_call_operand.vmem [shape: f32[8,32], index: 0, kind: input, shape index: {}]
  %s1 = inlined_call_operand.vmem [shape: bf16[32,128], index: 1, kind: input, shape index: {}]
  %s2 = inlined_call_operand.vmem [shape: f32[1,128], index: 2, kind: input, shape index: {}]
  %s3 = inlined_call_operand.vmem [shape: f32[8,128], index: 3, kind: output, shape index: {}]
  %s4 = sld [smem:[#allocation0]]
  $region22: #{_lambda_.13} parent=0
    _
  %s6 = ssub.s32 1, %s4
  %s7 = scalar_select 0, %s6, %s4
  // Predicated region
  $region2: #{_lambda_.13} parent=0 // pred_check
    _
  $region3: #{_lambda_.13} parent=0 // pred_check_branch
    %9 = sbr.rel (0) target = $region5
  $region4: #{_lambda_.13} parent=0 // pred_region
    _
  $region5: #{_lambda_.13} parent=0 // pred_fallthru
    _
  // Predicated region
  $region6: #{_lambda_.13} parent=0 // pred_check
    _
  $region7: #{_lambda_.13} parent=0 // pred_check_branch
    %11 = sbr.rel (0) target = $region9
  $region8: #{_lambda_.13} parent=0 // pred_region
    _
  $region9: #{_lambda_.13} parent=0 // pred_fallthru
    _
  // Predicated region
  $region10: #{_lambda_.13} parent=0 // pred_check
    _
  $region11: #{_lambda_.13} parent=0 // pred_check_branch
    %13 = sbr.rel (0) target = $region13
  $region12: #{_lambda_.13} parent=0 // pred_region
    _
  $region13: #{_lambda_.13} parent=0 // pred_fallthru
    _
  %v15 = vld [vmem:[%s0] sm:$0xff]
  %v16 = vpack.c.bf16 %v15, %v15
  %v17 = vld [vmem:[%s1] sm:$0xf]
  %v18 = vld [vmem:[%s1 + $0x4] sm:$0xf]
  %v19 = vld [vmem:[%s1 + $0x8] sm:$0xf]
  %v20 = vld [vmem:[%s1 + $0xc] sm:$0xf]
  %v21 = vld [vmem:[%s2] sm:$0x1]
  %v23 = vlaneseq
  %v24 = vshrl.u32 %v23, 7
  %v25 = vsub.s32 0, %v24
  %v26 = vrot.slane %v21, %v25
  %v32 = vunpack.c.l.b16 %v17
  %v33 = vunpack.c.l.b16 %v18
  %v34 = vunpack.c.l.b16 %v19
  %v35 = vunpack.c.l.b16 %v20
  %v36 = vpack.c.b16 %v33, %v32
  %v37 = vpack.c.b16 %v35, %v34
  %vm40 = vcmask 261120
  %v42 = vsel %vm40, %v16, 0
  %44 = vmatprep.subr.bf16.mxu0 0
  %45 = vmatpush1.bf16.msra.mxu0 %v36
  %46 = vmatprep.subr.bf16.mxu0 0
  %47 = vmatpush1.bf16.msra.mxu0 %v37
  %48 = vmatprep.subr.bf16.mxu0 0
  %49 = vmatpush1.bf16.msra.mxu0 0
  %50 = vmatprep.subr.bf16.mxu0 0
  %51 = vmatpush1.bf16.msra.mxu0 0
  %52 = vmatprep.subr.bf16.mxu0 0
  %53 = vmatpush1.bf16.msra.mxu0 0
  %54 = vmatprep.subr.bf16.mxu0 0
  %55 = vmatpush1.bf16.msra.mxu0 0
  %56 = vmatprep.subr.bf16.mxu0 0
  %57 = vmatpush1.bf16.msra.mxu0 0
  %58 = vmatprep.subr.bf16.mxu0 0
  %59 = vmatpush1.bf16.msra.mxu0 0
  %60 = vmatprep.subr.bf16.mxu0 0
  %61 = vmatpush1.bf16.msra.mxu0 0
  %62 = vmatprep.subr.bf16.mxu0 0
  %63 = vmatpush1.bf16.msra.mxu0 0
  %64 = vmatprep.subr.bf16.mxu0 0
  %65 = vmatpush1.bf16.msra.mxu0 0
  %66 = vmatprep.subr.bf16.mxu0 0
  %67 = vmatpush1.bf16.msra.mxu0 0
  %68 = vmatprep.subr.bf16.mxu0 0
  %69 = vmatpush1.bf16.msra.mxu0 0
  %70 = vmatprep.subr.bf16.mxu0 0
  %71 = vmatpush1.bf16.msra.mxu0 0
  %72 = vmatprep.subr.bf16.mxu0 0
  %73 = vmatpush1.bf16.msra.mxu0 0
  %74 = vmatprep.subr.bf16.mxu0 0
  %75 = vmatpush1.bf16.msra.mxu0 0
  %76 = vmatprep.mubr.bf16.mxu0 0
  %77 = vmatmul.mubr.bf16.gmra.mrb[0].mxu0 %v42
  %v78 = vpop.f32.mrb[0].mxu0
  %v79 = vadd.f32 %v26, %v78
  %v80 = vpop.f32.mrb[0].mxu0
  %v81 = vpop.f32.mrb[0].mxu0
  %v82 = vpop.f32.mrb[0].mxu0
  %83 = vdwg.mxu0
  %v84 = vlaneseq
  %v85 = vand.u32 %v84, 127
  %vm86 = vcmp.lt.s32.totalorder %v85, 10
  %v87 = vsel %vm86, %v79, -1e+30
  %88 = vmax.xlane.f32.xlu0 %v87
  %v89 = vpop.xlane.xlu0 %88
  %v90 = vsub.f32 %v87, %v89
  %v91 = vmul.f32 %v90, 1.442695
  %v92 = vpow.pop %v91
  %93 = vadd.xlane.f32.xlu0 %v92
  %v94 = vpop.xlane.xlu0 %93
  %v95 = vlog2.pop %v94
  %v96 = vmul.f32 %v95, 0.6931472
  %v97 = vsub.f32 %v90, %v96
  %98 = vst [vmem:[%s3] sm:$0xff] %v97
  // Predicated region
  $region14: #{_lambda_.13} parent=0 // pred_check
    _
  $region15: #{_lambda_.13} parent=0 // pred_check_branch
    %100 = sbr.rel (0) target = $region17
  $region16: #{_lambda_.13} parent=0 // pred_region
    _
  $region17: #{_lambda_.13} parent=0 // pred_fallthru
    _
  // Predicated region
  $region18: #{_lambda_.13} parent=0 // pred_check
    _
  $region19: #{_lambda_.13} parent=0 // pred_check_branch
    %102 = sbr.rel (0) target = $region21
  $region20: #{_lambda_.13} parent=0 // pred_region
    _
  $region21: #{_lambda_.13} parent=0 // pred_fallthru
    _

</llo_original>
